<compile_context>
chip_gen: v6e
topology: v6e:2x2x1
jax: 0.10.0
libtpu: 0.0.40
codegen_flags: <defaults>
</compile_context>

<pallas_src>
import numpy as np
import jax
import jax.numpy as jnp
from jax.experimental import pallas as pl
from jax.experimental.pallas import tpu as pltpu


# (C_in, C_out, H_in == W_in, quant scale) for the six convs.
_LAYERS = (
    (1, 12, 64, 0.001953125),
    (12, 12, 32, 0.0009765625),
    (12, 16, 16, 0.001953125),
    (16, 18, 8, 0.0009765625),
    (18, 24, 4, 0.0009765625),
    (24, 32, 2, 0.0009765625),
)
_NUM_LAYERS = len(_LAYERS)


def init_params(key):
    """Deterministic synthetic parameters (same shapes as the nn.Module)."""
    conv_shapes = [
        (12, 1, 3, 3),
        (12, 12, 3, 3),
        (16, 12, 3, 3),
        (18, 16, 3, 3),
        (24, 18, 3, 3),
        (32, 24, 3, 3),
    ]
    params = []
    for shp in conv_shapes:
        key, kw_, kb_ = jax.random.split(key, 3)
        w = jax.random.normal(kw_, shp, dtype=jnp.float32) * 0.1
        b = jax.random.normal(kb_, (shp[0],), dtype=jnp.float32) * 0.1
        params.append((w, b))
    # TODO(synk): self.linear (32 -> num_classes) is unused by forward(); not applied.
    return params


def prepare_params(params, batch):
    """One-time prep: fold the quant scale into weights/bias and build the
    row-selection (S) and banded-weight (B) GEMM operands for the fused kernel.
    """
    prepped = []
    for (w, b), (c_in, c_out, h_in, scale) in zip(params, _LAYERS):
        w = np.asarray(w, np.float32)      # (C_out, C_in, 3, 3)
        b = np.asarray(b, np.float32)      # (C_out,)
        w_in = h_in
        oh = h_in // 2
        ow = oh

        # Banded weight matrix: output column block j reads input column
        # 2*j + kw - 1 for kw in {0,1,2}; out-of-range columns (W padding)
        # simply have no band entry.  Quant scale folded in here.
        band = np.zeros((3, w_in * c_in, ow * c_out), np.float32)
        for kh in range(3):
            for j in range(ow):
                for kw in range(3):
                    col = 2 * j + kw - 1
                    if 0 <= col < w_in:
                        band[kh,
                             col * c_in:(col + 1) * c_in,
                             j * c_out:(j + 1) * c_out] = w[:, :, kh, kw].T * scale

        # Row-selection matrix: output row (n, i) of tap kh reads input row
        # (n, 2*i + kh - 1); rows falling in the H zero padding stay all-zero.
        sel = np.zeros((3, batch * oh, batch * h_in), np.float32)
        for kh in range(3):
            for n in range(batch):
                for i in range(oh):
                    h = 2 * i + kh - 1
                    if 0 <= h < h_in:
                        sel[kh, n * oh + i, n * h_in + h] = 1.0

        bias = np.tile(b * scale, ow).reshape(1, ow * c_out)

        prepped.append((
            jnp.asarray(sel, dtype=jnp.bfloat16),   # exact 0/1 values
            jnp.asarray(band, dtype=jnp.bfloat16),  # bf16 MXU operand
            jnp.asarray(bias, dtype=jnp.float32),   # f32 epilogue
        ))
    return prepped


def _fused_resnet_kernel(*refs):
    """refs = [x2d, (S, B, bias) * 6, out]. Everything is a full-array VMEM block."""
    o_ref = refs[1 + 3 * _NUM_LAYERS]
    act = refs[0][...]                                   # (batch*H, W*C_in) bf16
    out = None
    for l in range(_NUM_LAYERS):
        s_ref = refs[1 + 3 * l]
        b_ref = refs[2 + 3 * l]
        bias_ref = refs[3 + 3 * l]
        acc = None
        for kh in range(3):
            rows = jnp.dot(s_ref[kh], act,
                           preferred_element_type=jnp.float32)        # row select (MXU)
            part = jnp.dot(rows.astype(jnp.bfloat16), b_ref[kh],
                           preferred_element_type=jnp.float32)        # banded GEMM (MXU)
            acc = part if acc is None else acc + part
        out = jnp.maximum(acc + bias_ref[...], 0.0)      # f32 bias + ReLU epilogue
        if l + 1 < _NUM_LAYERS:
            act = out.astype(jnp.bfloat16)               # stays resident in VMEM
    o_ref[...] = out.astype(o_ref.dtype)


def _full_spec(shape):
    nd = len(shape)
    return pl.BlockSpec(shape, lambda i: (0,) * nd)


@jax.jit
def resnet_forward(x_nchw, prepped):
    """Forward pass of the ResNet module. x is NCHW; returns (N, 32)."""
    n, c, h, w = x_nchw.shape
    assert c == 1 and h == w == _LAYERS[0][2]
    # NCHW with C == 1  ->  (batch*H, W) matrix (rows = (n, h), lanes = w).
    x2d = x_nchw[:, 0, :, :].reshape(n * h, w).astype(jnp.bfloat16)

    flat_inputs = [x2d]
    for s, band, bias in prepped:
        flat_inputs.extend([s, band, bias])

    out_c = _LAYERS[-1][1]
    return pl.pallas_call(
        _fused_resnet_kernel,
        out_shape=jax.ShapeDtypeStruct((n, out_c), jnp.float32),
        grid=(1,),
        in_specs=[_full_spec(a.shape) for a in flat_inputs],
        out_specs=_full_spec((n, out_c)),
        compiler_params=pltpu.CompilerParams(
            dimension_semantics=("arbitrary",)),
    )(*flat_inputs)


if __name__ == "__main__":
    key = jax.random.PRNGKey(0)
    key, kx = jax.random.split(key)
    # Input: 1 channel, spatial 64 so that six stride-2 convs reach 1x1.
    x = jax.random.normal(kx, (2, 1, 64, 64), dtype=jnp.float32)
    params = init_params(key)
    prepped = prepare_params(params, batch=2)

    out = resnet_forward(x, prepped)
    out = jax.block_until_ready(out)
    assert out.shape == (2, 32), out.shape
    assert bool(jnp.all(jnp.isfinite(out)))
    print("KERNEL_OK")
</pallas_src>

<mosaic_0001>
module attributes {stable_mosaic.version = 11 : i64} {
  func.func @_fused_resnet_kernel(%arg0: i32, %arg1: memref<128x64xbf16, #tpu.memory_space<vmem>>, %arg2: memref<3x64x128xbf16, #tpu.memory_space<vmem>>, %arg3: memref<3x64x384xbf16, #tpu.memory_space<vmem>>, %arg4: memref<1x384xf32, #tpu.memory_space<vmem>>, %arg5: memref<3x32x64xbf16, #tpu.memory_space<vmem>>, %arg6: memref<3x384x192xbf16, #tpu.memory_space<vmem>>, %arg7: memref<1x192xf32, #tpu.memory_space<vmem>>, %arg8: memref<3x16x32xbf16, #tpu.memory_space<vmem>>, %arg9: memref<3x192x128xbf16, #tpu.memory_space<vmem>>, %arg10: memref<1x128xf32, #tpu.memory_space<vmem>>, %arg11: memref<3x8x16xbf16, #tpu.memory_space<vmem>>, %arg12: memref<3x128x72xbf16, #tpu.memory_space<vmem>>, %arg13: memref<1x72xf32, #tpu.memory_space<vmem>>, %arg14: memref<3x4x8xbf16, #tpu.memory_space<vmem>>, %arg15: memref<3x72x48xbf16, #tpu.memory_space<vmem>>, %arg16: memref<1x48xf32, #tpu.memory_space<vmem>>, %arg17: memref<3x2x4xbf16, #tpu.memory_space<vmem>>, %arg18: memref<3x48x32xbf16, #tpu.memory_space<vmem>>, %arg19: memref<1x32xf32, #tpu.memory_space<vmem>>, %arg20: memref<2x32xf32, #tpu.memory_space<vmem>>) attributes {dimension_semantics = [#tpu.dimension_semantics<arbitrary>], iteration_bounds = array<i64: 1>, scalar_prefetch = 0 : i64, scratch_operands = 0 : i64, tpu.core_type = #tpu.core_type<tc>, window_params = [{pipeline_mode = #tpu.pipeline_mode<synchronous>, transform_indices = @transform_0, window_bounds = array<i64: 128, 64>}, {pipeline_mode = #tpu.pipeline_mode<synchronous>, transform_indices = @transform_1, window_bounds = array<i64: 3, 64, 128>}, {pipeline_mode = #tpu.pipeline_mode<synchronous>, transform_indices = @transform_2, window_bounds = array<i64: 3, 64, 384>}, {pipeline_mode = #tpu.pipeline_mode<synchronous>, transform_indices = @transform_3, window_bounds = array<i64: 1, 384>}, {pipeline_mode = #tpu.pipeline_mode<synchronous>, transform_indices = @transform_4, window_bounds = array<i64: 3, 32, 64>}, {pipeline_mode = #tpu.pipeline_mode<synchronous>, transform_indices = @transform_5, window_bounds = array<i64: 3, 384, 192>}, {pipeline_mode = #tpu.pipeline_mode<synchronous>, transform_indices = @transform_6, window_bounds = array<i64: 1, 192>}, {pipeline_mode = #tpu.pipeline_mode<synchronous>, transform_indices = @transform_7, window_bounds = array<i64: 3, 16, 32>}, {pipeline_mode = #tpu.pipeline_mode<synchronous>, transform_indices = @transform_8, window_bounds = array<i64: 3, 192, 128>}, {pipeline_mode = #tpu.pipeline_mode<synchronous>, transform_indices = @transform_9, window_bounds = array<i64: 1, 128>}, {pipeline_mode = #tpu.pipeline_mode<synchronous>, transform_indices = @transform_10, window_bounds = array<i64: 3, 8, 16>}, {pipeline_mode = #tpu.pipeline_mode<synchronous>, transform_indices = @transform_11, window_bounds = array<i64: 3, 128, 72>}, {pipeline_mode = #tpu.pipeline_mode<synchronous>, transform_indices = @transform_12, window_bounds = array<i64: 1, 72>}, {pipeline_mode = #tpu.pipeline_mode<synchronous>, transform_indices = @transform_13, window_bounds = array<i64: 3, 4, 8>}, {pipeline_mode = #tpu.pipeline_mode<synchronous>, transform_indices = @transform_14, window_bounds = array<i64: 3, 72, 48>}, {pipeline_mode = #tpu.pipeline_mode<synchronous>, transform_indices = @transform_15, window_bounds = array<i64: 1, 48>}, {pipeline_mode = #tpu.pipeline_mode<synchronous>, transform_indices = @transform_16, window_bounds = array<i64: 3, 2, 4>}, {pipeline_mode = #tpu.pipeline_mode<synchronous>, transform_indices = @transform_17, window_bounds = array<i64: 3, 48, 32>}, {pipeline_mode = #tpu.pipeline_mode<synchronous>, transform_indices = @transform_18, window_bounds = array<i64: 1, 32>}, {pipeline_mode = #tpu.pipeline_mode<synchronous>, transform_indices = @transform_19, window_bounds = array<i64: 2, 32>}]} {
    %c0 = arith.constant 0 : index
    %c0_0 = arith.constant 0 : index
    %0 = vector.load %arg1[%c0, %c0_0] : memref<128x64xbf16, #tpu.memory_space<vmem>>, vector<128x64xbf16>
    %c0_1 = arith.constant 0 : index
    %c0_2 = arith.constant 0 : index
    %c0_3 = arith.constant 0 : index
    %1 = vector.load %arg2[%c0_1, %c0_2, %c0_3] : memref<3x64x128xbf16, #tpu.memory_space<vmem>>, vector<1x64x128xbf16>
    %2 = vector.shape_cast %1 : vector<1x64x128xbf16> to vector<64x128xbf16>
    %cst = arith.constant dense<0.000000e+00> : vector<64x64xf32>
    %3 = tpu.matmul %2, %0, %cst {dimension_numbers = #tpu.dot_dimension_numbers<[1], [0], [0], [1], [0, 0, 1, 1], [], []>} : vector<64x128xbf16>, vector<128x64xbf16>, vector<64x64xf32> -> vector<64x64xf32>
    %4 = arith.truncf %3 : vector<64x64xf32> to vector<64x64xbf16>
    %c0_4 = arith.constant 0 : index
    %c0_5 = arith.constant 0 : index
    %c0_6 = arith.constant 0 : index
    %5 = vector.load %arg3[%c0_4, %c0_5, %c0_6] : memref<3x64x384xbf16, #tpu.memory_space<vmem>>, vector<1x64x384xbf16>
    %6 = vector.shape_cast %5 : vector<1x64x384xbf16> to vector<64x384xbf16>
    %cst_7 = arith.constant dense<0.000000e+00> : vector<64x384xf32>
    %7 = tpu.matmul %4, %6, %cst_7 {dimension_numbers = #tpu.dot_dimension_numbers<[1], [0], [0], [1], [0, 0, 1, 1], [], []>} : vector<64x64xbf16>, vector<64x384xbf16>, vector<64x384xf32> -> vector<64x384xf32>
    %c1 = arith.constant 1 : index
    %c0_8 = arith.constant 0 : index
    %c0_9 = arith.constant 0 : index
    %8 = vector.load %arg2[%c1, %c0_8, %c0_9] : memref<3x64x128xbf16, #tpu.memory_space<vmem>>, vector<1x64x128xbf16>
    %9 = vector.shape_cast %8 : vector<1x64x128xbf16> to vector<64x128xbf16>
    %cst_10 = arith.constant dense<0.000000e+00> : vector<64x64xf32>
    %10 = tpu.matmul %9, %0, %cst_10 {dimension_numbers = #tpu.dot_dimension_numbers<[1], [0], [0], [1], [0, 0, 1, 1], [], []>} : vector<64x128xbf16>, vector<128x64xbf16>, vector<64x64xf32> -> vector<64x64xf32>
    %11 = arith.truncf %10 : vector<64x64xf32> to vector<64x64xbf16>
    %c1_11 = arith.constant 1 : index
    %c0_12 = arith.constant 0 : index
    %c0_13 = arith.constant 0 : index
    %12 = vector.load %arg3[%c1_11, %c0_12, %c0_13] : memref<3x64x384xbf16, #tpu.memory_space<vmem>>, vector<1x64x384xbf16>
    %13 = vector.shape_cast %12 : vector<1x64x384xbf16> to vector<64x384xbf16>
    %cst_14 = arith.constant dense<0.000000e+00> : vector<64x384xf32>
    %14 = tpu.matmul %11, %13, %cst_14 {dimension_numbers = #tpu.dot_dimension_numbers<[1], [0], [0], [1], [0, 0, 1, 1], [], []>} : vector<64x64xbf16>, vector<64x384xbf16>, vector<64x384xf32> -> vector<64x384xf32>
    %15 = arith.addf %7, %14 : vector<64x384xf32>
    %c2 = arith.constant 2 : index
    %c0_15 = arith.constant 0 : index
    %c0_16 = arith.constant 0 : index
    %16 = vector.load %arg2[%c2, %c0_15, %c0_16] : memref<3x64x128xbf16, #tpu.memory_space<vmem>>, vector<1x64x128xbf16>
    %17 = vector.shape_cast %16 : vector<1x64x128xbf16> to vector<64x128xbf16>
    %cst_17 = arith.constant dense<0.000000e+00> : vector<64x64xf32>
    %18 = tpu.matmul %17, %0, %cst_17 {dimension_numbers = #tpu.dot_dimension_numbers<[1], [0], [0], [1], [0, 0, 1, 1], [], []>} : vector<64x128xbf16>, vector<128x64xbf16>, vector<64x64xf32> -> vector<64x64xf32>
    %19 = arith.truncf %18 : vector<64x64xf32> to vector<64x64xbf16>
    %c2_18 = arith.constant 2 : index
    %c0_19 = arith.constant 0 : index
    %c0_20 = arith.constant 0 : index
    %20 = vector.load %arg3[%c2_18, %c0_19, %c0_20] : memref<3x64x384xbf16, #tpu.memory_space<vmem>>, vector<1x64x384xbf16>
    %21 = vector.shape_cast %20 : vector<1x64x384xbf16> to vector<64x384xbf16>
    %cst_21 = arith.constant dense<0.000000e+00> : vector<64x384xf32>
    %22 = tpu.matmul %19, %21, %cst_21 {dimension_numbers = #tpu.dot_dimension_numbers<[1], [0], [0], [1], [0, 0, 1, 1], [], []>} : vector<64x64xbf16>, vector<64x384xbf16>, vector<64x384xf32> -> vector<64x384xf32>
    %23 = arith.addf %15, %22 : vector<64x384xf32>
    %c0_22 = arith.constant 0 : index
    %c0_23 = arith.constant 0 : index
    %24 = vector.load %arg4[%c0_22, %c0_23] : memref<1x384xf32, #tpu.memory_space<vmem>>, vector<1x384xf32>
    %25 = vector.broadcast %24 : vector<1x384xf32> to vector<64x384xf32>
    %26 = arith.addf %23, %25 : vector<64x384xf32>
    %cst_24 = arith.constant 0.000000e+00 : f32
    %27 = vector.broadcast %cst_24 : f32 to vector<64x384xf32>
    %28 = arith.maximumf %26, %27 : vector<64x384xf32>
    %29 = arith.truncf %28 : vector<64x384xf32> to vector<64x384xbf16>
    %c0_25 = arith.constant 0 : index
    %c0_26 = arith.constant 0 : index
    %c0_27 = arith.constant 0 : index
    %30 = vector.load %arg5[%c0_25, %c0_26, %c0_27] : memref<3x32x64xbf16, #tpu.memory_space<vmem>>, vector<1x32x64xbf16>
    %31 = vector.shape_cast %30 : vector<1x32x64xbf16> to vector<32x64xbf16>
    %cst_28 = arith.constant dense<0.000000e+00> : vector<32x384xf32>
    %32 = tpu.matmul %31, %29, %cst_28 {dimension_numbers = #tpu.dot_dimension_numbers<[1], [0], [0], [1], [0, 0, 1, 1], [], []>} : vector<32x64xbf16>, vector<64x384xbf16>, vector<32x384xf32> -> vector<32x384xf32>
    %33 = arith.truncf %32 : vector<32x384xf32> to vector<32x384xbf16>
    %c0_29 = arith.constant 0 : index
    %c0_30 = arith.constant 0 : index
    %c0_31 = arith.constant 0 : index
    %34 = vector.load %arg6[%c0_29, %c0_30, %c0_31] : memref<3x384x192xbf16, #tpu.memory_space<vmem>>, vector<1x384x192xbf16>
    %35 = vector.shape_cast %34 : vector<1x384x192xbf16> to vector<384x192xbf16>
    %cst_32 = arith.constant dense<0.000000e+00> : vector<32x192xf32>
    %36 = tpu.matmul %33, %35, %cst_32 {dimension_numbers = #tpu.dot_dimension_numbers<[1], [0], [0], [1], [0, 0, 1, 1], [], []>} : vector<32x384xbf16>, vector<384x192xbf16>, vector<32x192xf32> -> vector<32x192xf32>
    %c1_33 = arith.constant 1 : index
    %c0_34 = arith.constant 0 : index
    %c0_35 = arith.constant 0 : index
    %37 = vector.load %arg5[%c1_33, %c0_34, %c0_35] : memref<3x32x64xbf16, #tpu.memory_space<vmem>>, vector<1x32x64xbf16>
    %38 = vector.shape_cast %37 : vector<1x32x64xbf16> to vector<32x64xbf16>
    %cst_36 = arith.constant dense<0.000000e+00> : vector<32x384xf32>
    %39 = tpu.matmul %38, %29, %cst_36 {dimension_numbers = #tpu.dot_dimension_numbers<[1], [0], [0], [1], [0, 0, 1, 1], [], []>} : vector<32x64xbf16>, vector<64x384xbf16>, vector<32x384xf32> -> vector<32x384xf32>
    %40 = arith.truncf %39 : vector<32x384xf32> to vector<32x384xbf16>
    %c1_37 = arith.constant 1 : index
    %c0_38 = arith.constant 0 : index
    %c0_39 = arith.constant 0 : index
    %41 = vector.load %arg6[%c1_37, %c0_38, %c0_39] : memref<3x384x192xbf16, #tpu.memory_space<vmem>>, vector<1x384x192xbf16>
    %42 = vector.shape_cast %41 : vector<1x384x192xbf16> to vector<384x192xbf16>
    %cst_40 = arith.constant dense<0.000000e+00> : vector<32x192xf32>
    %43 = tpu.matmul %40, %42, %cst_40 {dimension_numbers = #tpu.dot_dimension_numbers<[1], [0], [0], [1], [0, 0, 1, 1], [], []>} : vector<32x384xbf16>, vector<384x192xbf16>, vector<32x192xf32> -> vector<32x192xf32>
    %44 = arith.addf %36, %43 : vector<32x192xf32>
    %c2_41 = arith.constant 2 : index
    %c0_42 = arith.constant 0 : index
    %c0_43 = arith.constant 0 : index
    %45 = vector.load %arg5[%c2_41, %c0_42, %c0_43] : memref<3x32x64xbf16, #tpu.memory_space<vmem>>, vector<1x32x64xbf16>
    %46 = vector.shape_cast %45 : vector<1x32x64xbf16> to vector<32x64xbf16>
    %cst_44 = arith.constant dense<0.000000e+00> : vector<32x384xf32>
    %47 = tpu.matmul %46, %29, %cst_44 {dimension_numbers = #tpu.dot_dimension_numbers<[1], [0], [0], [1], [0, 0, 1, 1], [], []>} : vector<32x64xbf16>, vector<64x384xbf16>, vector<32x384xf32> -> vector<32x384xf32>
    %48 = arith.truncf %47 : vector<32x384xf32> to vector<32x384xbf16>
    %c2_45 = arith.constant 2 : index
    %c0_46 = arith.constant 0 : index
    %c0_47 = arith.constant 0 : index
    %49 = vector.load %arg6[%c2_45, %c0_46, %c0_47] : memref<3x384x192xbf16, #tpu.memory_space<vmem>>, vector<1x384x192xbf16>
    %50 = vector.shape_cast %49 : vector<1x384x192xbf16> to vector<384x192xbf16>
    %cst_48 = arith.constant dense<0.000000e+00> : vector<32x192xf32>
    %51 = tpu.matmul %48, %50, %cst_48 {dimension_numbers = #tpu.dot_dimension_numbers<[1], [0], [0], [1], [0, 0, 1, 1], [], []>} : vector<32x384xbf16>, vector<384x192xbf16>, vector<32x192xf32> -> vector<32x192xf32>
    %52 = arith.addf %44, %51 : vector<32x192xf32>
    %c0_49 = arith.constant 0 : index
    %c0_50 = arith.constant 0 : index
    %53 = vector.load %arg7[%c0_49, %c0_50] : memref<1x192xf32, #tpu.memory_space<vmem>>, vector<1x192xf32>
    %54 = vector.broadcast %53 : vector<1x192xf32> to vector<32x192xf32>
    %55 = arith.addf %52, %54 : vector<32x192xf32>
    %cst_51 = arith.constant 0.000000e+00 : f32
    %56 = vector.broadcast %cst_51 : f32 to vector<32x192xf32>
    %57 = arith.maximumf %55, %56 : vector<32x192xf32>
    %58 = arith.truncf %57 : vector<32x192xf32> to vector<32x192xbf16>
    %c0_52 = arith.constant 0 : index
    %c0_53 = arith.constant 0 : index
    %c0_54 = arith.constant 0 : index
    %59 = vector.load %arg8[%c0_52, %c0_53, %c0_54] : memref<3x16x32xbf16, #tpu.memory_space<vmem>>, vector<1x16x32xbf16>
    %60 = vector.shape_cast %59 : vector<1x16x32xbf16> to vector<16x32xbf16>
    %cst_55 = arith.constant dense<0.000000e+00> : vector<16x192xf32>
    %61 = tpu.matmul %60, %58, %cst_55 {dimension_numbers = #tpu.dot_dimension_numbers<[1], [0], [0], [1], [0, 0, 1, 1], [], []>} : vector<16x32xbf16>, vector<32x192xbf16>, vector<16x192xf32> -> vector<16x192xf32>
    %62 = arith.truncf %61 : vector<16x192xf32> to vector<16x192xbf16>
    %c0_56 = arith.constant 0 : index
    %c0_57 = arith.constant 0 : index
    %c0_58 = arith.constant 0 : index
    %63 = vector.load %arg9[%c0_56, %c0_57, %c0_58] : memref<3x192x128xbf16, #tpu.memory_space<vmem>>, vector<1x192x128xbf16>
    %64 = vector.shape_cast %63 : vector<1x192x128xbf16> to vector<192x128xbf16>
    %cst_59 = arith.constant dense<0.000000e+00> : vector<16x128xf32>
    %65 = tpu.matmul %62, %64, %cst_59 {dimension_numbers = #tpu.dot_dimension_numbers<[1], [0], [0], [1], [0, 0, 1, 1], [], []>} : vector<16x192xbf16>, vector<192x128xbf16>, vector<16x128xf32> -> vector<16x128xf32>
    %c1_60 = arith.constant 1 : index
    %c0_61 = arith.constant 0 : index
    %c0_62 = arith.constant 0 : index
    %66 = vector.load %arg8[%c1_60, %c0_61, %c0_62] : memref<3x16x32xbf16, #tpu.memory_space<vmem>>, vector<1x16x32xbf16>
    %67 = vector.shape_cast %66 : vector<1x16x32xbf16> to vector<16x32xbf16>
    %cst_63 = arith.constant dense<0.000000e+00> : vector<16x192xf32>
    %68 = tpu.matmul %67, %58, %cst_63 {dimension_numbers = #tpu.dot_dimension_numbers<[1], [0], [0], [1], [0, 0, 1, 1], [], []>} : vector<16x32xbf16>, vector<32x192xbf16>, vector<16x192xf32> -> vector<16x192xf32>
    %69 = arith.truncf %68 : vector<16x192xf32> to vector<16x192xbf16>
    %c1_64 = arith.constant 1 : index
    %c0_65 = arith.constant 0 : index
    %c0_66 = arith.constant 0 : index
    %70 = vector.load %arg9[%c1_64, %c0_65, %c0_66] : memref<3x192x128xbf16, #tpu.memory_space<vmem>>, vector<1x192x128xbf16>
    %71 = vector.shape_cast %70 : vector<1x192x128xbf16> to vector<192x128xbf16>
    %cst_67 = arith.constant dense<0.000000e+00> : vector<16x128xf32>
    %72 = tpu.matmul %69, %71, %cst_67 {dimension_numbers = #tpu.dot_dimension_numbers<[1], [0], [0], [1], [0, 0, 1, 1], [], []>} : vector<16x192xbf16>, vector<192x128xbf16>, vector<16x128xf32> -> vector<16x128xf32>
    %73 = arith.addf %65, %72 : vector<16x128xf32>
    %c2_68 = arith.constant 2 : index
    %c0_69 = arith.constant 0 : index
    %c0_70 = arith.constant 0 : index
    %74 = vector.load %arg8[%c2_68, %c0_69, %c0_70] : memref<3x16x32xbf16, #tpu.memory_space<vmem>>, vector<1x16x32xbf16>
    %75 = vector.shape_cast %74 : vector<1x16x32xbf16> to vector<16x32xbf16>
    %cst_71 = arith.constant dense<0.000000e+00> : vector<16x192xf32>
    %76 = tpu.matmul %75, %58, %cst_71 {dimension_numbers = #tpu.dot_dimension_numbers<[1], [0], [0], [1], [0, 0, 1, 1], [], []>} : vector<16x32xbf16>, vector<32x192xbf16>, vector<16x192xf32> -> vector<16x192xf32>
    %77 = arith.truncf %76 : vector<16x192xf32> to vector<16x192xbf16>
    %c2_72 = arith.constant 2 : index
    %c0_73 = arith.constant 0 : index
    %c0_74 = arith.constant 0 : index
    %78 = vector.load %arg9[%c2_72, %c0_73, %c0_74] : memref<3x192x128xbf16, #tpu.memory_space<vmem>>, vector<1x192x128xbf16>
    %79 = vector.shape_cast %78 : vector<1x192x128xbf16> to vector<192x128xbf16>
    %cst_75 = arith.constant dense<0.000000e+00> : vector<16x128xf32>
    %80 = tpu.matmul %77, %79, %cst_75 {dimension_numbers = #tpu.dot_dimension_numbers<[1], [0], [0], [1], [0, 0, 1, 1], [], []>} : vector<16x192xbf16>, vector<192x128xbf16>, vector<16x128xf32> -> vector<16x128xf32>
    %81 = arith.addf %73, %80 : vector<16x128xf32>
    %c0_76 = arith.constant 0 : index
    %c0_77 = arith.constant 0 : index
    %82 = vector.load %arg10[%c0_76, %c0_77] : memref<1x128xf32, #tpu.memory_space<vmem>>, vector<1x128xf32>
    %83 = vector.broadcast %82 : vector<1x128xf32> to vector<16x128xf32>
    %84 = arith.addf %81, %83 : vector<16x128xf32>
    %cst_78 = arith.constant 0.000000e+00 : f32
    %85 = vector.broadcast %cst_78 : f32 to vector<16x128xf32>
    %86 = arith.maximumf %84, %85 : vector<16x128xf32>
    %87 = arith.truncf %86 : vector<16x128xf32> to vector<16x128xbf16>
    %c0_79 = arith.constant 0 : index
    %c0_80 = arith.constant 0 : index
    %c0_81 = arith.constant 0 : index
    %88 = vector.load %arg11[%c0_79, %c0_80, %c0_81] : memref<3x8x16xbf16, #tpu.memory_space<vmem>>, vector<1x8x16xbf16>
    %89 = vector.shape_cast %88 : vector<1x8x16xbf16> to vector<8x16xbf16>
    %cst_82 = arith.constant dense<0.000000e+00> : vector<8x128xf32>
    %90 = tpu.matmul %89, %87, %cst_82 {dimension_numbers = #tpu.dot_dimension_numbers<[1], [0], [0], [1], [0, 0, 1, 1], [], []>} : vector<8x16xbf16>, vector<16x128xbf16>, vector<8x128xf32> -> vector<8x128xf32>
    %91 = arith.truncf %90 : vector<8x128xf32> to vector<8x128xbf16>
    %c0_83 = arith.constant 0 : index
    %c0_84 = arith.constant 0 : index
    %c0_85 = arith.constant 0 : index
    %92 = vector.load %arg12[%c0_83, %c0_84, %c0_85] : memref<3x128x72xbf16, #tpu.memory_space<vmem>>, vector<1x128x72xbf16>
    %93 = vector.shape_cast %92 : vector<1x128x72xbf16> to vector<128x72xbf16>
    %cst_86 = arith.constant dense<0.000000e+00> : vector<8x72xf32>
    %94 = tpu.matmul %91, %93, %cst_86 {dimension_numbers = #tpu.dot_dimension_numbers<[1], [0], [0], [1], [0, 0, 1, 1], [], []>} : vector<8x128xbf16>, vector<128x72xbf16>, vector<8x72xf32> -> vector<8x72xf32>
    %c1_87 = arith.constant 1 : index
    %c0_88 = arith.constant 0 : index
    %c0_89 = arith.constant 0 : index
    %95 = vector.load %arg11[%c1_87, %c0_88, %c0_89] : memref<3x8x16xbf16, #tpu.memory_space<vmem>>, vector<1x8x16xbf16>
    %96 = vector.shape_cast %95 : vector<1x8x16xbf16> to vector<8x16xbf16>
    %cst_90 = arith.constant dense<0.000000e+00> : vector<8x128xf32>
    %97 = tpu.matmul %96, %87, %cst_90 {dimension_numbers = #tpu.dot_dimension_numbers<[1], [0], [0], [1], [0, 0, 1, 1], [], []>} : vector<8x16xbf16>, vector<16x128xbf16>, vector<8x128xf32> -> vector<8x128xf32>
    %98 = arith.truncf %97 : vector<8x128xf32> to vector<8x128xbf16>
    %c1_91 = arith.constant 1 : index
    %c0_92 = arith.constant 0 : index
    %c0_93 = arith.constant 0 : index
    %99 = vector.load %arg12[%c1_91, %c0_92, %c0_93] : memref<3x128x72xbf16, #tpu.memory_space<vmem>>, vector<1x128x72xbf16>
    %100 = vector.shape_cast %99 : vector<1x128x72xbf16> to vector<128x72xbf16>
    %cst_94 = arith.constant dense<0.000000e+00> : vector<8x72xf32>
    %101 = tpu.matmul %98, %100, %cst_94 {dimension_numbers = #tpu.dot_dimension_numbers<[1], [0], [0], [1], [0, 0, 1, 1], [], []>} : vector<8x128xbf16>, vector<128x72xbf16>, vector<8x72xf32> -> vector<8x72xf32>
    %102 = arith.addf %94, %101 : vector<8x72xf32>
    %c2_95 = arith.constant 2 : index
    %c0_96 = arith.constant 0 : index
    %c0_97 = arith.constant 0 : index
    %103 = vector.load %arg11[%c2_95, %c0_96, %c0_97] : memref<3x8x16xbf16, #tpu.memory_space<vmem>>, vector<1x8x16xbf16>
    %104 = vector.shape_cast %103 : vector<1x8x16xbf16> to vector<8x16xbf16>
    %cst_98 = arith.constant dense<0.000000e+00> : vector<8x128xf32>
    %105 = tpu.matmul %104, %87, %cst_98 {dimension_numbers = #tpu.dot_dimension_numbers<[1], [0], [0], [1], [0, 0, 1, 1], [], []>} : vector<8x16xbf16>, vector<16x128xbf16>, vector<8x128xf32> -> vector<8x128xf32>
    %106 = arith.truncf %105 : vector<8x128xf32> to vector<8x128xbf16>
    %c2_99 = arith.constant 2 : index
    %c0_100 = arith.constant 0 : index
    %c0_101 = arith.constant 0 : index
    %107 = vector.load %arg12[%c2_99, %c0_100, %c0_101] : memref<3x128x72xbf16, #tpu.memory_space<vmem>>, vector<1x128x72xbf16>
    %108 = vector.shape_cast %107 : vector<1x128x72xbf16> to vector<128x72xbf16>
    %cst_102 = arith.constant dense<0.000000e+00> : vector<8x72xf32>
    %109 = tpu.matmul %106, %108, %cst_102 {dimension_numbers = #tpu.dot_dimension_numbers<[1], [0], [0], [1], [0, 0, 1, 1], [], []>} : vector<8x128xbf16>, vector<128x72xbf16>, vector<8x72xf32> -> vector<8x72xf32>
    %110 = arith.addf %102, %109 : vector<8x72xf32>
    %c0_103 = arith.constant 0 : index
    %c0_104 = arith.constant 0 : index
    %111 = vector.load %arg13[%c0_103, %c0_104] : memref<1x72xf32, #tpu.memory_space<vmem>>, vector<1x72xf32>
    %112 = vector.broadcast %111 : vector<1x72xf32> to vector<8x72xf32>
    %113 = arith.addf %110, %112 : vector<8x72xf32>
    %cst_105 = arith.constant 0.000000e+00 : f32
    %114 = vector.broadcast %cst_105 : f32 to vector<8x72xf32>
    %115 = arith.maximumf %113, %114 : vector<8x72xf32>
    %116 = arith.truncf %115 : vector<8x72xf32> to vector<8x72xbf16>
    %c0_106 = arith.constant 0 : index
    %c0_107 = arith.constant 0 : index
    %c0_108 = arith.constant 0 : index
    %117 = vector.load %arg14[%c0_106, %c0_107, %c0_108] : memref<3x4x8xbf16, #tpu.memory_space<vmem>>, vector<1x4x8xbf16>
    %118 = vector.shape_cast %117 : vector<1x4x8xbf16> to vector<4x8xbf16>
    %cst_109 = arith.constant dense<0.000000e+00> : vector<4x72xf32>
    %119 = tpu.matmul %118, %116, %cst_109 {dimension_numbers = #tpu.dot_dimension_numbers<[1], [0], [0], [1], [0, 0, 1, 1], [], []>} : vector<4x8xbf16>, vector<8x72xbf16>, vector<4x72xf32> -> vector<4x72xf32>
    %120 = arith.truncf %119 : vector<4x72xf32> to vector<4x72xbf16>
    %c0_110 = arith.constant 0 : index
    %c0_111 = arith.constant 0 : index
    %c0_112 = arith.constant 0 : index
    %121 = vector.load %arg15[%c0_110, %c0_111, %c0_112] : memref<3x72x48xbf16, #tpu.memory_space<vmem>>, vector<1x72x48xbf16>
    %122 = vector.shape_cast %121 : vector<1x72x48xbf16> to vector<72x48xbf16>
    %cst_113 = arith.constant dense<0.000000e+00> : vector<4x48xf32>
    %123 = tpu.matmul %120, %122, %cst_113 {dimension_numbers = #tpu.dot_dimension_numbers<[1], [0], [0], [1], [0, 0, 1, 1], [], []>} : vector<4x72xbf16>, vector<72x48xbf16>, vector<4x48xf32> -> vector<4x48xf32>
    %c1_114 = arith.constant 1 : index
    %c0_115 = arith.constant 0 : index
    %c0_116 = arith.constant 0 : index
    %124 = vector.load %arg14[%c1_114, %c0_115, %c0_116] : memref<3x4x8xbf16, #tpu.memory_space<vmem>>, vector<1x4x8xbf16>
    %125 = vector.shape_cast %124 : vector<1x4x8xbf16> to vector<4x8xbf16>
    %cst_117 = arith.constant dense<0.000000e+00> : vector<4x72xf32>
    %126 = tpu.matmul %125, %116, %cst_117 {dimension_numbers = #tpu.dot_dimension_numbers<[1], [0], [0], [1], [0, 0, 1, 1], [], []>} : vector<4x8xbf16>, vector<8x72xbf16>, vector<4x72xf32> -> vector<4x72xf32>
    %127 = arith.truncf %126 : vector<4x72xf32> to vector<4x72xbf16>
    %c1_118 = arith.constant 1 : index
    %c0_119 = arith.constant 0 : index
    %c0_120 = arith.constant 0 : index
    %128 = vector.load %arg15[%c1_118, %c0_119, %c0_120] : memref<3x72x48xbf16, #tpu.memory_space<vmem>>, vector<1x72x48xbf16>
    %129 = vector.shape_cast %128 : vector<1x72x48xbf16> to vector<72x48xbf16>
    %cst_121 = arith.constant dense<0.000000e+00> : vector<4x48xf32>
    %130 = tpu.matmul %127, %129, %cst_121 {dimension_numbers = #tpu.dot_dimension_numbers<[1], [0], [0], [1], [0, 0, 1, 1], [], []>} : vector<4x72xbf16>, vector<72x48xbf16>, vector<4x48xf32> -> vector<4x48xf32>
    %131 = arith.addf %123, %130 : vector<4x48xf32>
    %c2_122 = arith.constant 2 : index
    %c0_123 = arith.constant 0 : index
    %c0_124 = arith.constant 0 : index
    %132 = vector.load %arg14[%c2_122, %c0_123, %c0_124] : memref<3x4x8xbf16, #tpu.memory_space<vmem>>, vector<1x4x8xbf16>
    %133 = vector.shape_cast %132 : vector<1x4x8xbf16> to vector<4x8xbf16>
    %cst_125 = arith.constant dense<0.000000e+00> : vector<4x72xf32>
    %134 = tpu.matmul %133, %116, %cst_125 {dimension_numbers = #tpu.dot_dimension_numbers<[1], [0], [0], [1], [0, 0, 1, 1], [], []>} : vector<4x8xbf16>, vector<8x72xbf16>, vector<4x72xf32> -> vector<4x72xf32>
    %135 = arith.truncf %134 : vector<4x72xf32> to vector<4x72xbf16>
    %c2_126 = arith.constant 2 : index
    %c0_127 = arith.constant 0 : index
    %c0_128 = arith.constant 0 : index
    %136 = vector.load %arg15[%c2_126, %c0_127, %c0_128] : memref<3x72x48xbf16, #tpu.memory_space<vmem>>, vector<1x72x48xbf16>
    %137 = vector.shape_cast %136 : vector<1x72x48xbf16> to vector<72x48xbf16>
    %cst_129 = arith.constant dense<0.000000e+00> : vector<4x48xf32>
    %138 = tpu.matmul %135, %137, %cst_129 {dimension_numbers = #tpu.dot_dimension_numbers<[1], [0], [0], [1], [0, 0, 1, 1], [], []>} : vector<4x72xbf16>, vector<72x48xbf16>, vector<4x48xf32> -> vector<4x48xf32>
    %139 = arith.addf %131, %138 : vector<4x48xf32>
    %c0_130 = arith.constant 0 : index
    %c0_131 = arith.constant 0 : index
    %140 = vector.load %arg16[%c0_130, %c0_131] : memref<1x48xf32, #tpu.memory_space<vmem>>, vector<1x48xf32>
    %141 = vector.broadcast %140 : vector<1x48xf32> to vector<4x48xf32>
    %142 = arith.addf %139, %141 : vector<4x48xf32>
    %cst_132 = arith.constant 0.000000e+00 : f32
    %143 = vector.broadcast %cst_132 : f32 to vector<4x48xf32>
    %144 = arith.maximumf %142, %143 : vector<4x48xf32>
    %145 = arith.truncf %144 : vector<4x48xf32> to vector<4x48xbf16>
    %c0_133 = arith.constant 0 : index
    %c0_134 = arith.constant 0 : index
    %c0_135 = arith.constant 0 : index
    %146 = vector.load %arg17[%c0_133, %c0_134, %c0_135] : memref<3x2x4xbf16, #tpu.memory_space<vmem>>, vector<1x2x4xbf16>
    %147 = vector.shape_cast %146 : vector<1x2x4xbf16> to vector<2x4xbf16>
    %cst_136 = arith.constant dense<0.000000e+00> : vector<2x48xf32>
    %148 = tpu.matmul %147, %145, %cst_136 {dimension_numbers = #tpu.dot_dimension_numbers<[1], [0], [0], [1], [0, 0, 1, 1], [], []>} : vector<2x4xbf16>, vector<4x48xbf16>, vector<2x48xf32> -> vector<2x48xf32>
    %149 = arith.truncf %148 : vector<2x48xf32> to vector<2x48xbf16>
    %c0_137 = arith.constant 0 : index
    %c0_138 = arith.constant 0 : index
    %c0_139 = arith.constant 0 : index
    %150 = vector.load %arg18[%c0_137, %c0_138, %c0_139] : memref<3x48x32xbf16, #tpu.memory_space<vmem>>, vector<1x48x32xbf16>
    %151 = vector.shape_cast %150 : vector<1x48x32xbf16> to vector<48x32xbf16>
    %cst_140 = arith.constant dense<0.000000e+00> : vector<2x32xf32>
    %152 = tpu.matmul %149, %151, %cst_140 {dimension_numbers = #tpu.dot_dimension_numbers<[1], [0], [0], [1], [0, 0, 1, 1], [], []>} : vector<2x48xbf16>, vector<48x32xbf16>, vector<2x32xf32> -> vector<2x32xf32>
    %c1_141 = arith.constant 1 : index
    %c0_142 = arith.constant 0 : index
    %c0_143 = arith.constant 0 : index
    %153 = vector.load %arg17[%c1_141, %c0_142, %c0_143] : memref<3x2x4xbf16, #tpu.memory_space<vmem>>, vector<1x2x4xbf16>
    %154 = vector.shape_cast %153 : vector<1x2x4xbf16> to vector<2x4xbf16>
    %cst_144 = arith.constant dense<0.000000e+00> : vector<2x48xf32>
    %155 = tpu.matmul %154, %145, %cst_144 {dimension_numbers = #tpu.dot_dimension_numbers<[1], [0], [0], [1], [0, 0, 1, 1], [], []>} : vector<2x4xbf16>, vector<4x48xbf16>, vector<2x48xf32> -> vector<2x48xf32>
    %156 = arith.truncf %155 : vector<2x48xf32> to vector<2x48xbf16>
    %c1_145 = arith.constant 1 : index
    %c0_146 = arith.constant 0 : index
    %c0_147 = arith.constant 0 : index
    %157 = vector.load %arg18[%c1_145, %c0_146, %c0_147] : memref<3x48x32xbf16, #tpu.memory_space<vmem>>, vector<1x48x32xbf16>
    %158 = vector.shape_cast %157 : vector<1x48x32xbf16> to vector<48x32xbf16>
    %cst_148 = arith.constant dense<0.000000e+00> : vector<2x32xf32>
    %159 = tpu.matmul %156, %158, %cst_148 {dimension_numbers = #tpu.dot_dimension_numbers<[1], [0], [0], [1], [0, 0, 1, 1], [], []>} : vector<2x48xbf16>, vector<48x32xbf16>, vector<2x32xf32> -> vector<2x32xf32>
    %160 = arith.addf %152, %159 : vector<2x32xf32>
    %c2_149 = arith.constant 2 : index
    %c0_150 = arith.constant 0 : index
    %c0_151 = arith.constant 0 : index
    %161 = vector.load %arg17[%c2_149, %c0_150, %c0_151] : memref<3x2x4xbf16, #tpu.memory_space<vmem>>, vector<1x2x4xbf16>
    %162 = vector.shape_cast %161 : vector<1x2x4xbf16> to vector<2x4xbf16>
    %cst_152 = arith.constant dense<0.000000e+00> : vector<2x48xf32>
    %163 = tpu.matmul %162, %145, %cst_152 {dimension_numbers = #tpu.dot_dimension_numbers<[1], [0], [0], [1], [0, 0, 1, 1], [], []>} : vector<2x4xbf16>, vector<4x48xbf16>, vector<2x48xf32> -> vector<2x48xf32>
    %164 = arith.truncf %163 : vector<2x48xf32> to vector<2x48xbf16>
    %c2_153 = arith.constant 2 : index
    %c0_154 = arith.constant 0 : index
    %c0_155 = arith.constant 0 : index
    %165 = vector.load %arg18[%c2_153, %c0_154, %c0_155] : memref<3x48x32xbf16, #tpu.memory_space<vmem>>, vector<1x48x32xbf16>
    %166 = vector.shape_cast %165 : vector<1x48x32xbf16> to vector<48x32xbf16>
    %cst_156 = arith.constant dense<0.000000e+00> : vector<2x32xf32>
    %167 = tpu.matmul %164, %166, %cst_156 {dimension_numbers = #tpu.dot_dimension_numbers<[1], [0], [0], [1], [0, 0, 1, 1], [], []>} : vector<2x48xbf16>, vector<48x32xbf16>, vector<2x32xf32> -> vector<2x32xf32>
    %168 = arith.addf %160, %167 : vector<2x32xf32>
    %c0_157 = arith.constant 0 : index
    %c0_158 = arith.constant 0 : index
    %169 = vector.load %arg19[%c0_157, %c0_158] : memref<1x32xf32, #tpu.memory_space<vmem>>, vector<1x32xf32>
    %170 = vector.broadcast %169 : vector<1x32xf32> to vector<2x32xf32>
    %171 = arith.addf %168, %170 : vector<2x32xf32>
    %cst_159 = arith.constant 0.000000e+00 : f32
    %172 = vector.broadcast %cst_159 : f32 to vector<2x32xf32>
    %173 = arith.maximumf %171, %172 : vector<2x32xf32>
    %c0_160 = arith.constant 0 : index
    %c0_161 = arith.constant 0 : index
    %174 = vector.load %arg20[%c0_160, %c0_161] : memref<2x32xf32, #tpu.memory_space<vmem>>, vector<2x32xf32>
    tpu.vector_store %arg20[%c0_160, %c0_161], %173 {strides = array<i32>} : memref<2x32xf32, #tpu.memory_space<vmem>>, vector<2x32xf32>,
    return
  }
  func.func @transform_0(%arg0: i32) -> (i32, i32) {
    %c0_i32 = arith.constant 0 : i32
    %c0_i32_0 = arith.constant 0 : i32
    %c0_i32_1 = arith.constant 0 : i32
    return %c0_i32, %c0_i32_0 : i32, i32
  }
  func.func @transform_1(%arg0: i32) -> (i32, i32, i32) {
    %c0_i32 = arith.constant 0 : i32
    %c0_i32_0 = arith.constant 0 : i32
    %c0_i32_1 = arith.constant 0 : i32
    %c0_i32_2 = arith.constant 0 : i32
    return %c0_i32, %c0_i32_0, %c0_i32_1 : i32, i32, i32
  }
  func.func @transform_2(%arg0: i32) -> (i32, i32, i32) {
    %c0_i32 = arith.constant 0 : i32
    %c0_i32_0 = arith.constant 0 : i32
    %c0_i32_1 = arith.constant 0 : i32
    %c0_i32_2 = arith.constant 0 : i32
    return %c0_i32, %c0_i32_0, %c0_i32_1 : i32, i32, i32
  }
  func.func @transform_3(%arg0: i32) -> (i32, i32) {
    %c0_i32 = arith.constant 0 : i32
    %c0_i32_0 = arith.constant 0 : i32
    %c0_i32_1 = arith.constant 0 : i32
    return %c0_i32, %c0_i32_0 : i32, i32
  }
  func.func @transform_4(%arg0: i32) -> (i32, i32, i32) {
    %c0_i32 = arith.constant 0 : i32
    %c0_i32_0 = arith.constant 0 : i32
    %c0_i32_1 = arith.constant 0 : i32
    %c0_i32_2 = arith.constant 0 : i32
    return %c0_i32, %c0_i32_0, %c0_i32_1 : i32, i32, i32
  }
  func.func @transform_5(%arg0: i32) -> (i32, i32, i32) {
    %c0_i32 = arith.constant 0 : i32
    %c0_i32_0 = arith.constant 0 : i32
    %c0_i32_1 = arith.constant 0 : i32
    %c0_i32_2 = arith.constant 0 : i32
    return %c0_i32, %c0_i32_0, %c0_i32_1 : i32, i32, i32
  }
  func.func @transform_6(%arg0: i32) -> (i32, i32) {
    %c0_i32 = arith.constant 0 : i32
    %c0_i32_0 = arith.constant 0 : i32
    %c0_i32_1 = arith.constant 0 : i32
    return %c0_i32, %c0_i32_0 : i32, i32
  }
  func.func @transform_7(%arg0: i32) -> (i32, i32, i32) {
    %c0_i32 = arith.constant 0 : i32
    %c0_i32_0 = arith.constant 0 : i32
    %c0_i32_1 = arith.constant 0 : i32
    %c0_i32_2 = arith.constant 0 : i32
    return %c0_i32, %c0_i32_0, %c0_i32_1 : i32, i32, i32
  }
  func.func @transform_8(%arg0: i32) -> (i32, i32, i32) {
    %c0_i32 = arith.constant 0 : i32
    %c0_i32_0 = arith.constant 0 : i32
    %c0_i32_1 = arith.constant 0 : i32
    %c0_i32_2 = arith.constant 0 : i32
    return %c0_i32, %c0_i32_0, %c0_i32_1 : i32, i32, i32
  }
  func.func @transform_9(%arg0: i32) -> (i32, i32) {
    %c0_i32 = arith.constant 0 : i32
    %c0_i32_0 = arith.constant 0 : i32
    %c0_i32_1 = arith.constant 0 : i32
    return %c0_i32, %c0_i32_0 : i32, i32
  }
  func.func @transform_10(%arg0: i32) -> (i32, i32, i32) {
    %c0_i32 = arith.constant 0 : i32
    %c0_i32_0 = arith.constant 0 : i32
    %c0_i32_1 = arith.constant 0 : i32
    %c0_i32_2 = arith.constant 0 : i32
    return %c0_i32, %c0_i32_0, %c0_i32_1 : i32, i32, i32
  }
  func.func @transform_11(%arg0: i32) -> (i32, i32, i32) {
    %c0_i32 = arith.constant 0 : i32
    %c0_i32_0 = arith.constant 0 : i32
    %c0_i32_1 = arith.constant 0 : i32
    %c0_i32_2 = arith.constant 0 : i32
    return %c0_i32, %c0_i32_0, %c0_i32_1 : i32, i32, i32
  }
  func.func @transform_12(%arg0: i32) -> (i32, i32) {
    %c0_i32 = arith.constant 0 : i32
    %c0_i32_0 = arith.constant 0 : i32
    %c0_i32_1 = arith.constant 0 : i32
    return %c0_i32, %c0_i32_0 : i32, i32
  }
  func.func @transform_13(%arg0: i32) -> (i32, i32, i32) {
    %c0_i32 = arith.constant 0 : i32
    %c0_i32_0 = arith.constant 0 : i32
    %c0_i32_1 = arith.constant 0 : i32
    %c0_i32_2 = arith.constant 0 : i32
    return %c0_i32, %c0_i32_0, %c0_i32_1 : i32, i32, i32
  }
  func.func @transform_14(%arg0: i32) -> (i32, i32, i32) {
    %c0_i32 = arith.constant 0 : i32
    %c0_i32_0 = arith.constant 0 : i32
    %c0_i32_1 = arith.constant 0 : i32
    %c0_i32_2 = arith.constant 0 : i32
    return %c0_i32, %c0_i32_0, %c0_i32_1 : i32, i32, i32
  }
  func.func @transform_15(%arg0: i32) -> (i32, i32) {
    %c0_i32 = arith.constant 0 : i32
    %c0_i32_0 = arith.constant 0 : i32
    %c0_i32_1 = arith.constant 0 : i32
    return %c0_i32, %c0_i32_0 : i32, i32
  }
  func.func @transform_16(%arg0: i32) -> (i32, i32, i32) {
    %c0_i32 = arith.constant 0 : i32
    %c0_i32_0 = arith.constant 0 : i32
    %c0_i32_1 = arith.constant 0 : i32
    %c0_i32_2 = arith.constant 0 : i32
    return %c0_i32, %c0_i32_0, %c0_i32_1 : i32, i32, i32
  }
  func.func @transform_17(%arg0: i32) -> (i32, i32, i32) {
    %c0_i32 = arith.constant 0 : i32
    %c0_i32_0 = arith.constant 0 : i32
    %c0_i32_1 = arith.constant 0 : i32
    %c0_i32_2 = arith.constant 0 : i32
    return %c0_i32, %c0_i32_0, %c0_i32_1 : i32, i32, i32
  }
  func.func @transform_18(%arg0: i32) -> (i32, i32) {
    %c0_i32 = arith.constant 0 : i32
    %c0_i32_0 = arith.constant 0 : i32
    %c0_i32_1 = arith.constant 0 : i32
    return %c0_i32, %c0_i32_0 : i32, i32
  }
  func.func @transform_19(%arg0: i32) -> (i32, i32) {
    %c0_i32 = arith.constant 0 : i32
    %c0_i32_0 = arith.constant 0 : i32
    %c0_i32_1 = arith.constant 0 : i32
    return %c0_i32, %c0_i32_0 : i32, i32
  }
}

</mosaic_0001>

<llo_original>
// kernel: resnet_forward.1
$region0: #{resnet_forward.1}
  #allocation0 [shape = 'u32[]', space=smem, size = 0x4, offset = 0x4, fixed_abs, tag = 'smem constant byte address 0x4 - core index']
  #allocation1 [shape = 'u32[144,128]{1,0:T(1,128)}', space=vmem, size = 0x12000, scoped, tag = 'internal scratch']
  %s0 = inlined_call_operand.vmem [shape: bf16[128,64], index: 0, kind: input, shape index: {}]
  %s1 = inlined_call_operand.vmem [shape: bf16[3,64,128], index: 1, kind: input, shape index: {}]
  %s2 = inlined_call_operand.vmem [shape: bf16[3,64,384], index: 2, kind: input, shape index: {}]
  %s3 = inlined_call_operand.vmem [shape: f32[1,384], index: 3, kind: input, shape index: {}]
  %s4 = inlined_call_operand.vmem [shape: bf16[3,32,64], index: 4, kind: input, shape index: {}]
  %s5 = inlined_call_operand.vmem [shape: bf16[3,384,192], index: 5, kind: input, shape index: {}]
  %s6 = inlined_call_operand.vmem [shape: f32[1,192], index: 6, kind: input, shape index: {}]
  %s7 = inlined_call_operand.vmem [shape: bf16[3,16,32], index: 7, kind: input, shape index: {}]
  %s8 = inlined_call_operand.vmem [shape: bf16[3,192,128], index: 8, kind: input, shape index: {}]
  %s9 = inlined_call_operand.vmem [shape: f32[1,128], index: 9, kind: input, shape index: {}]
  %s10 = inlined_call_operand.vmem [shape: bf16[3,8,16], index: 10, kind: input, shape index: {}]
  %s11 = inlined_call_operand.vmem [shape: bf16[3,128,72], index: 11, kind: input, shape index: {}]
  %s12 = inlined_call_operand.vmem [shape: f32[1,72], index: 12, kind: input, shape index: {}]
  %s13 = inlined_call_operand.vmem [shape: bf16[3,4,8], index: 13, kind: input, shape index: {}]
  %s14 = inlined_call_operand.vmem [shape: bf16[3,72,48], index: 14, kind: input, shape index: {}]
  %s15 = inlined_call_operand.vmem [shape: f32[1,48], index: 15, kind: input, shape index: {}]
  %s16 = inlined_call_operand.vmem [shape: bf16[3,2,4], index: 16, kind: input, shape index: {}]
  %s17 = inlined_call_operand.vmem [shape: bf16[3,48,32], index: 17, kind: input, shape index: {}]
  %s18 = inlined_call_operand.vmem [shape: f32[1,32], index: 18, kind: input, shape index: {}]
  %s19 = inlined_call_operand.hbm [shape: f32[2,32], index: 19, kind: output, shape index: {}]
  %s20 = sld [smem:[#allocation0]]
  $region86: #{resnet_forward.1} parent=0
    _
  %s22 = ssub.s32 1, %s20
  %s23 = scalar_select 0, %s22, %s20
  $region1: #{resnet_forward.1} parent=0
    #allocation2 [shape = 'u8[1024]{0}', space=vmem, size = 0x400, scoped, tag = 'output window, operand 0, single buffered']
    #allocation3 [shape = 's32[1]{0}', space=sflag, size = 0x4, scoped, tag = 'scoped memory for resnet_forward.1']
    %24 = vsyncpa [#allocation3], 0
    // Predicated region
    $region2: #{resnet_forward.1} parent=1 // pred_check
      _
    $region3: #{resnet_forward.1} parent=1 // pred_check_branch
      %26 = sbr.rel (0) target = $region5
    $region4: #{resnet_forward.1} parent=1 // pred_region
      _
    $region5: #{resnet_forward.1} parent=1 // pred_fallthru
      _
    // Predicated region
    $region6: #{resnet_forward.1} parent=1 // pred_check
      _
    $region7: #{resnet_forward.1} parent=1 // pred_check_branch
      %28 = sbr.rel (0) target = $region9
    $region8: #{resnet_forward.1} parent=1 // pred_region
      _
    $region9: #{resnet_forward.1} parent=1 // pred_fallthru
      _
    // Predicated region
    $region10: #{resnet_forward.1} parent=1 // pred_check
      _
    $region11: #{resnet_forward.1} parent=1 // pred_check_branch
      %30 = sbr.rel (0) target = $region13
    $region12: #{resnet_forward.1} parent=1 // pred_region
      _
    $region13: #{resnet_forward.1} parent=1 // pred_fallthru
      _
    // Predicated region
    $region14: #{resnet_forward.1} parent=1 // pred_check
      _
    $region15: #{resnet_forward.1} parent=1 // pred_check_branch
      %32 = sbr.rel (0) target = $region17
    $region16: #{resnet_forward.1} parent=1 // pred_region
      _
    $region17: #{resnet_forward.1} parent=1 // pred_fallthru
      _
    // Predicated region
    $region18: #{resnet_forward.1} parent=1 // pred_check
      _
    $region19: #{resnet_forward.1} parent=1 // pred_check_branch
      %34 = sbr.rel (0) target = $region21
    $region20: #{resnet_forward.1} parent=1 // pred_region
      _
    $region21: #{resnet_forward.1} parent=1 // pred_fallthru
      _
    // Predicated region
    $region22: #{resnet_forward.1} parent=1 // pred_check
      _
    $region23: #{resnet_forward.1} parent=1 // pred_check_branch
      %36 = sbr.rel (0) target = $region25
    $region24: #{resnet_forward.1} parent=1 // pred_region
      _
    $region25: #{resnet_forward.1} parent=1 // pred_fallthru
      _
    // Predicated region
    $region26: #{resnet_forward.1} parent=1 // pred_check
      _
    $region27: #{resnet_forward.1} parent=1 // pred_check_branch
      %38 = sbr.rel (0) target = $region29
    $region28: #{resnet_forward.1} parent=1 // pred_region
      _
    $region29: #{resnet_forward.1} parent=1 // pred_fallthru
      _
    // Predicated region
    $region30: #{resnet_forward.1} parent=1 // pred_check
      _
    $region31: #{resnet_forward.1} parent=1 // pred_check_branch
      %40 = sbr.rel (0) target = $region33
    $region32: #{resnet_forward.1} parent=1 // pred_region
      _
    $region33: #{resnet_forward.1} parent=1 // pred_fallthru
      _
    // Predicated region
    $region34: #{resnet_forward.1} parent=1 // pred_check
      _
    $region35: #{resnet_forward.1} parent=1 // pred_check_branch
      %42 = sbr.rel (0) target = $region37
    $region36: #{resnet_forward.1} parent=1 // pred_region
      _
    $region37: #{resnet_forward.1} parent=1 // pred_fallthru
      _
    // Predicated region
    $region38: #{resnet_forward.1} parent=1 // pred_check
      _
    $region39: #{resnet_forward.1} parent=1 // pred_check_branch
      %44 = sbr.rel (0) target = $region41
    $region40: #{resnet_forward.1} parent=1 // pred_region
      _
    $region41: #{resnet_forward.1} parent=1 // pred_fallthru
      _
    // Predicated region
    $region42: #{resnet_forward.1} parent=1 // pred_check
      _
    $region43: #{resnet_forward.1} parent=1 // pred_check_branch
      %46 = sbr.rel (0) target = $region45
    $region44: #{resnet_forward.1} parent=1 // pred_region
      _
    $region45: #{resnet_forward.1} parent=1 // pred_fallthru
      _
    // Predicated region
    $region46: #{resnet_forward.1} parent=1 // pred_check
      _
    $region47: #{resnet_forward.1} parent=1 // pred_check_branch
      %48 = sbr.rel (0) target = $region49
    $region48: #{resnet_forward.1} parent=1 // pred_region
      _
    $region49: #{resnet_forward.1} parent=1 // pred_fallthru
      _
    // Predicated region
    $region50: #{resnet_forward.1} parent=1 // pred_check
      _
    $region51: #{resnet_forward.1} parent=1 // pred_check_branch
      %50 = sbr.rel (0) target = $region53
    $region52: #{resnet_forward.1} parent=1 // pred_region
      _
    $region53: #{resnet_forward.1} parent=1 // pred_fallthru
      _
    // Predicated region
    $region54: #{resnet_forward.1} parent=1 // pred_check
      _
    $region55: #{resnet_forward.1} parent=1 // pred_check_branch
      %52 = sbr.rel (0) target = $region57
    $region56: #{resnet_forward.1} parent=1 // pred_region
      _
    $region57: #{resnet_forward.1} parent=1 // pred_fallthru
      _
    // Predicated region
    $region58: #{resnet_forward.1} parent=1 // pred_check
      _
    $region59: #{resnet_forward.1} parent=1 // pred_check_branch
      %54 = sbr.rel (0) target = $region61
    $region60: #{resnet_forward.1} parent=1 // pred_region
      _
    $region61: #{resnet_forward.1} parent=1 // pred_fallthru
      _
    // Predicated region
    $region62: #{resnet_forward.1} parent=1 // pred_check
      _
    $region63: #{resnet_forward.1} parent=1 // pred_check_branch
      %56 = sbr.rel (0) target = $region65
    $region64: #{resnet_forward.1} parent=1 // pred_region
      _
    $region65: #{resnet_forward.1} parent=1 // pred_fallthru
      _
    // Predicated region
    $region66: #{resnet_forward.1} parent=1 // pred_check
      _
    $region67: #{resnet_forward.1} parent=1 // pred_check_branch
      %58 = sbr.rel (0) target = $region69
    $region68: #{resnet_forward.1} parent=1 // pred_region
      _
    $region69: #{resnet_forward.1} parent=1 // pred_fallthru
      _
    // Predicated region
    $region70: #{resnet_forward.1} parent=1 // pred_check
      _
    $region71: #{resnet_forward.1} parent=1 // pred_check_branch
      %60 = sbr.rel (0) target = $region73
    $region72: #{resnet_forward.1} parent=1 // pred_region
      _
    $region73: #{resnet_forward.1} parent=1 // pred_fallthru
      _
    // Predicated region
    $region74: #{resnet_forward.1} parent=1 // pred_check
      _
    $region75: #{resnet_forward.1} parent=1 // pred_check_branch
      %62 = sbr.rel (0) target = $region77
    $region76: #{resnet_forward.1} parent=1 // pred_region
      _
    $region77: #{resnet_forward.1} parent=1 // pred_fallthru
      _
    %v64 = vld [vmem:[%s0] sm:$0xf]
    %v65 = vld [vmem:[%s0 + $0x4] sm:$0xf]
    %v66 = vld [vmem:[%s0 + $0x8] sm:$0xf]
    %v67 = vld [vmem:[%s0 + $0xc] sm:$0xf]
    %v68 = vld [vmem:[%s0 + $0x10] sm:$0xf]
    %v69 = vld [vmem:[%s0 + $0x14] sm:$0xf]
    %v70 = vld [vmem:[%s0 + $0x18] sm:$0xf]
    %v71 = vld [vmem:[%s0 + $0x1c] sm:$0xf]
    %v72 = vld [vmem:[%s0 + $0x20] sm:$0xf]
    %v73 = vld [vmem:[%s0 + $0x24] sm:$0xf]
    %v74 = vld [vmem:[%s0 + $0x28] sm:$0xf]
    %v75 = vld [vmem:[%s0 + $0x2c] sm:$0xf]
    %v76 = vld [vmem:[%s0 + $0x30] sm:$0xf]
    %v77 = vld [vmem:[%s0 + $0x34] sm:$0xf]
    %v78 = vld [vmem:[%s0 + $0x38] sm:$0xf]
    %v79 = vld [vmem:[%s0 + $0x3c] sm:$0xf]
    %v80 = vld [vmem:[%s1] sm:$0xf]
    %v81 = vld [vmem:[%s1 + $0x4] sm:$0xf]
    %v82 = vld [vmem:[%s1 + $0x8] sm:$0xf]
    %v83 = vld [vmem:[%s1 + $0xc] sm:$0xf]
    %v84 = vld [vmem:[%s1 + $0x10] sm:$0xf]
    %v85 = vld [vmem:[%s1 + $0x14] sm:$0xf]
    %v86 = vld [vmem:[%s1 + $0x18] sm:$0xf]
    %v87 = vld [vmem:[%s1 + $0x1c] sm:$0xf]
    %v96 = vunpack.c.l.b16 %v80
    %v97 = vunpack.c.l.b16 %v81
    %v98 = vunpack.c.l.b16 %v82
    %v99 = vunpack.c.l.b16 %v83
    %v100 = vunpack.c.l.b16 %v84
    %v101 = vunpack.c.l.b16 %v85
    %v102 = vunpack.c.l.b16 %v86
    %v103 = vunpack.c.l.b16 %v87
    %v104 = vpack.c.b16 %v97, %v96
    %v105 = vpack.c.b16 %v99, %v98
    %v106 = vpack.c.b16 %v101, %v100
    %v107 = vpack.c.b16 %v103, %v102
    %v128 = vunpack.c.l.b16 %v64
    %v129 = vunpack.c.l.b16 %v65
    %v130 = vunpack.c.l.b16 %v66
    %v131 = vunpack.c.l.b16 %v67
    %v132 = vunpack.c.l.b16 %v68
    %v133 = vunpack.c.l.b16 %v69
    %v134 = vunpack.c.l.b16 %v70
    %v135 = vunpack.c.l.b16 %v71
    %v136 = vunpack.c.l.b16 %v72
    %v137 = vunpack.c.l.b16 %v73
    %v138 = vunpack.c.l.b16 %v74
    %v139 = vunpack.c.l.b16 %v75
    %v140 = vunpack.c.l.b16 %v76
    %v141 = vunpack.c.l.b16 %v77
    %v142 = vunpack.c.l.b16 %v78
    %v143 = vunpack.c.l.b16 %v79
    %v144 = vpack.c.b16 %v129, %v128
    %v145 = vpack.c.b16 %v131, %v130
    %v146 = vpack.c.b16 %v133, %v132
    %v147 = vpack.c.b16 %v135, %v134
    %v148 = vpack.c.b16 %v137, %v136
    %v149 = vpack.c.b16 %v139, %v138
    %v150 = vpack.c.b16 %v141, %v140
    %v151 = vpack.c.b16 %v143, %v142
    %160 = vmatprep.subr.bf16.mxu0 0
    %161 = vmatpush1.bf16.msra.mxu0 %v151
    %162 = vmatprep.subr.bf16.mxu0 0
    %163 = vmatpush1.bf16.msra.mxu0 %v150
    %164 = vmatprep.subr.bf16.mxu0 0
    %165 = vmatpush1.bf16.msra.mxu0 %v149
    %166 = vmatprep.subr.bf16.mxu0 0
    %167 = vmatpush1.bf16.msra.mxu0 %v148
    %168 = vmatprep.subr.bf16.mxu0 0
    %169 = vmatpush1.bf16.msra.mxu0 %v147
    %170 = vmatprep.subr.bf16.mxu0 0
    %171 = vmatpush1.bf16.msra.mxu0 %v146
    %172 = vmatprep.subr.bf16.mxu0 0
    %173 = vmatpush1.bf16.msra.mxu0 %v145
    %174 = vmatprep.subr.bf16.mxu0 0
    %175 = vmatpush1.bf16.msra.mxu0 %v144
    %176 = vmatprep.subr.bf16.mxu0 0
    %177 = vmatpush2.bf16.msra.mxu0 0
    %178 = vmatprep.subr.bf16.mxu0 0
    %179 = vmatpush2.bf16.msra.mxu0 0
    %180 = vmatprep.subr.bf16.mxu0 0
    %181 = vmatpush2.bf16.msra.mxu0 0
    %182 = vmatprep.subr.bf16.mxu0 0
    %183 = vmatpush2.bf16.msra.mxu0 0
    %184 = vmatprep.subr.bf16.mxu0 0
    %185 = vmatpush2.bf16.msra.mxu0 0
    %186 = vmatprep.subr.bf16.mxu0 0
    %187 = vmatpush2.bf16.msra.mxu0 0
    %188 = vmatprep.subr.bf16.mxu0 0
    %189 = vmatpush2.bf16.msra.mxu0 0
    %190 = vmatprep.subr.bf16.mxu0 0
    %191 = vmatpush2.bf16.msra.mxu0 0
    %192 = vmatprep.mubr.bf16.mxu0 0
    %193 = vmatmul.mubr.bf16.gmra.mxu0 %v104
    %v194 = vpop.f32.mrf.mxu0
    %v195 = vadd.f32 0.0, %v194
    %v196 = vpop.f32.mrf.mxu0
    %v197 = vpop.f32.mrf.mxu0
    %v198 = vadd.f32 0.0, %v197
    %v199 = vpop.f32.mrf.mxu0
    %200 = vmatprep.mubr.bf16.mxu0 0
    %201 = vmatmul.mubr.bf16.gmra.mxu0 %v105
    %v202 = vpop.f32.mrf.mxu0
    %v203 = vadd.f32 0.0, %v202
    %v204 = vpop.f32.mrf.mxu0
    %v205 = vpop.f32.mrf.mxu0
    %v206 = vadd.f32 0.0, %v205
    %v207 = vpop.f32.mrf.mxu0
    %208 = vmatprep.mubr.bf16.mxu0 0
    %209 = vmatmul.mubr.bf16.gmra.mxu0 %v106
    %v210 = vpop.f32.mrf.mxu0
    %v211 = vadd.f32 0.0, %v210
    %v212 = vpop.f32.mrf.mxu0
    %v213 = vpop.f32.mrf.mxu0
    %v214 = vadd.f32 0.0, %v213
    %v215 = vpop.f32.mrf.mxu0
    %216 = vmatprep.mubr.bf16.mxu0 0
    %217 = vmatmul.mubr.bf16.gmra.mxu0 %v107
    %v218 = vpop.f32.mrf.mxu0
    %v219 = vadd.f32 0.0, %v218
    %v220 = vpop.f32.mrf.mxu0
    %v221 = vpop.f32.mrf.mxu0
    %v222 = vadd.f32 0.0, %v221
    %v223 = vpop.f32.mrf.mxu0
    %224 = vdwg.mxu0
    %v225 = vpack.c.bf16 %v198, %v195
    %v226 = vpack.c.bf16 %v206, %v203
    %v227 = vpack.c.bf16 %v214, %v211
    %v228 = vpack.c.bf16 %v222, %v219
    %v229 = vld [vmem:[%s2] sm:$0xff]
    %v230 = vld [vmem:[%s2 + $0x8] sm:$0xf]
    %v231 = vld [vmem:[%s2 + $0xc] sm:$0xff]
    %v232 = vld [vmem:[%s2 + $0x14] sm:$0xf]
    %v233 = vld [vmem:[%s2 + $0x18] sm:$0xff]
    %v234 = vld [vmem:[%s2 + $0x20] sm:$0xf]
    %v235 = vld [vmem:[%s2 + $0x24] sm:$0xff]
    %v236 = vld [vmem:[%s2 + $0x2c] sm:$0xf]
    %v237 = vld [vmem:[%s2 + $0x30] sm:$0xff]
    %v238 = vld [vmem:[%s2 + $0x38] sm:$0xf]
    %v239 = vld [vmem:[%s2 + $0x3c] sm:$0xff]
    %v240 = vld [vmem:[%s2 + $0x44] sm:$0xf]
    %v241 = vld [vmem:[%s2 + $0x48] sm:$0xff]
    %v242 = vld [vmem:[%s2 + $0x50] sm:$0xf]
    %v243 = vld [vmem:[%s2 + $0x54] sm:$0xff]
    %v244 = vld [vmem:[%s2 + $0x5c] sm:$0xf]
    %s245 = scalar_lea.vmem %s1, 32
    %v246 = vld [vmem:[%s245] sm:$0xf]
    %v247 = vld [vmem:[%s245 + $0x4] sm:$0xf]
    %v248 = vld [vmem:[%s245 + $0x8] sm:$0xf]
    %v249 = vld [vmem:[%s245 + $0xc] sm:$0xf]
    %v250 = vld [vmem:[%s245 + $0x10] sm:$0xf]
    %v251 = vld [vmem:[%s245 + $0x14] sm:$0xf]
    %v252 = vld [vmem:[%s245 + $0x18] sm:$0xf]
    %v253 = vld [vmem:[%s245 + $0x1c] sm:$0xf]
    %v262 = vunpack.c.l.b16 %v246
    %v263 = vunpack.c.l.b16 %v247
    %v264 = vunpack.c.l.b16 %v248
    %v265 = vunpack.c.l.b16 %v249
    %v266 = vunpack.c.l.b16 %v250
    %v267 = vunpack.c.l.b16 %v251
    %v268 = vunpack.c.l.b16 %v252
    %v269 = vunpack.c.l.b16 %v253
    %v270 = vpack.c.b16 %v263, %v262
    %v271 = vpack.c.b16 %v265, %v264
    %v272 = vpack.c.b16 %v267, %v266
    %v273 = vpack.c.b16 %v269, %v268
    %278 = vmatprep.subr.bf16.mxu0 0
    %279 = vmatpush1.bf16.msra.mxu0 %v151
    %280 = vmatprep.subr.bf16.mxu0 0
    %281 = vmatpush1.bf16.msra.mxu0 %v150
    %282 = vmatprep.subr.bf16.mxu0 0
    %283 = vmatpush1.bf16.msra.mxu0 %v149
    %284 = vmatprep.subr.bf16.mxu0 0
    %285 = vmatpush1.bf16.msra.mxu0 %v148
    %286 = vmatprep.subr.bf16.mxu0 0
    %287 = vmatpush1.bf16.msra.mxu0 %v147
    %288 = vmatprep.subr.bf16.mxu0 0
    %289 = vmatpush1.bf16.msra.mxu0 %v146
    %290 = vmatprep.subr.bf16.mxu0 0
    %291 = vmatpush1.bf16.msra.mxu0 %v145
    %292 = vmatprep.subr.bf16.mxu0 0
    %293 = vmatpush1.bf16.msra.mxu0 %v144
    %294 = vmatprep.subr.bf16.mxu0 0
    %295 = vmatpush2.bf16.msra.mxu0 0
    %296 = vmatprep.subr.bf16.mxu0 0
    %297 = vmatpush2.bf16.msra.mxu0 0
    %298 = vmatprep.subr.bf16.mxu0 0
    %299 = vmatpush2.bf16.msra.mxu0 0
    %300 = vmatprep.subr.bf16.mxu0 0
    %301 = vmatpush2.bf16.msra.mxu0 0
    %302 = vmatprep.subr.bf16.mxu0 0
    %303 = vmatpush2.bf16.msra.mxu0 0
    %304 = vmatprep.subr.bf16.mxu0 0
    %305 = vmatpush2.bf16.msra.mxu0 0
    %306 = vmatprep.subr.bf16.mxu0 0
    %307 = vmatpush2.bf16.msra.mxu0 0
    %308 = vmatprep.subr.bf16.mxu0 0
    %309 = vmatpush2.bf16.msra.mxu0 0
    %310 = vmatprep.mubr.bf16.mxu0 0
    %311 = vmatmul.mubr.bf16.gmra.mxu0 %v270
    %v312 = vpop.f32.mrf.mxu0
    %v313 = vadd.f32 0.0, %v312
    %v314 = vpop.f32.mrf.mxu0
    %v315 = vpop.f32.mrf.mxu0
    %v316 = vadd.f32 0.0, %v315
    %v317 = vpop.f32.mrf.mxu0
    %318 = vmatprep.mubr.bf16.mxu0 0
    %319 = vmatmul.mubr.bf16.gmra.mxu0 %v271
    %v320 = vpop.f32.mrf.mxu0
    %v321 = vadd.f32 0.0, %v320
    %v322 = vpop.f32.mrf.mxu0
    %v323 = vpop.f32.mrf.mxu0
    %v324 = vadd.f32 0.0, %v323
    %v325 = vpop.f32.mrf.mxu0
    %326 = vmatprep.mubr.bf16.mxu0 0
    %327 = vmatmul.mubr.bf16.gmra.mxu0 %v272
    %v328 = vpop.f32.mrf.mxu0
    %v329 = vadd.f32 0.0, %v328
    %v330 = vpop.f32.mrf.mxu0
    %v331 = vpop.f32.mrf.mxu0
    %v332 = vadd.f32 0.0, %v331
    %v333 = vpop.f32.mrf.mxu0
    %334 = vmatprep.mubr.bf16.mxu0 0
    %335 = vmatmul.mubr.bf16.gmra.mxu0 %v273
    %v336 = vpop.f32.mrf.mxu0
    %v337 = vadd.f32 0.0, %v336
    %v338 = vpop.f32.mrf.mxu0
    %v339 = vpop.f32.mrf.mxu0
    %v340 = vadd.f32 0.0, %v339
    %v341 = vpop.f32.mrf.mxu0
    %342 = vdwg.mxu0
    %v343 = vpack.c.bf16 %v316, %v313
    %v344 = vpack.c.bf16 %v324, %v321
    %v345 = vpack.c.bf16 %v332, %v329
    %v346 = vpack.c.bf16 %v340, %v337
    %s347 = scalar_lea.vmem %s2, 96
    %v348 = vld [vmem:[%s347] sm:$0xff]
    %v349 = vld [vmem:[%s347 + $0x8] sm:$0xf]
    %v350 = vld [vmem:[%s347 + $0xc] sm:$0xff]
    %v351 = vld [vmem:[%s347 + $0x14] sm:$0xf]
    %v352 = vld [vmem:[%s347 + $0x18] sm:$0xff]
    %v353 = vld [vmem:[%s347 + $0x20] sm:$0xf]
    %v354 = vld [vmem:[%s347 + $0x24] sm:$0xff]
    %v355 = vld [vmem:[%s347 + $0x2c] sm:$0xf]
    %v356 = vld [vmem:[%s347 + $0x30] sm:$0xff]
    %v357 = vld [vmem:[%s347 + $0x38] sm:$0xf]
    %v358 = vld [vmem:[%s347 + $0x3c] sm:$0xff]
    %v359 = vld [vmem:[%s347 + $0x44] sm:$0xf]
    %v360 = vld [vmem:[%s347 + $0x48] sm:$0xff]
    %v361 = vld [vmem:[%s347 + $0x50] sm:$0xf]
    %v362 = vld [vmem:[%s347 + $0x54] sm:$0xff]
    %v363 = vld [vmem:[%s347 + $0x5c] sm:$0xf]
    %v380 = vunpack.c.l.b16 %v348
    %v381 = vunpack.c.h.b16 %v348
    %v382 = vunpack.c.l.b16 %v349
    %v383 = vunpack.c.l.b16 %v350
    %v384 = vunpack.c.h.b16 %v350
    %v385 = vunpack.c.l.b16 %v351
    %v386 = vunpack.c.l.b16 %v352
    %v387 = vunpack.c.h.b16 %v352
    %v388 = vunpack.c.l.b16 %v353
    %v389 = vunpack.c.l.b16 %v354
    %v390 = vunpack.c.h.b16 %v354
    %v391 = vunpack.c.l.b16 %v355
    %v392 = vunpack.c.l.b16 %v356
    %v393 = vunpack.c.h.b16 %v356
    %v394 = vunpack.c.l.b16 %v357
    %v395 = vunpack.c.l.b16 %v358
    %v396 = vunpack.c.h.b16 %v358
    %v397 = vunpack.c.l.b16 %v359
    %v398 = vunpack.c.l.b16 %v360
    %v399 = vunpack.c.h.b16 %v360
    %v400 = vunpack.c.l.b16 %v361
    %v401 = vunpack.c.l.b16 %v362
    %v402 = vunpack.c.h.b16 %v362
    %v403 = vunpack.c.l.b16 %v363
    %v404 = vpack.c.b16 %v383, %v380
    %v405 = vpack.c.b16 %v384, %v381
    %v406 = vpack.c.b16 %v385, %v382
    %v407 = vpack.c.b16 %v389, %v386
    %v408 = vpack.c.b16 %v390, %v387
    %v409 = vpack.c.b16 %v391, %v388
    %v410 = vpack.c.b16 %v395, %v392
    %v411 = vpack.c.b16 %v396, %v393
    %v412 = vpack.c.b16 %v397, %v394
    %v413 = vpack.c.b16 %v401, %v398
    %v414 = vpack.c.b16 %v402, %v399
    %v415 = vpack.c.b16 %v403, %v400
    %vm428 = vcmask 523264
    %v430 = vsel %vm428, %v343, 0
    %v433 = vsel %vm428, %v344, 0
    %v436 = vsel %vm428, %v345, 0
    %v439 = vsel %vm428, %v346, 0
    %441 = vmatprep.subr.bf16.mxu0 0
    %442 = vmatpush1.bf16.msra.mxu0 0
    %443 = vmatprep.subr.bf16.mxu0 0
    %444 = vmatpush1.bf16.msra.mxu0 0
    %445 = vmatprep.subr.bf16.mxu0 0
    %446 = vmatpush1.bf16.msra.mxu0 0
    %447 = vmatprep.subr.bf16.mxu0 0
    %448 = vmatpush1.bf16.msra.mxu0 0
    %449 = vmatprep.subr.bf16.mxu0 %v414
    %450 = vmatpush1.bf16.msra.mxu0 %v413
    %451 = vmatprep.subr.bf16.mxu0 %v411
    %452 = vmatpush1.bf16.msra.mxu0 %v410
    %453 = vmatprep.subr.bf16.mxu0 %v408
    %454 = vmatpush1.bf16.msra.mxu0 %v407
    %455 = vmatprep.subr.bf16.mxu0 %v405
    %456 = vmatpush1.bf16.msra.mxu0 %v404
    %457 = vmatprep.subr.bf16.mxu0 0
    %458 = vmatpush2.bf16.msra.mxu0 0
    %459 = vmatprep.subr.bf16.mxu0 0
    %460 = vmatpush2.bf16.msra.mxu0 0
    %461 = vmatprep.subr.bf16.mxu0 0
    %462 = vmatpush2.bf16.msra.mxu0 0
    %463 = vmatprep.subr.bf16.mxu0 0
    %464 = vmatpush2.bf16.msra.mxu0 0
    %465 = vmatprep.subr.bf16.mxu0 0
    %466 = vmatpush2.bf16.msra.mxu0 0
    %467 = vmatprep.subr.bf16.mxu0 0
    %468 = vmatpush2.bf16.msra.mxu0 0
    %469 = vmatprep.subr.bf16.mxu0 0
    %470 = vmatpush2.bf16.msra.mxu0 0
    %471 = vmatprep.subr.bf16.mxu0 0
    %472 = vmatpush2.bf16.msra.mxu0 0
    %473 = vmatprep.mubr.bf16.mxu0 0
    %474 = vmatmul.mubr.bf16.gmra.mxu0 %v430
    %v475 = vpop.f32.mrf.mxu0
    %v476 = vadd.f32 0.0, %v475
    %v477 = vpop.f32.mrf.mxu0
    %v478 = vadd.f32 0.0, %v477
    %v479 = vpop.f32.mrf.mxu0
    %v480 = vadd.f32 0.0, %v479
    %v481 = vpop.f32.mrf.mxu0
    %v482 = vadd.f32 0.0, %v481
    %483 = vmatprep.mubr.bf16.mxu0 0
    %484 = vmatmul.mubr.bf16.gmra.mxu0 %v433
    %v485 = vpop.f32.mrf.mxu0
    %v486 = vadd.f32 0.0, %v485
    %v487 = vpop.f32.mrf.mxu0
    %v488 = vadd.f32 0.0, %v487
    %v489 = vpop.f32.mrf.mxu0
    %v490 = vadd.f32 0.0, %v489
    %v491 = vpop.f32.mrf.mxu0
    %v492 = vadd.f32 0.0, %v491
    %493 = vmatprep.mubr.bf16.mxu0 0
    %494 = vmatmul.mubr.bf16.gmra.mxu0 %v436
    %v495 = vpop.f32.mrf.mxu0
    %v496 = vadd.f32 0.0, %v495
    %v497 = vpop.f32.mrf.mxu0
    %v498 = vadd.f32 0.0, %v497
    %v499 = vpop.f32.mrf.mxu0
    %v500 = vadd.f32 0.0, %v499
    %v501 = vpop.f32.mrf.mxu0
    %v502 = vadd.f32 0.0, %v501
    %503 = vmatprep.mubr.bf16.mxu0 0
    %504 = vmatmul.mubr.bf16.gmra.mxu0 %v439
    %v505 = vpop.f32.mrf.mxu0
    %v506 = vadd.f32 0.0, %v505
    %v507 = vpop.f32.mrf.mxu0
    %v508 = vadd.f32 0.0, %v507
    %v509 = vpop.f32.mrf.mxu0
    %v510 = vadd.f32 0.0, %v509
    %v511 = vpop.f32.mrf.mxu0
    %v512 = vadd.f32 0.0, %v511
    %513 = vdwg.mxu0
    %514 = vmatprep.subr.bf16.mxu0 0
    %515 = vmatpush1.bf16.msra.mxu0 0
    %516 = vmatprep.subr.bf16.mxu0 0
    %517 = vmatpush1.bf16.msra.mxu0 0
    %518 = vmatprep.subr.bf16.mxu0 0
    %519 = vmatpush1.bf16.msra.mxu0 0
    %520 = vmatprep.subr.bf16.mxu0 0
    %521 = vmatpush1.bf16.msra.mxu0 0
    %522 = vmatprep.subr.bf16.mxu0 0
    %523 = vmatpush1.bf16.msra.mxu0 %v415
    %524 = vmatprep.subr.bf16.mxu0 0
    %525 = vmatpush1.bf16.msra.mxu0 %v412
    %526 = vmatprep.subr.bf16.mxu0 0
    %527 = vmatpush1.bf16.msra.mxu0 %v409
    %528 = vmatprep.subr.bf16.mxu0 0
    %529 = vmatpush1.bf16.msra.mxu0 %v406
    %530 = vmatprep.subr.bf16.mxu0 0
    %531 = vmatpush2.bf16.msra.mxu0 0
    %532 = vmatprep.subr.bf16.mxu0 0
    %533 = vmatpush2.bf16.msra.mxu0 0
    %534 = vmatprep.subr.bf16.mxu0 0
    %535 = vmatpush2.bf16.msra.mxu0 0
    %536 = vmatprep.subr.bf16.mxu0 0
    %537 = vmatpush2.bf16.msra.mxu0 0
    %538 = vmatprep.subr.bf16.mxu0 0
    %539 = vmatpush2.bf16.msra.mxu0 0
    %540 = vmatprep.subr.bf16.mxu0 0
    %541 = vmatpush2.bf16.msra.mxu0 0
    %542 = vmatprep.subr.bf16.mxu0 0
    %543 = vmatpush2.bf16.msra.mxu0 0
    %544 = vmatprep.subr.bf16.mxu0 0
    %545 = vmatpush2.bf16.msra.mxu0 0
    %546 = vmatprep.mubr.bf16.mxu0 0
    %547 = vmatmul.mubr.bf16.gmra.mxu0 %v430
    %v548 = vpop.f32.mrf.mxu0
    %v549 = vadd.f32 0.0, %v548
    %v550 = vpop.f32.mrf.mxu0
    %v551 = vpop.f32.mrf.mxu0
    %v552 = vadd.f32 0.0, %v551
    %v553 = vpop.f32.mrf.mxu0
    %554 = vmatprep.mubr.bf16.mxu0 0
    %555 = vmatmul.mubr.bf16.gmra.mxu0 %v433
    %v556 = vpop.f32.mrf.mxu0
    %v557 = vadd.f32 0.0, %v556
    %v558 = vpop.f32.mrf.mxu0
    %v559 = vpop.f32.mrf.mxu0
    %v560 = vadd.f32 0.0, %v559
    %v561 = vpop.f32.mrf.mxu0
    %562 = vmatprep.mubr.bf16.mxu0 0
    %563 = vmatmul.mubr.bf16.gmra.mxu0 %v436
    %v564 = vpop.f32.mrf.mxu0
    %v565 = vadd.f32 0.0, %v564
    %v566 = vpop.f32.mrf.mxu0
    %v567 = vpop.f32.mrf.mxu0
    %v568 = vadd.f32 0.0, %v567
    %v569 = vpop.f32.mrf.mxu0
    %570 = vmatprep.mubr.bf16.mxu0 0
    %571 = vmatmul.mubr.bf16.gmra.mxu0 %v439
    %v572 = vpop.f32.mrf.mxu0
    %v573 = vadd.f32 0.0, %v572
    %v574 = vpop.f32.mrf.mxu0
    %v575 = vpop.f32.mrf.mxu0
    %v576 = vadd.f32 0.0, %v575
    %v577 = vpop.f32.mrf.mxu0
    %578 = vdwg.mxu0
    %v595 = vunpack.c.l.b16 %v229
    %v596 = vunpack.c.h.b16 %v229
    %v597 = vunpack.c.l.b16 %v230
    %v598 = vunpack.c.l.b16 %v231
    %v599 = vunpack.c.h.b16 %v231
    %v600 = vunpack.c.l.b16 %v232
    %v601 = vunpack.c.l.b16 %v233
    %v602 = vunpack.c.h.b16 %v233
    %v603 = vunpack.c.l.b16 %v234
    %v604 = vunpack.c.l.b16 %v235
    %v605 = vunpack.c.h.b16 %v235
    %v606 = vunpack.c.l.b16 %v236
    %v607 = vunpack.c.l.b16 %v237
    %v608 = vunpack.c.h.b16 %v237
    %v609 = vunpack.c.l.b16 %v238
    %v610 = vunpack.c.l.b16 %v239
    %v611 = vunpack.c.h.b16 %v239
    %v612 = vunpack.c.l.b16 %v240
    %v613 = vunpack.c.l.b16 %v241
    %v614 = vunpack.c.h.b16 %v241
    %v615 = vunpack.c.l.b16 %v242
    %v616 = vunpack.c.l.b16 %v243
    %v617 = vunpack.c.h.b16 %v243
    %v618 = vunpack.c.l.b16 %v244
    %v619 = vpack.c.b16 %v598, %v595
    %v620 = vpack.c.b16 %v599, %v596
    %v621 = vpack.c.b16 %v600, %v597
    %v622 = vpack.c.b16 %v604, %v601
    %v623 = vpack.c.b16 %v605, %v602
    %v624 = vpack.c.b16 %v606, %v603
    %v625 = vpack.c.b16 %v610, %v607
    %v626 = vpack.c.b16 %v611, %v608
    %v627 = vpack.c.b16 %v612, %v609
    %v628 = vpack.c.b16 %v616, %v613
    %v629 = vpack.c.b16 %v617, %v614
    %v630 = vpack.c.b16 %v618, %v615
    %v644 = vsel %vm428, %v225, 0
    %v647 = vsel %vm428, %v226, 0
    %v650 = vsel %vm428, %v227, 0
    %v653 = vsel %vm428, %v228, 0
    %655 = vmatprep.subr.bf16.mxu0 0
    %656 = vmatpush1.bf16.msra.mxu0 0
    %657 = vmatprep.subr.bf16.mxu0 0
    %658 = vmatpush1.bf16.msra.mxu0 0
    %659 = vmatprep.subr.bf16.mxu0 0
    %660 = vmatpush1.bf16.msra.mxu0 0
    %661 = vmatprep.subr.bf16.mxu0 0
    %662 = vmatpush1.bf16.msra.mxu0 0
    %663 = vmatprep.subr.bf16.mxu0 %v629
    %664 = vmatpush1.bf16.msra.mxu0 %v628
    %665 = vmatprep.subr.bf16.mxu0 %v626
    %666 = vmatpush1.bf16.msra.mxu0 %v625
    %667 = vmatprep.subr.bf16.mxu0 %v623
    %668 = vmatpush1.bf16.msra.mxu0 %v622
    %669 = vmatprep.subr.bf16.mxu0 %v620
    %670 = vmatpush1.bf16.msra.mxu0 %v619
    %671 = vmatprep.subr.bf16.mxu0 0
    %672 = vmatpush2.bf16.msra.mxu0 0
    %673 = vmatprep.subr.bf16.mxu0 0
    %674 = vmatpush2.bf16.msra.mxu0 0
    %675 = vmatprep.subr.bf16.mxu0 0
    %676 = vmatpush2.bf16.msra.mxu0 0
    %677 = vmatprep.subr.bf16.mxu0 0
    %678 = vmatpush2.bf16.msra.mxu0 0
    %679 = vmatprep.subr.bf16.mxu0 0
    %680 = vmatpush2.bf16.msra.mxu0 0
    %681 = vmatprep.subr.bf16.mxu0 0
    %682 = vmatpush2.bf16.msra.mxu0 0
    %683 = vmatprep.subr.bf16.mxu0 0
    %684 = vmatpush2.bf16.msra.mxu0 0
    %685 = vmatprep.subr.bf16.mxu0 0
    %686 = vmatpush2.bf16.msra.mxu0 0
    %687 = vmatprep.mubr.bf16.mxu0 0
    %688 = vmatmul.mubr.bf16.gmra.mxu0 %v644
    %v689 = vpop.f32.mrf.mxu0
    %v690 = vadd.f32 %v476, %v689
    %v691 = vpop.f32.mrf.mxu0
    %v692 = vadd.f32 %v478, %v691
    %v693 = vpop.f32.mrf.mxu0
    %v694 = vadd.f32 %v480, %v693
    %v695 = vpop.f32.mrf.mxu0
    %v696 = vadd.f32 %v482, %v695
    %697 = vmatprep.mubr.bf16.mxu0 0
    %698 = vmatmul.mubr.bf16.gmra.mxu0 %v647
    %v699 = vpop.f32.mrf.mxu0
    %v700 = vadd.f32 %v486, %v699
    %v701 = vpop.f32.mrf.mxu0
    %v702 = vadd.f32 %v488, %v701
    %v703 = vpop.f32.mrf.mxu0
    %v704 = vadd.f32 %v490, %v703
    %v705 = vpop.f32.mrf.mxu0
    %v706 = vadd.f32 %v492, %v705
    %707 = vmatprep.mubr.bf16.mxu0 0
    %708 = vmatmul.mubr.bf16.gmra.mxu0 %v650
    %v709 = vpop.f32.mrf.mxu0
    %v710 = vadd.f32 %v496, %v709
    %v711 = vpop.f32.mrf.mxu0
    %v712 = vadd.f32 %v498, %v711
    %v713 = vpop.f32.mrf.mxu0
    %v714 = vadd.f32 %v500, %v713
    %v715 = vpop.f32.mrf.mxu0
    %v716 = vadd.f32 %v502, %v715
    %717 = vmatprep.mubr.bf16.mxu0 0
    %718 = vmatmul.mubr.bf16.gmra.mxu0 %v653
    %v719 = vpop.f32.mrf.mxu0
    %v720 = vadd.f32 %v506, %v719
    %v721 = vpop.f32.mrf.mxu0
    %v722 = vadd.f32 %v508, %v721
    %v723 = vpop.f32.mrf.mxu0
    %v724 = vadd.f32 %v510, %v723
    %v725 = vpop.f32.mrf.mxu0
    %v726 = vadd.f32 %v512, %v725
    %727 = vdwg.mxu0
    %728 = vmatprep.subr.bf16.mxu0 0
    %729 = vmatpush1.bf16.msra.mxu0 0
    %730 = vmatprep.subr.bf16.mxu0 0
    %731 = vmatpush1.bf16.msra.mxu0 0
    %732 = vmatprep.subr.bf16.mxu0 0
    %733 = vmatpush1.bf16.msra.mxu0 0
    %734 = vmatprep.subr.bf16.mxu0 0
    %735 = vmatpush1.bf16.msra.mxu0 0
    %736 = vmatprep.subr.bf16.mxu0 0
    %737 = vmatpush1.bf16.msra.mxu0 %v630
    %738 = vmatprep.subr.bf16.mxu0 0
    %739 = vmatpush1.bf16.msra.mxu0 %v627
    %740 = vmatprep.subr.bf16.mxu0 0
    %741 = vmatpush1.bf16.msra.mxu0 %v624
    %742 = vmatprep.subr.bf16.mxu0 0
    %743 = vmatpush1.bf16.msra.mxu0 %v621
    %744 = vmatprep.subr.bf16.mxu0 0
    %745 = vmatpush2.bf16.msra.mxu0 0
    %746 = vmatprep.subr.bf16.mxu0 0
    %747 = vmatpush2.bf16.msra.mxu0 0
    %748 = vmatprep.subr.bf16.mxu0 0
    %749 = vmatpush2.bf16.msra.mxu0 0
    %750 = vmatprep.subr.bf16.mxu0 0
    %751 = vmatpush2.bf16.msra.mxu0 0
    %752 = vmatprep.subr.bf16.mxu0 0
    %753 = vmatpush2.bf16.msra.mxu0 0
    %754 = vmatprep.subr.bf16.mxu0 0
    %755 = vmatpush2.bf16.msra.mxu0 0
    %756 = vmatprep.subr.bf16.mxu0 0
    %757 = vmatpush2.bf16.msra.mxu0 0
    %758 = vmatprep.subr.bf16.mxu0 0
    %759 = vmatpush2.bf16.msra.mxu0 0
    %760 = vmatprep.mubr.bf16.mxu0 0
    %761 = vmatmul.mubr.bf16.gmra.mxu0 %v644
    %v762 = vpop.f32.mrf.mxu0
    %v763 = vadd.f32 %v549, %v762
    %v764 = vpop.f32.mrf.mxu0
    %v765 = vpop.f32.mrf.mxu0
    %v766 = vadd.f32 %v552, %v765
    %v767 = vpop.f32.mrf.mxu0
    %768 = vmatprep.mubr.bf16.mxu0 0
    %769 = vmatmul.mubr.bf16.gmra.mxu0 %v647
    %v770 = vpop.f32.mrf.mxu0
    %v771 = vadd.f32 %v557, %v770
    %v772 = vpop.f32.mrf.mxu0
    %v773 = vpop.f32.mrf.mxu0
    %v774 = vadd.f32 %v560, %v773
    %v775 = vpop.f32.mrf.mxu0
    %776 = vmatprep.mubr.bf16.mxu0 0
    %777 = vmatmul.mubr.bf16.gmra.mxu0 %v650
    %v778 = vpop.f32.mrf.mxu0
    %v779 = vadd.f32 %v565, %v778
    %v780 = vpop.f32.mrf.mxu0
    %v781 = vpop.f32.mrf.mxu0
    %v782 = vadd.f32 %v568, %v781
    %v783 = vpop.f32.mrf.mxu0
    %784 = vmatprep.mubr.bf16.mxu0 0
    %785 = vmatmul.mubr.bf16.gmra.mxu0 %v653
    %v786 = vpop.f32.mrf.mxu0
    %v787 = vadd.f32 %v573, %v786
    %v788 = vpop.f32.mrf.mxu0
    %v789 = vpop.f32.mrf.mxu0
    %v790 = vadd.f32 %v576, %v789
    %v791 = vpop.f32.mrf.mxu0
    %792 = vdwg.mxu0
    %s793 = scalar_lea.vmem %s1, 64
    %v794 = vld [vmem:[%s793] sm:$0xf]
    %v795 = vld [vmem:[%s793 + $0x4] sm:$0xf]
    %v796 = vld [vmem:[%s793 + $0x8] sm:$0xf]
    %v797 = vld [vmem:[%s793 + $0xc] sm:$0xf]
    %v798 = vld [vmem:[%s793 + $0x10] sm:$0xf]
    %v799 = vld [vmem:[%s793 + $0x14] sm:$0xf]
    %v800 = vld [vmem:[%s793 + $0x18] sm:$0xf]
    %v801 = vld [vmem:[%s793 + $0x1c] sm:$0xf]
    %v810 = vunpack.c.l.b16 %v794
    %v811 = vunpack.c.l.b16 %v795
    %v812 = vunpack.c.l.b16 %v796
    %v813 = vunpack.c.l.b16 %v797
    %v814 = vunpack.c.l.b16 %v798
    %v815 = vunpack.c.l.b16 %v799
    %v816 = vunpack.c.l.b16 %v800
    %v817 = vunpack.c.l.b16 %v801
    %v818 = vpack.c.b16 %v811, %v810
    %v819 = vpack.c.b16 %v813, %v812
    %v820 = vpack.c.b16 %v815, %v814
    %v821 = vpack.c.b16 %v817, %v816
    %826 = vmatprep.subr.bf16.mxu0 0
    %827 = vmatpush1.bf16.msra.mxu0 %v151
    %828 = vmatprep.subr.bf16.mxu0 0
    %829 = vmatpush1.bf16.msra.mxu0 %v150
    %830 = vmatprep.subr.bf16.mxu0 0
    %831 = vmatpush1.bf16.msra.mxu0 %v149
    %832 = vmatprep.subr.bf16.mxu0 0
    %833 = vmatpush1.bf16.msra.mxu0 %v148
    %834 = vmatprep.subr.bf16.mxu0 0
    %835 = vmatpush1.bf16.msra.mxu0 %v147
    %836 = vmatprep.subr.bf16.mxu0 0
    %837 = vmatpush1.bf16.msra.mxu0 %v146
    %838 = vmatprep.subr.bf16.mxu0 0
    %839 = vmatpush1.bf16.msra.mxu0 %v145
    %840 = vmatprep.subr.bf16.mxu0 0
    %841 = vmatpush1.bf16.msra.mxu0 %v144
    %842 = vmatprep.subr.bf16.mxu0 0
    %843 = vmatpush2.bf16.msra.mxu0 0
    %844 = vmatprep.subr.bf16.mxu0 0
    %845 = vmatpush2.bf16.msra.mxu0 0
    %846 = vmatprep.subr.bf16.mxu0 0
    %847 = vmatpush2.bf16.msra.mxu0 0
    %848 = vmatprep.subr.bf16.mxu0 0
    %849 = vmatpush2.bf16.msra.mxu0 0
    %850 = vmatprep.subr.bf16.mxu0 0
    %851 = vmatpush2.bf16.msra.mxu0 0
    %852 = vmatprep.subr.bf16.mxu0 0
    %853 = vmatpush2.bf16.msra.mxu0 0
    %854 = vmatprep.subr.bf16.mxu0 0
    %855 = vmatpush2.bf16.msra.mxu0 0
    %856 = vmatprep.subr.bf16.mxu0 0
    %857 = vmatpush2.bf16.msra.mxu0 0
    %858 = vmatprep.mubr.bf16.mxu0 0
    %859 = vmatmul.mubr.bf16.gmra.mxu0 %v818
    %v860 = vpop.f32.mrf.mxu0
    %v861 = vadd.f32 0.0, %v860
    %v862 = vpop.f32.mrf.mxu0
    %v863 = vpop.f32.mrf.mxu0
    %v864 = vadd.f32 0.0, %v863
    %v865 = vpop.f32.mrf.mxu0
    %866 = vmatprep.mubr.bf16.mxu0 0
    %867 = vmatmul.mubr.bf16.gmra.mxu0 %v819
    %v868 = vpop.f32.mrf.mxu0
    %v869 = vadd.f32 0.0, %v868
    %v870 = vpop.f32.mrf.mxu0
    %v871 = vpop.f32.mrf.mxu0
    %v872 = vadd.f32 0.0, %v871
    %v873 = vpop.f32.mrf.mxu0
    %874 = vmatprep.mubr.bf16.mxu0 0
    %875 = vmatmul.mubr.bf16.gmra.mxu0 %v820
    %v876 = vpop.f32.mrf.mxu0
    %v877 = vadd.f32 0.0, %v876
    %v878 = vpop.f32.mrf.mxu0
    %v879 = vpop.f32.mrf.mxu0
    %v880 = vadd.f32 0.0, %v879
    %v881 = vpop.f32.mrf.mxu0
    %882 = vmatprep.mubr.bf16.mxu0 0
    %883 = vmatmul.mubr.bf16.gmra.mxu0 %v821
    %v884 = vpop.f32.mrf.mxu0
    %v885 = vadd.f32 0.0, %v884
    %v886 = vpop.f32.mrf.mxu0
    %v887 = vpop.f32.mrf.mxu0
    %v888 = vadd.f32 0.0, %v887
    %v889 = vpop.f32.mrf.mxu0
    %890 = vdwg.mxu0
    %v891 = vpack.c.bf16 %v864, %v861
    %v892 = vpack.c.bf16 %v872, %v869
    %v893 = vpack.c.bf16 %v880, %v877
    %v894 = vpack.c.bf16 %v888, %v885
    %s895 = scalar_lea.vmem %s2, 192
    %v896 = vld [vmem:[%s895] sm:$0xff]
    %v897 = vld [vmem:[%s895 + $0x8] sm:$0xf]
    %v898 = vld [vmem:[%s895 + $0xc] sm:$0xff]
    %v899 = vld [vmem:[%s895 + $0x14] sm:$0xf]
    %v900 = vld [vmem:[%s895 + $0x18] sm:$0xff]
    %v901 = vld [vmem:[%s895 + $0x20] sm:$0xf]
    %v902 = vld [vmem:[%s895 + $0x24] sm:$0xff]
    %v903 = vld [vmem:[%s895 + $0x2c] sm:$0xf]
    %v904 = vld [vmem:[%s895 + $0x30] sm:$0xff]
    %v905 = vld [vmem:[%s895 + $0x38] sm:$0xf]
    %v906 = vld [vmem:[%s895 + $0x3c] sm:$0xff]
    %v907 = vld [vmem:[%s895 + $0x44] sm:$0xf]
    %v908 = vld [vmem:[%s895 + $0x48] sm:$0xff]
    %v909 = vld [vmem:[%s895 + $0x50] sm:$0xf]
    %v910 = vld [vmem:[%s895 + $0x54] sm:$0xff]
    %v911 = vld [vmem:[%s895 + $0x5c] sm:$0xf]
    %v928 = vunpack.c.l.b16 %v896
    %v929 = vunpack.c.h.b16 %v896
    %v930 = vunpack.c.l.b16 %v897
    %v931 = vunpack.c.l.b16 %v898
    %v932 = vunpack.c.h.b16 %v898
    %v933 = vunpack.c.l.b16 %v899
    %v934 = vunpack.c.l.b16 %v900
    %v935 = vunpack.c.h.b16 %v900
    %v936 = vunpack.c.l.b16 %v901
    %v937 = vunpack.c.l.b16 %v902
    %v938 = vunpack.c.h.b16 %v902
    %v939 = vunpack.c.l.b16 %v903
    %v940 = vunpack.c.l.b16 %v904
    %v941 = vunpack.c.h.b16 %v904
    %v942 = vunpack.c.l.b16 %v905
    %v943 = vunpack.c.l.b16 %v906
    %v944 = vunpack.c.h.b16 %v906
    %v945 = vunpack.c.l.b16 %v907
    %v946 = vunpack.c.l.b16 %v908
    %v947 = vunpack.c.h.b16 %v908
    %v948 = vunpack.c.l.b16 %v909
    %v949 = vunpack.c.l.b16 %v910
    %v950 = vunpack.c.h.b16 %v910
    %v951 = vunpack.c.l.b16 %v911
    %v952 = vpack.c.b16 %v931, %v928
    %v953 = vpack.c.b16 %v932, %v929
    %v954 = vpack.c.b16 %v933, %v930
    %v955 = vpack.c.b16 %v937, %v934
    %v956 = vpack.c.b16 %v938, %v935
    %v957 = vpack.c.b16 %v939, %v936
    %v958 = vpack.c.b16 %v943, %v940
    %v959 = vpack.c.b16 %v944, %v941
    %v960 = vpack.c.b16 %v945, %v942
    %v961 = vpack.c.b16 %v949, %v946
    %v962 = vpack.c.b16 %v950, %v947
    %v963 = vpack.c.b16 %v951, %v948
    %v977 = vsel %vm428, %v891, 0
    %v980 = vsel %vm428, %v892, 0
    %v983 = vsel %vm428, %v893, 0
    %v986 = vsel %vm428, %v894, 0
    %988 = vmatprep.subr.bf16.mxu0 0
    %989 = vmatpush1.bf16.msra.mxu0 0
    %990 = vmatprep.subr.bf16.mxu0 0
    %991 = vmatpush1.bf16.msra.mxu0 0
    %992 = vmatprep.subr.bf16.mxu0 0
    %993 = vmatpush1.bf16.msra.mxu0 0
    %994 = vmatprep.subr.bf16.mxu0 0
    %995 = vmatpush1.bf16.msra.mxu0 0
    %996 = vmatprep.subr.bf16.mxu0 %v962
    %997 = vmatpush1.bf16.msra.mxu0 %v961
    %998 = vmatprep.subr.bf16.mxu0 %v959
    %999 = vmatpush1.bf16.msra.mxu0 %v958
    %1000 = vmatprep.subr.bf16.mxu0 %v956
    %1001 = vmatpush1.bf16.msra.mxu0 %v955
    %1002 = vmatprep.subr.bf16.mxu0 %v953
    %1003 = vmatpush1.bf16.msra.mxu0 %v952
    %1004 = vmatprep.subr.bf16.mxu0 0
    %1005 = vmatpush2.bf16.msra.mxu0 0
    %1006 = vmatprep.subr.bf16.mxu0 0
    %1007 = vmatpush2.bf16.msra.mxu0 0
    %1008 = vmatprep.subr.bf16.mxu0 0
    %1009 = vmatpush2.bf16.msra.mxu0 0
    %1010 = vmatprep.subr.bf16.mxu0 0
    %1011 = vmatpush2.bf16.msra.mxu0 0
    %1012 = vmatprep.subr.bf16.mxu0 0
    %1013 = vmatpush2.bf16.msra.mxu0 0
    %1014 = vmatprep.subr.bf16.mxu0 0
    %1015 = vmatpush2.bf16.msra.mxu0 0
    %1016 = vmatprep.subr.bf16.mxu0 0
    %1017 = vmatpush2.bf16.msra.mxu0 0
    %1018 = vmatprep.subr.bf16.mxu0 0
    %1019 = vmatpush2.bf16.msra.mxu0 0
    %1020 = vmatprep.mubr.bf16.mxu0 0
    %1021 = vmatmul.mubr.bf16.gmra.mxu0 %v977
    %v1022 = vpop.f32.mrf.mxu0
    %v1023 = vadd.f32 0.0, %v1022
    %v1024 = vpop.f32.mrf.mxu0
    %v1025 = vadd.f32 0.0, %v1024
    %v1026 = vpop.f32.mrf.mxu0
    %v1027 = vadd.f32 0.0, %v1026
    %v1028 = vpop.f32.mrf.mxu0
    %v1029 = vadd.f32 0.0, %v1028
    %1030 = vmatprep.mubr.bf16.mxu0 0
    %1031 = vmatmul.mubr.bf16.gmra.mxu0 %v980
    %v1032 = vpop.f32.mrf.mxu0
    %v1033 = vadd.f32 0.0, %v1032
    %v1034 = vpop.f32.mrf.mxu0
    %v1035 = vadd.f32 0.0, %v1034
    %v1036 = vpop.f32.mrf.mxu0
    %v1037 = vadd.f32 0.0, %v1036
    %v1038 = vpop.f32.mrf.mxu0
    %v1039 = vadd.f32 0.0, %v1038
    %1040 = vmatprep.mubr.bf16.mxu0 0
    %1041 = vmatmul.mubr.bf16.gmra.mxu0 %v983
    %v1042 = vpop.f32.mrf.mxu0
    %v1043 = vadd.f32 0.0, %v1042
    %v1044 = vpop.f32.mrf.mxu0
    %v1045 = vadd.f32 0.0, %v1044
    %v1046 = vpop.f32.mrf.mxu0
    %v1047 = vadd.f32 0.0, %v1046
    %v1048 = vpop.f32.mrf.mxu0
    %v1049 = vadd.f32 0.0, %v1048
    %1050 = vmatprep.mubr.bf16.mxu0 0
    %1051 = vmatmul.mubr.bf16.gmra.mxu0 %v986
    %v1052 = vpop.f32.mrf.mxu0
    %v1053 = vadd.f32 0.0, %v1052
    %v1054 = vpop.f32.mrf.mxu0
    %v1055 = vadd.f32 0.0, %v1054
    %v1056 = vpop.f32.mrf.mxu0
    %v1057 = vadd.f32 0.0, %v1056
    %v1058 = vpop.f32.mrf.mxu0
    %v1059 = vadd.f32 0.0, %v1058
    %1060 = vdwg.mxu0
    %1061 = vmatprep.subr.bf16.mxu0 0
    %1062 = vmatpush1.bf16.msra.mxu0 0
    %1063 = vmatprep.subr.bf16.mxu0 0
    %1064 = vmatpush1.bf16.msra.mxu0 0
    %1065 = vmatprep.subr.bf16.mxu0 0
    %1066 = vmatpush1.bf16.msra.mxu0 0
    %1067 = vmatprep.subr.bf16.mxu0 0
    %1068 = vmatpush1.bf16.msra.mxu0 0
    %1069 = vmatprep.subr.bf16.mxu0 0
    %1070 = vmatpush1.bf16.msra.mxu0 %v963
    %1071 = vmatprep.subr.bf16.mxu0 0
    %1072 = vmatpush1.bf16.msra.mxu0 %v960
    %1073 = vmatprep.subr.bf16.mxu0 0
    %1074 = vmatpush1.bf16.msra.mxu0 %v957
    %1075 = vmatprep.subr.bf16.mxu0 0
    %1076 = vmatpush1.bf16.msra.mxu0 %v954
    %1077 = vmatprep.subr.bf16.mxu0 0
    %1078 = vmatpush2.bf16.msra.mxu0 0
    %1079 = vmatprep.subr.bf16.mxu0 0
    %1080 = vmatpush2.bf16.msra.mxu0 0
    %1081 = vmatprep.subr.bf16.mxu0 0
    %1082 = vmatpush2.bf16.msra.mxu0 0
    %1083 = vmatprep.subr.bf16.mxu0 0
    %1084 = vmatpush2.bf16.msra.mxu0 0
    %1085 = vmatprep.subr.bf16.mxu0 0
    %1086 = vmatpush2.bf16.msra.mxu0 0
    %1087 = vmatprep.subr.bf16.mxu0 0
    %1088 = vmatpush2.bf16.msra.mxu0 0
    %1089 = vmatprep.subr.bf16.mxu0 0
    %1090 = vmatpush2.bf16.msra.mxu0 0
    %1091 = vmatprep.subr.bf16.mxu0 0
    %1092 = vmatpush2.bf16.msra.mxu0 0
    %1093 = vmatprep.mubr.bf16.mxu0 0
    %1094 = vmatmul.mubr.bf16.gmra.mxu0 %v977
    %v1095 = vpop.f32.mrf.mxu0
    %v1096 = vadd.f32 0.0, %v1095
    %v1097 = vpop.f32.mrf.mxu0
    %v1098 = vpop.f32.mrf.mxu0
    %v1099 = vadd.f32 0.0, %v1098
    %v1100 = vpop.f32.mrf.mxu0
    %1101 = vmatprep.mubr.bf16.mxu0 0
    %1102 = vmatmul.mubr.bf16.gmra.mxu0 %v980
    %v1103 = vpop.f32.mrf.mxu0
    %v1104 = vadd.f32 0.0, %v1103
    %v1105 = vpop.f32.mrf.mxu0
    %v1106 = vpop.f32.mrf.mxu0
    %v1107 = vadd.f32 0.0, %v1106
    %v1108 = vpop.f32.mrf.mxu0
    %1109 = vmatprep.mubr.bf16.mxu0 0
    %1110 = vmatmul.mubr.bf16.gmra.mxu0 %v983
    %v1111 = vpop.f32.mrf.mxu0
    %v1112 = vadd.f32 0.0, %v1111
    %v1113 = vpop.f32.mrf.mxu0
    %v1114 = vpop.f32.mrf.mxu0
    %v1115 = vadd.f32 0.0, %v1114
    %v1116 = vpop.f32.mrf.mxu0
    %1117 = vmatprep.mubr.bf16.mxu0 0
    %1118 = vmatmul.mubr.bf16.gmra.mxu0 %v986
    %v1119 = vpop.f32.mrf.mxu0
    %v1120 = vadd.f32 0.0, %v1119
    %v1121 = vpop.f32.mrf.mxu0
    %v1122 = vpop.f32.mrf.mxu0
    %v1123 = vadd.f32 0.0, %v1122
    %v1124 = vpop.f32.mrf.mxu0
    %1125 = vdwg.mxu0
    %v1126 = vadd.f32 %v690, %v1023
    %v1127 = vadd.f32 %v692, %v1025
    %v1128 = vadd.f32 %v763, %v1096
    %v1129 = vadd.f32 %v694, %v1027
    %v1130 = vadd.f32 %v696, %v1029
    %v1131 = vadd.f32 %v766, %v1099
    %v1132 = vadd.f32 %v700, %v1033
    %v1133 = vadd.f32 %v702, %v1035
    %v1134 = vadd.f32 %v771, %v1104
    %v1135 = vadd.f32 %v704, %v1037
    %v1136 = vadd.f32 %v706, %v1039
    %v1137 = vadd.f32 %v774, %v1107
    %v1138 = vadd.f32 %v710, %v1043
    %v1139 = vadd.f32 %v712, %v1045
    %v1140 = vadd.f32 %v779, %v1112
    %v1141 = vadd.f32 %v714, %v1047
    %v1142 = vadd.f32 %v716, %v1049
    %v1143 = vadd.f32 %v782, %v1115
    %v1144 = vadd.f32 %v720, %v1053
    %v1145 = vadd.f32 %v722, %v1055
    %v1146 = vadd.f32 %v787, %v1120
    %v1147 = vadd.f32 %v724, %v1057
    %v1148 = vadd.f32 %v726, %v1059
    %v1149 = vadd.f32 %v790, %v1123
    %v1150 = vld [vmem:[%s3] sm:$0x7]
    %v1152 = vlaneseq
    %v1153 = vshrl.u32 %v1152, 7
    %v1154 = vsub.s32 0, %v1153
    %v1155 = vrot.slane %v1150, %v1154
    %v1156 = vlaneseq
    %v1157 = vshrl.u32 %v1156, 7
    %v1158 = vsub.s32 1, %v1157
    %v1159 = vrot.slane %v1150, %v1158
    %v1160 = vlaneseq
    %v1161 = vshrl.u32 %v1160, 7
    %v1162 = vsub.s32 2, %v1161
    %v1163 = vrot.slane %v1150, %v1162
    %v1167 = vadd.f32 %v1126, %v1155
    %v1168 = vadd.f32 %v1127, %v1159
    %v1169 = vadd.f32 %v1128, %v1163
    %v1170 = vadd.f32 %v1129, %v1155
    %v1171 = vadd.f32 %v1130, %v1159
    %v1172 = vadd.f32 %v1131, %v1163
    %v1173 = vadd.f32 %v1132, %v1155
    %v1174 = vadd.f32 %v1133, %v1159
    %v1175 = vadd.f32 %v1134, %v1163
    %v1176 = vadd.f32 %v1135, %v1155
    %v1177 = vadd.f32 %v1136, %v1159
    %v1178 = vadd.f32 %v1137, %v1163
    %v1179 = vadd.f32 %v1138, %v1155
    %v1180 = vadd.f32 %v1139, %v1159
    %v1181 = vadd.f32 %v1140, %v1163
    %v1182 = vadd.f32 %v1141, %v1155
    %v1183 = vadd.f32 %v1142, %v1159
    %v1184 = vadd.f32 %v1143, %v1163
    %v1185 = vadd.f32 %v1144, %v1155
    %v1186 = vadd.f32 %v1145, %v1159
    %v1187 = vadd.f32 %v1146, %v1163
    %v1188 = vadd.f32 %v1147, %v1155
    %v1189 = vadd.f32 %v1148, %v1159
    %v1190 = vadd.f32 %v1149, %v1163
    %v1191 = vmax.f32 %v1167, 0.0
    %v1192 = vmax.f32 %v1168, 0.0
    %v1193 = vmax.f32 %v1169, 0.0
    %v1194 = vmax.f32 %v1170, 0.0
    %v1195 = vmax.f32 %v1171, 0.0
    %v1196 = vmax.f32 %v1172, 0.0
    %v1197 = vmax.f32 %v1173, 0.0
    %v1198 = vmax.f32 %v1174, 0.0
    %v1199 = vmax.f32 %v1175, 0.0
    %v1200 = vmax.f32 %v1176, 0.0
    %v1201 = vmax.f32 %v1177, 0.0
    %v1202 = vmax.f32 %v1178, 0.0
    %v1203 = vmax.f32 %v1179, 0.0
    %v1204 = vmax.f32 %v1180, 0.0
    %v1205 = vmax.f32 %v1181, 0.0
    %v1206 = vmax.f32 %v1182, 0.0
    %v1207 = vmax.f32 %v1183, 0.0
    %v1208 = vmax.f32 %v1184, 0.0
    %v1209 = vmax.f32 %v1185, 0.0
    %v1210 = vmax.f32 %v1186, 0.0
    %v1211 = vmax.f32 %v1187, 0.0
    %v1212 = vmax.f32 %v1188, 0.0
    %v1213 = vmax.f32 %v1189, 0.0
    %v1214 = vmax.f32 %v1190, 0.0
    %v1215 = vpack.c.bf16 %v1194, %v1191
    %v1216 = vpack.c.bf16 %v1195, %v1192
    %v1217 = vpack.c.bf16 %v1196, %v1193
    %v1218 = vpack.c.bf16 %v1200, %v1197
    %v1219 = vpack.c.bf16 %v1201, %v1198
    %v1220 = vpack.c.bf16 %v1202, %v1199
    %v1221 = vpack.c.bf16 %v1206, %v1203
    %v1222 = vpack.c.bf16 %v1207, %v1204
    %v1223 = vpack.c.bf16 %v1208, %v1205
    %v1224 = vpack.c.bf16 %v1212, %v1209
    %v1225 = vpack.c.bf16 %v1213, %v1210
    %v1226 = vpack.c.bf16 %v1214, %v1211
    %v1227 = vld [vmem:[%s4] sm:$0xf]
    %v1228 = vld [vmem:[%s4 + $0x4] sm:$0xf]
    %v1229 = vld [vmem:[%s4 + $0x8] sm:$0xf]
    %v1230 = vld [vmem:[%s4 + $0xc] sm:$0xf]
    %v1235 = vunpack.c.l.b16 %v1227
    %v1236 = vunpack.c.l.b16 %v1228
    %v1237 = vunpack.c.l.b16 %v1229
    %v1238 = vunpack.c.l.b16 %v1230
    %v1239 = vpack.c.b16 %v1236, %v1235
    %v1240 = vpack.c.b16 %v1238, %v1237
    %v1242 = vsel %vm428, %v1239, 0
    %v1245 = vsel %vm428, %v1240, 0
    %1247 = vmatprep.subr.bf16.mxu0 0
    %1248 = vmatpush1.bf16.msra.mxu0 0
    %1249 = vmatprep.subr.bf16.mxu0 0
    %1250 = vmatpush1.bf16.msra.mxu0 0
    %1251 = vmatprep.subr.bf16.mxu0 0
    %1252 = vmatpush1.bf16.msra.mxu0 0
    %1253 = vmatprep.subr.bf16.mxu0 0
    %1254 = vmatpush1.bf16.msra.mxu0 0
    %1255 = vmatprep.subr.bf16.mxu0 %v1225
    %1256 = vmatpush1.bf16.msra.mxu0 %v1224
    %1257 = vmatprep.subr.bf16.mxu0 %v1222
    %1258 = vmatpush1.bf16.msra.mxu0 %v1221
    %1259 = vmatprep.subr.bf16.mxu0 %v1219
    %1260 = vmatpush1.bf16.msra.mxu0 %v1218
    %1261 = vmatprep.subr.bf16.mxu0 %v1216
    %1262 = vmatpush1.bf16.msra.mxu0 %v1215
    %1263 = vmatprep.subr.bf16.mxu0 0
    %1264 = vmatpush2.bf16.msra.mxu0 0
    %1265 = vmatprep.subr.bf16.mxu0 0
    %1266 = vmatpush2.bf16.msra.mxu0 0
    %1267 = vmatprep.subr.bf16.mxu0 0
    %1268 = vmatpush2.bf16.msra.mxu0 0
    %1269 = vmatprep.subr.bf16.mxu0 0
    %1270 = vmatpush2.bf16.msra.mxu0 0
    %1271 = vmatprep.subr.bf16.mxu0 0
    %1272 = vmatpush2.bf16.msra.mxu0 0
    %1273 = vmatprep.subr.bf16.mxu0 0
    %1274 = vmatpush2.bf16.msra.mxu0 0
    %1275 = vmatprep.subr.bf16.mxu0 0
    %1276 = vmatpush2.bf16.msra.mxu0 0
    %1277 = vmatprep.subr.bf16.mxu0 0
    %1278 = vmatpush2.bf16.msra.mxu0 0
    %1279 = vmatprep.mubr.bf16.mxu0 0
    %1280 = vmatmul.mubr.bf16.gmra.mxu0 %v1242
    %v1281 = vpop.f32.mrf.mxu0
    %v1282 = vadd.f32 0.0, %v1281
    %v1283 = vpop.f32.mrf.mxu0
    %v1284 = vadd.f32 0.0, %v1283
    %v1285 = vpop.f32.mrf.mxu0
    %v1286 = vadd.f32 0.0, %v1285
    %v1287 = vpop.f32.mrf.mxu0
    %v1288 = vadd.f32 0.0, %v1287
    %1289 = vmatprep.mubr.bf16.mxu0 0
    %1290 = vmatmul.mubr.bf16.gmra.mxu0 %v1245
    %v1291 = vpop.f32.mrf.mxu0
    %v1292 = vadd.f32 0.0, %v1291
    %v1293 = vpop.f32.mrf.mxu0
    %v1294 = vadd.f32 0.0, %v1293
    %v1295 = vpop.f32.mrf.mxu0
    %v1296 = vadd.f32 0.0, %v1295
    %v1297 = vpop.f32.mrf.mxu0
    %v1298 = vadd.f32 0.0, %v1297
    %1299 = vdwg.mxu0
    %1300 = vmatprep.subr.bf16.mxu0 0
    %1301 = vmatpush1.bf16.msra.mxu0 0
    %1302 = vmatprep.subr.bf16.mxu0 0
    %1303 = vmatpush1.bf16.msra.mxu0 0
    %1304 = vmatprep.subr.bf16.mxu0 0
    %1305 = vmatpush1.bf16.msra.mxu0 0
    %1306 = vmatprep.subr.bf16.mxu0 0
    %1307 = vmatpush1.bf16.msra.mxu0 0
    %1308 = vmatprep.subr.bf16.mxu0 0
    %1309 = vmatpush1.bf16.msra.mxu0 %v1226
    %1310 = vmatprep.subr.bf16.mxu0 0
    %1311 = vmatpush1.bf16.msra.mxu0 %v1223
    %1312 = vmatprep.subr.bf16.mxu0 0
    %1313 = vmatpush1.bf16.msra.mxu0 %v1220
    %1314 = vmatprep.subr.bf16.mxu0 0
    %1315 = vmatpush1.bf16.msra.mxu0 %v1217
    %1316 = vmatprep.subr.bf16.mxu0 0
    %1317 = vmatpush2.bf16.msra.mxu0 0
    %1318 = vmatprep.subr.bf16.mxu0 0
    %1319 = vmatpush2.bf16.msra.mxu0 0
    %1320 = vmatprep.subr.bf16.mxu0 0
    %1321 = vmatpush2.bf16.msra.mxu0 0
    %1322 = vmatprep.subr.bf16.mxu0 0
    %1323 = vmatpush2.bf16.msra.mxu0 0
    %1324 = vmatprep.subr.bf16.mxu0 0
    %1325 = vmatpush2.bf16.msra.mxu0 0
    %1326 = vmatprep.subr.bf16.mxu0 0
    %1327 = vmatpush2.bf16.msra.mxu0 0
    %1328 = vmatprep.subr.bf16.mxu0 0
    %1329 = vmatpush2.bf16.msra.mxu0 0
    %1330 = vmatprep.subr.bf16.mxu0 0
    %1331 = vmatpush2.bf16.msra.mxu0 0
    %1332 = vmatprep.mubr.bf16.mxu0 0
    %1333 = vmatmul.mubr.bf16.gmra.mxu0 %v1242
    %v1334 = vpop.f32.mrf.mxu0
    %v1335 = vadd.f32 0.0, %v1334
    %v1336 = vpop.f32.mrf.mxu0
    %v1337 = vpop.f32.mrf.mxu0
    %v1338 = vadd.f32 0.0, %v1337
    %v1339 = vpop.f32.mrf.mxu0
    %1340 = vmatprep.mubr.bf16.mxu0 0
    %1341 = vmatmul.mubr.bf16.gmra.mxu0 %v1245
    %v1342 = vpop.f32.mrf.mxu0
    %v1343 = vadd.f32 0.0, %v1342
    %v1344 = vpop.f32.mrf.mxu0
    %v1345 = vpop.f32.mrf.mxu0
    %v1346 = vadd.f32 0.0, %v1345
    %v1347 = vpop.f32.mrf.mxu0
    %1348 = vdwg.mxu0
    %v1349 = vpack.c.bf16 %v1286, %v1282
    %v1350 = vpack.c.bf16 %v1288, %v1284
    %v1351 = vpack.c.bf16 %v1338, %v1335
    %v1352 = vpack.c.bf16 %v1296, %v1292
    %v1353 = vpack.c.bf16 %v1298, %v1294
    %v1354 = vpack.c.bf16 %v1346, %v1343
    %v1355 = vld [vmem:[%s5] sm:$0xff]
    %v1356 = vld [vmem:[%s5 + $0x8] sm:$0xff]
    %v1357 = vld [vmem:[%s5 + $0x10] sm:$0xff]
    %v1358 = vld [vmem:[%s5 + $0x18] sm:$0xff]
    %v1359 = vld [vmem:[%s5 + $0x20] sm:$0xff]
    %v1360 = vld [vmem:[%s5 + $0x28] sm:$0xff]
    %v1361 = vld [vmem:[%s5 + $0x30] sm:$0xff]
    %v1362 = vld [vmem:[%s5 + $0x38] sm:$0xff]
    %v1363 = vld [vmem:[%s5 + $0x40] sm:$0xff]
    %v1364 = vld [vmem:[%s5 + $0x48] sm:$0xff]
    %v1365 = vld [vmem:[%s5 + $0x50] sm:$0xff]
    %v1366 = vld [vmem:[%s5 + $0x58] sm:$0xff]
    %v1367 = vld [vmem:[%s5 + $0x60] sm:$0xff]
    %v1368 = vld [vmem:[%s5 + $0x68] sm:$0xff]
    %v1369 = vld [vmem:[%s5 + $0x70] sm:$0xff]
    %v1370 = vld [vmem:[%s5 + $0x78] sm:$0xff]
    %v1371 = vld [vmem:[%s5 + $0x80] sm:$0xff]
    %v1372 = vld [vmem:[%s5 + $0x88] sm:$0xff]
    %v1373 = vld [vmem:[%s5 + $0x90] sm:$0xff]
    %v1374 = vld [vmem:[%s5 + $0x98] sm:$0xff]
    %v1375 = vld [vmem:[%s5 + $0xa0] sm:$0xff]
    %v1376 = vld [vmem:[%s5 + $0xa8] sm:$0xff]
    %v1377 = vld [vmem:[%s5 + $0xb0] sm:$0xff]
    %v1378 = vld [vmem:[%s5 + $0xb8] sm:$0xff]
    %v1379 = vld [vmem:[%s5 + $0xc0] sm:$0xff]
    %v1380 = vld [vmem:[%s5 + $0xc8] sm:$0xff]
    %v1381 = vld [vmem:[%s5 + $0xd0] sm:$0xff]
    %v1382 = vld [vmem:[%s5 + $0xd8] sm:$0xff]
    %v1383 = vld [vmem:[%s5 + $0xe0] sm:$0xff]
    %v1384 = vld [vmem:[%s5 + $0xe8] sm:$0xff]
    %v1385 = vld [vmem:[%s5 + $0xf0] sm:$0xff]
    %v1386 = vld [vmem:[%s5 + $0xf8] sm:$0xff]
    %v1387 = vld [vmem:[%s5 + $0x100] sm:$0xff]
    %v1388 = vld [vmem:[%s5 + $0x108] sm:$0xff]
    %v1389 = vld [vmem:[%s5 + $0x110] sm:$0xff]
    %v1390 = vld [vmem:[%s5 + $0x118] sm:$0xff]
    %v1391 = vld [vmem:[%s5 + $0x120] sm:$0xff]
    %v1392 = vld [vmem:[%s5 + $0x128] sm:$0xff]
    %v1393 = vld [vmem:[%s5 + $0x130] sm:$0xff]
    %v1394 = vld [vmem:[%s5 + $0x138] sm:$0xff]
    %v1395 = vld [vmem:[%s5 + $0x140] sm:$0xff]
    %v1396 = vld [vmem:[%s5 + $0x148] sm:$0xff]
    %v1397 = vld [vmem:[%s5 + $0x150] sm:$0xff]
    %v1398 = vld [vmem:[%s5 + $0x158] sm:$0xff]
    %v1399 = vld [vmem:[%s5 + $0x160] sm:$0xff]
    %v1400 = vld [vmem:[%s5 + $0x168] sm:$0xff]
    %v1401 = vld [vmem:[%s5 + $0x170] sm:$0xff]
    %v1402 = vld [vmem:[%s5 + $0x178] sm:$0xff]
    %s1403 = scalar_lea.vmem %s4, 16
    %v1404 = vld [vmem:[%s1403] sm:$0xf]
    %v1405 = vld [vmem:[%s1403 + $0x4] sm:$0xf]
    %v1406 = vld [vmem:[%s1403 + $0x8] sm:$0xf]
    %v1407 = vld [vmem:[%s1403 + $0xc] sm:$0xf]
    %v1412 = vunpack.c.l.b16 %v1404
    %v1413 = vunpack.c.l.b16 %v1405
    %v1414 = vunpack.c.l.b16 %v1406
    %v1415 = vunpack.c.l.b16 %v1407
    %v1416 = vpack.c.b16 %v1413, %v1412
    %v1417 = vpack.c.b16 %v1415, %v1414
    %v1419 = vsel %vm428, %v1416, 0
    %v1422 = vsel %vm428, %v1417, 0
    %1424 = vmatprep.subr.bf16.mxu0 0
    %1425 = vmatpush1.bf16.msra.mxu0 0
    %1426 = vmatprep.subr.bf16.mxu0 0
    %1427 = vmatpush1.bf16.msra.mxu0 0
    %1428 = vmatprep.subr.bf16.mxu0 0
    %1429 = vmatpush1.bf16.msra.mxu0 0
    %1430 = vmatprep.subr.bf16.mxu0 0
    %1431 = vmatpush1.bf16.msra.mxu0 0
    %1432 = vmatprep.subr.bf16.mxu0 %v1225
    %1433 = vmatpush1.bf16.msra.mxu0 %v1224
    %1434 = vmatprep.subr.bf16.mxu0 %v1222
    %1435 = vmatpush1.bf16.msra.mxu0 %v1221
    %1436 = vmatprep.subr.bf16.mxu0 %v1219
    %1437 = vmatpush1.bf16.msra.mxu0 %v1218
    %1438 = vmatprep.subr.bf16.mxu0 %v1216
    %1439 = vmatpush1.bf16.msra.mxu0 %v1215
    %1440 = vmatprep.subr.bf16.mxu0 0
    %1441 = vmatpush2.bf16.msra.mxu0 0
    %1442 = vmatprep.subr.bf16.mxu0 0
    %1443 = vmatpush2.bf16.msra.mxu0 0
    %1444 = vmatprep.subr.bf16.mxu0 0
    %1445 = vmatpush2.bf16.msra.mxu0 0
    %1446 = vmatprep.subr.bf16.mxu0 0
    %1447 = vmatpush2.bf16.msra.mxu0 0
    %1448 = vmatprep.subr.bf16.mxu0 0
    %1449 = vmatpush2.bf16.msra.mxu0 0
    %1450 = vmatprep.subr.bf16.mxu0 0
    %1451 = vmatpush2.bf16.msra.mxu0 0
    %1452 = vmatprep.subr.bf16.mxu0 0
    %1453 = vmatpush2.bf16.msra.mxu0 0
    %1454 = vmatprep.subr.bf16.mxu0 0
    %1455 = vmatpush2.bf16.msra.mxu0 0
    %1456 = vmatprep.mubr.bf16.mxu0 0
    %1457 = vmatmul.mubr.bf16.gmra.mxu0 %v1419
    %v1458 = vpop.f32.mrf.mxu0
    %v1459 = vadd.f32 0.0, %v1458
    %v1460 = vpop.f32.mrf.mxu0
    %v1461 = vadd.f32 0.0, %v1460
    %v1462 = vpop.f32.mrf.mxu0
    %v1463 = vadd.f32 0.0, %v1462
    %v1464 = vpop.f32.mrf.mxu0
    %v1465 = vadd.f32 0.0, %v1464
    %1466 = vmatprep.mubr.bf16.mxu0 0
    %1467 = vmatmul.mubr.bf16.gmra.mxu0 %v1422
    %v1468 = vpop.f32.mrf.mxu0
    %v1469 = vadd.f32 0.0, %v1468
    %v1470 = vpop.f32.mrf.mxu0
    %v1471 = vadd.f32 0.0, %v1470
    %v1472 = vpop.f32.mrf.mxu0
    %v1473 = vadd.f32 0.0, %v1472
    %v1474 = vpop.f32.mrf.mxu0
    %v1475 = vadd.f32 0.0, %v1474
    %1476 = vdwg.mxu0
    %1477 = vmatprep.subr.bf16.mxu0 0
    %1478 = vmatpush1.bf16.msra.mxu0 0
    %1479 = vmatprep.subr.bf16.mxu0 0
    %1480 = vmatpush1.bf16.msra.mxu0 0
    %1481 = vmatprep.subr.bf16.mxu0 0
    %1482 = vmatpush1.bf16.msra.mxu0 0
    %1483 = vmatprep.subr.bf16.mxu0 0
    %1484 = vmatpush1.bf16.msra.mxu0 0
    %1485 = vmatprep.subr.bf16.mxu0 0
    %1486 = vmatpush1.bf16.msra.mxu0 %v1226
    %1487 = vmatprep.subr.bf16.mxu0 0
    %1488 = vmatpush1.bf16.msra.mxu0 %v1223
    %1489 = vmatprep.subr.bf16.mxu0 0
    %1490 = vmatpush1.bf16.msra.mxu0 %v1220
    %1491 = vmatprep.subr.bf16.mxu0 0
    %1492 = vmatpush1.bf16.msra.mxu0 %v1217
    %1493 = vmatprep.subr.bf16.mxu0 0
    %1494 = vmatpush2.bf16.msra.mxu0 0
    %1495 = vmatprep.subr.bf16.mxu0 0
    %1496 = vmatpush2.bf16.msra.mxu0 0
    %1497 = vmatprep.subr.bf16.mxu0 0
    %1498 = vmatpush2.bf16.msra.mxu0 0
    %1499 = vmatprep.subr.bf16.mxu0 0
    %1500 = vmatpush2.bf16.msra.mxu0 0
    %1501 = vmatprep.subr.bf16.mxu0 0
    %1502 = vmatpush2.bf16.msra.mxu0 0
    %1503 = vmatprep.subr.bf16.mxu0 0
    %1504 = vmatpush2.bf16.msra.mxu0 0
    %1505 = vmatprep.subr.bf16.mxu0 0
    %1506 = vmatpush2.bf16.msra.mxu0 0
    %1507 = vmatprep.subr.bf16.mxu0 0
    %1508 = vmatpush2.bf16.msra.mxu0 0
    %1509 = vmatprep.mubr.bf16.mxu0 0
    %1510 = vmatmul.mubr.bf16.gmra.mxu0 %v1419
    %v1511 = vpop.f32.mrf.mxu0
    %v1512 = vadd.f32 0.0, %v1511
    %v1513 = vpop.f32.mrf.mxu0
    %v1514 = vpop.f32.mrf.mxu0
    %v1515 = vadd.f32 0.0, %v1514
    %v1516 = vpop.f32.mrf.mxu0
    %1517 = vmatprep.mubr.bf16.mxu0 0
    %1518 = vmatmul.mubr.bf16.gmra.mxu0 %v1422
    %v1519 = vpop.f32.mrf.mxu0
    %v1520 = vadd.f32 0.0, %v1519
    %v1521 = vpop.f32.mrf.mxu0
    %v1522 = vpop.f32.mrf.mxu0
    %v1523 = vadd.f32 0.0, %v1522
    %v1524 = vpop.f32.mrf.mxu0
    %1525 = vdwg.mxu0
    %v1526 = vpack.c.bf16 %v1463, %v1459
    %v1527 = vpack.c.bf16 %v1465, %v1461
    %v1528 = vpack.c.bf16 %v1515, %v1512
    %v1529 = vpack.c.bf16 %v1473, %v1469
    %v1530 = vpack.c.bf16 %v1475, %v1471
    %v1531 = vpack.c.bf16 %v1523, %v1520
    %s1532 = scalar_lea.vmem %s5, 384
    %v1533 = vld [vmem:[%s1532] sm:$0xff]
    %v1534 = vld [vmem:[%s1532 + $0x8] sm:$0xff]
    %v1535 = vld [vmem:[%s1532 + $0x10] sm:$0xff]
    %v1536 = vld [vmem:[%s1532 + $0x18] sm:$0xff]
    %v1537 = vld [vmem:[%s1532 + $0x20] sm:$0xff]
    %v1538 = vld [vmem:[%s1532 + $0x28] sm:$0xff]
    %v1539 = vld [vmem:[%s1532 + $0x30] sm:$0xff]
    %v1540 = vld [vmem:[%s1532 + $0x38] sm:$0xff]
    %v1541 = vld [vmem:[%s1532 + $0x40] sm:$0xff]
    %v1542 = vld [vmem:[%s1532 + $0x48] sm:$0xff]
    %v1543 = vld [vmem:[%s1532 + $0x50] sm:$0xff]
    %v1544 = vld [vmem:[%s1532 + $0x58] sm:$0xff]
    %v1545 = vld [vmem:[%s1532 + $0x60] sm:$0xff]
    %v1546 = vld [vmem:[%s1532 + $0x68] sm:$0xff]
    %v1547 = vld [vmem:[%s1532 + $0x70] sm:$0xff]
    %v1548 = vld [vmem:[%s1532 + $0x78] sm:$0xff]
    %v1549 = vld [vmem:[%s1532 + $0x80] sm:$0xff]
    %v1550 = vld [vmem:[%s1532 + $0x88] sm:$0xff]
    %v1551 = vld [vmem:[%s1532 + $0x90] sm:$0xff]
    %v1552 = vld [vmem:[%s1532 + $0x98] sm:$0xff]
    %v1553 = vld [vmem:[%s1532 + $0xa0] sm:$0xff]
    %v1554 = vld [vmem:[%s1532 + $0xa8] sm:$0xff]
    %v1555 = vld [vmem:[%s1532 + $0xb0] sm:$0xff]
    %v1556 = vld [vmem:[%s1532 + $0xb8] sm:$0xff]
    %v1557 = vld [vmem:[%s1532 + $0xc0] sm:$0xff]
    %v1558 = vld [vmem:[%s1532 + $0xc8] sm:$0xff]
    %v1559 = vld [vmem:[%s1532 + $0xd0] sm:$0xff]
    %v1560 = vld [vmem:[%s1532 + $0xd8] sm:$0xff]
    %v1561 = vld [vmem:[%s1532 + $0xe0] sm:$0xff]
    %v1562 = vld [vmem:[%s1532 + $0xe8] sm:$0xff]
    %v1563 = vld [vmem:[%s1532 + $0xf0] sm:$0xff]
    %v1564 = vld [vmem:[%s1532 + $0xf8] sm:$0xff]
    %v1565 = vld [vmem:[%s1532 + $0x100] sm:$0xff]
    %v1566 = vld [vmem:[%s1532 + $0x108] sm:$0xff]
    %v1567 = vld [vmem:[%s1532 + $0x110] sm:$0xff]
    %v1568 = vld [vmem:[%s1532 + $0x118] sm:$0xff]
    %v1569 = vld [vmem:[%s1532 + $0x120] sm:$0xff]
    %v1570 = vld [vmem:[%s1532 + $0x128] sm:$0xff]
    %v1571 = vld [vmem:[%s1532 + $0x130] sm:$0xff]
    %v1572 = vld [vmem:[%s1532 + $0x138] sm:$0xff]
    %v1573 = vld [vmem:[%s1532 + $0x140] sm:$0xff]
    %v1574 = vld [vmem:[%s1532 + $0x148] sm:$0xff]
    %v1575 = vld [vmem:[%s1532 + $0x150] sm:$0xff]
    %v1576 = vld [vmem:[%s1532 + $0x158] sm:$0xff]
    %v1577 = vld [vmem:[%s1532 + $0x160] sm:$0xff]
    %v1578 = vld [vmem:[%s1532 + $0x168] sm:$0xff]
    %v1579 = vld [vmem:[%s1532 + $0x170] sm:$0xff]
    %v1580 = vld [vmem:[%s1532 + $0x178] sm:$0xff]
    %v1629 = vunpack.c.l.b16 %v1533
    %v1630 = vunpack.c.h.b16 %v1533
    %v1631 = vunpack.c.l.b16 %v1534
    %v1632 = vunpack.c.h.b16 %v1534
    %v1633 = vunpack.c.l.b16 %v1535
    %v1634 = vunpack.c.h.b16 %v1535
    %v1635 = vunpack.c.l.b16 %v1536
    %v1636 = vunpack.c.h.b16 %v1536
    %v1637 = vunpack.c.l.b16 %v1537
    %v1638 = vunpack.c.h.b16 %v1537
    %v1639 = vunpack.c.l.b16 %v1538
    %v1640 = vunpack.c.h.b16 %v1538
    %v1641 = vunpack.c.l.b16 %v1539
    %v1642 = vunpack.c.h.b16 %v1539
    %v1643 = vunpack.c.l.b16 %v1540
    %v1644 = vunpack.c.h.b16 %v1540
    %v1645 = vunpack.c.l.b16 %v1541
    %v1646 = vunpack.c.h.b16 %v1541
    %v1647 = vunpack.c.l.b16 %v1542
    %v1648 = vunpack.c.h.b16 %v1542
    %v1649 = vunpack.c.l.b16 %v1543
    %v1650 = vunpack.c.h.b16 %v1543
    %v1651 = vunpack.c.l.b16 %v1544
    %v1652 = vunpack.c.h.b16 %v1544
    %v1653 = vunpack.c.l.b16 %v1545
    %v1654 = vunpack.c.h.b16 %v1545
    %v1655 = vunpack.c.l.b16 %v1546
    %v1656 = vunpack.c.h.b16 %v1546
    %v1657 = vunpack.c.l.b16 %v1547
    %v1658 = vunpack.c.h.b16 %v1547
    %v1659 = vunpack.c.l.b16 %v1548
    %v1660 = vunpack.c.h.b16 %v1548
    %v1661 = vunpack.c.l.b16 %v1549
    %v1662 = vunpack.c.h.b16 %v1549
    %v1663 = vunpack.c.l.b16 %v1550
    %v1664 = vunpack.c.h.b16 %v1550
    %v1665 = vunpack.c.l.b16 %v1551
    %v1666 = vunpack.c.h.b16 %v1551
    %v1667 = vunpack.c.l.b16 %v1552
    %v1668 = vunpack.c.h.b16 %v1552
    %v1669 = vunpack.c.l.b16 %v1553
    %v1670 = vunpack.c.h.b16 %v1553
    %v1671 = vunpack.c.l.b16 %v1554
    %v1672 = vunpack.c.h.b16 %v1554
    %v1673 = vunpack.c.l.b16 %v1555
    %v1674 = vunpack.c.h.b16 %v1555
    %v1675 = vunpack.c.l.b16 %v1556
    %v1676 = vunpack.c.h.b16 %v1556
    %v1677 = vunpack.c.l.b16 %v1557
    %v1678 = vunpack.c.h.b16 %v1557
    %v1679 = vunpack.c.l.b16 %v1558
    %v1680 = vunpack.c.h.b16 %v1558
    %v1681 = vunpack.c.l.b16 %v1559
    %v1682 = vunpack.c.h.b16 %v1559
    %v1683 = vunpack.c.l.b16 %v1560
    %v1684 = vunpack.c.h.b16 %v1560
    %v1685 = vunpack.c.l.b16 %v1561
    %v1686 = vunpack.c.h.b16 %v1561
    %v1687 = vunpack.c.l.b16 %v1562
    %v1688 = vunpack.c.h.b16 %v1562
    %v1689 = vunpack.c.l.b16 %v1563
    %v1690 = vunpack.c.h.b16 %v1563
    %v1691 = vunpack.c.l.b16 %v1564
    %v1692 = vunpack.c.h.b16 %v1564
    %v1693 = vunpack.c.l.b16 %v1565
    %v1694 = vunpack.c.h.b16 %v1565
    %v1695 = vunpack.c.l.b16 %v1566
    %v1696 = vunpack.c.h.b16 %v1566
    %v1697 = vunpack.c.l.b16 %v1567
    %v1698 = vunpack.c.h.b16 %v1567
    %v1699 = vunpack.c.l.b16 %v1568
    %v1700 = vunpack.c.h.b16 %v1568
    %v1701 = vunpack.c.l.b16 %v1569
    %v1702 = vunpack.c.h.b16 %v1569
    %v1703 = vunpack.c.l.b16 %v1570
    %v1704 = vunpack.c.h.b16 %v1570
    %v1705 = vunpack.c.l.b16 %v1571
    %v1706 = vunpack.c.h.b16 %v1571
    %v1707 = vunpack.c.l.b16 %v1572
    %v1708 = vunpack.c.h.b16 %v1572
    %v1709 = vunpack.c.l.b16 %v1573
    %v1710 = vunpack.c.h.b16 %v1573
    %v1711 = vunpack.c.l.b16 %v1574
    %v1712 = vunpack.c.h.b16 %v1574
    %v1713 = vunpack.c.l.b16 %v1575
    %v1714 = vunpack.c.h.b16 %v1575
    %v1715 = vunpack.c.l.b16 %v1576
    %v1716 = vunpack.c.h.b16 %v1576
    %v1717 = vunpack.c.l.b16 %v1577
    %v1718 = vunpack.c.h.b16 %v1577
    %v1719 = vunpack.c.l.b16 %v1578
    %v1720 = vunpack.c.h.b16 %v1578
    %v1721 = vunpack.c.l.b16 %v1579
    %v1722 = vunpack.c.h.b16 %v1579
    %v1723 = vunpack.c.l.b16 %v1580
    %v1724 = vunpack.c.h.b16 %v1580
    %v1725 = vpack.c.b16 %v1631, %v1629
    %v1726 = vpack.c.b16 %v1632, %v1630
    %v1727 = vpack.c.b16 %v1635, %v1633
    %v1728 = vpack.c.b16 %v1636, %v1634
    %v1729 = vpack.c.b16 %v1639, %v1637
    %v1730 = vpack.c.b16 %v1640, %v1638
    %v1731 = vpack.c.b16 %v1643, %v1641
    %v1732 = vpack.c.b16 %v1644, %v1642
    %v1733 = vpack.c.b16 %v1647, %v1645
    %v1734 = vpack.c.b16 %v1648, %v1646
    %v1735 = vpack.c.b16 %v1651, %v1649
    %v1736 = vpack.c.b16 %v1652, %v1650
    %v1737 = vpack.c.b16 %v1655, %v1653
    %v1738 = vpack.c.b16 %v1656, %v1654
    %v1739 = vpack.c.b16 %v1659, %v1657
    %v1740 = vpack.c.b16 %v1660, %v1658
    %v1741 = vpack.c.b16 %v1663, %v1661
    %v1742 = vpack.c.b16 %v1664, %v1662
    %v1743 = vpack.c.b16 %v1667, %v1665
    %v1744 = vpack.c.b16 %v1668, %v1666
    %v1745 = vpack.c.b16 %v1671, %v1669
    %v1746 = vpack.c.b16 %v1672, %v1670
    %v1747 = vpack.c.b16 %v1675, %v1673
    %v1748 = vpack.c.b16 %v1676, %v1674
    %v1749 = vpack.c.b16 %v1679, %v1677
    %v1750 = vpack.c.b16 %v1680, %v1678
    %v1751 = vpack.c.b16 %v1683, %v1681
    %v1752 = vpack.c.b16 %v1684, %v1682
    %v1753 = vpack.c.b16 %v1687, %v1685
    %v1754 = vpack.c.b16 %v1688, %v1686
    %v1755 = vpack.c.b16 %v1691, %v1689
    %v1756 = vpack.c.b16 %v1692, %v1690
    %v1757 = vpack.c.b16 %v1695, %v1693
    %v1758 = vpack.c.b16 %v1696, %v1694
    %v1759 = vpack.c.b16 %v1699, %v1697
    %v1760 = vpack.c.b16 %v1700, %v1698
    %v1761 = vpack.c.b16 %v1703, %v1701
    %v1762 = vpack.c.b16 %v1704, %v1702
    %v1763 = vpack.c.b16 %v1707, %v1705
    %v1764 = vpack.c.b16 %v1708, %v1706
    %v1765 = vpack.c.b16 %v1711, %v1709
    %v1766 = vpack.c.b16 %v1712, %v1710
    %v1767 = vpack.c.b16 %v1715, %v1713
    %v1768 = vpack.c.b16 %v1716, %v1714
    %v1769 = vpack.c.b16 %v1719, %v1717
    %v1770 = vpack.c.b16 %v1720, %v1718
    %v1771 = vpack.c.b16 %v1723, %v1721
    %v1772 = vpack.c.b16 %v1724, %v1722
    %1821 = vmatprep.subr.bf16.mxu0 %v1740
    %1822 = vmatpush1.bf16.msra.mxu0 %v1739
    %1823 = vmatprep.subr.bf16.mxu0 %v1738
    %1824 = vmatpush1.bf16.msra.mxu0 %v1737
    %1825 = vmatprep.subr.bf16.mxu0 %v1736
    %1826 = vmatpush1.bf16.msra.mxu0 %v1735
    %1827 = vmatprep.subr.bf16.mxu0 %v1734
    %1828 = vmatpush1.bf16.msra.mxu0 %v1733
    %1829 = vmatprep.subr.bf16.mxu0 %v1732
    %1830 = vmatpush1.bf16.msra.mxu0 %v1731
    %1831 = vmatprep.subr.bf16.mxu0 %v1730
    %1832 = vmatpush1.bf16.msra.mxu0 %v1729
    %1833 = vmatprep.subr.bf16.mxu0 %v1728
    %1834 = vmatpush1.bf16.msra.mxu0 %v1727
    %1835 = vmatprep.subr.bf16.mxu0 %v1726
    %1836 = vmatpush1.bf16.msra.mxu0 %v1725
    %1837 = vmatprep.subr.bf16.mxu0 %v1756
    %1838 = vmatpush2.bf16.msra.mxu0 %v1755
    %1839 = vmatprep.subr.bf16.mxu0 %v1754
    %1840 = vmatpush2.bf16.msra.mxu0 %v1753
    %1841 = vmatprep.subr.bf16.mxu0 %v1752
    %1842 = vmatpush2.bf16.msra.mxu0 %v1751
    %1843 = vmatprep.subr.bf16.mxu0 %v1750
    %1844 = vmatpush2.bf16.msra.mxu0 %v1749
    %1845 = vmatprep.subr.bf16.mxu0 %v1748
    %1846 = vmatpush2.bf16.msra.mxu0 %v1747
    %1847 = vmatprep.subr.bf16.mxu0 %v1746
    %1848 = vmatpush2.bf16.msra.mxu0 %v1745
    %1849 = vmatprep.subr.bf16.mxu0 %v1744
    %1850 = vmatpush2.bf16.msra.mxu0 %v1743
    %1851 = vmatprep.subr.bf16.mxu0 %v1742
    %1852 = vmatpush2.bf16.msra.mxu0 %v1741
    %1853 = vmatprep.mubr.bf16.mxu0 %v1527
    %1854 = vmatmul.mubr.bf16.gmra.mxu0 %v1526
    %v1855 = vpop.f32.mrf.mxu0
    %v1856 = vadd.f32 0.0, %v1855
    %v1857 = vpop.f32.mrf.mxu0
    %v1858 = vadd.f32 0.0, %v1857
    %v1859 = vpop.f32.mrf.mxu0
    %v1860 = vadd.f32 0.0, %v1859
    %v1861 = vpop.f32.mrf.mxu0
    %v1862 = vadd.f32 0.0, %v1861
    %1863 = vmatprep.mubr.bf16.mxu0 %v1530
    %1864 = vmatmul.mubr.bf16.gmra.mxu0 %v1529
    %v1865 = vpop.f32.mrf.mxu0
    %v1866 = vadd.f32 0.0, %v1865
    %v1867 = vpop.f32.mrf.mxu0
    %v1868 = vadd.f32 0.0, %v1867
    %v1869 = vpop.f32.mrf.mxu0
    %v1870 = vadd.f32 0.0, %v1869
    %v1871 = vpop.f32.mrf.mxu0
    %v1872 = vadd.f32 0.0, %v1871
    %1873 = vdwg.mxu0
    %1874 = vmatprep.subr.bf16.mxu0 %v1772
    %1875 = vmatpush1.bf16.msra.mxu0 %v1771
    %1876 = vmatprep.subr.bf16.mxu0 %v1770
    %1877 = vmatpush1.bf16.msra.mxu0 %v1769
    %1878 = vmatprep.subr.bf16.mxu0 %v1768
    %1879 = vmatpush1.bf16.msra.mxu0 %v1767
    %1880 = vmatprep.subr.bf16.mxu0 %v1766
    %1881 = vmatpush1.bf16.msra.mxu0 %v1765
    %1882 = vmatprep.subr.bf16.mxu0 %v1764
    %1883 = vmatpush1.bf16.msra.mxu0 %v1763
    %1884 = vmatprep.subr.bf16.mxu0 %v1762
    %1885 = vmatpush1.bf16.msra.mxu0 %v1761
    %1886 = vmatprep.subr.bf16.mxu0 %v1760
    %1887 = vmatpush1.bf16.msra.mxu0 %v1759
    %1888 = vmatprep.subr.bf16.mxu0 %v1758
    %1889 = vmatpush1.bf16.msra.mxu0 %v1757
    %1890 = vmatprep.subr.bf16.mxu0 0
    %1891 = vmatpush2.bf16.msra.mxu0 0
    %1892 = vmatprep.subr.bf16.mxu0 0
    %1893 = vmatpush2.bf16.msra.mxu0 0
    %1894 = vmatprep.subr.bf16.mxu0 0
    %1895 = vmatpush2.bf16.msra.mxu0 0
    %1896 = vmatprep.subr.bf16.mxu0 0
    %1897 = vmatpush2.bf16.msra.mxu0 0
    %1898 = vmatprep.subr.bf16.mxu0 0
    %1899 = vmatpush2.bf16.msra.mxu0 0
    %1900 = vmatprep.subr.bf16.mxu0 0
    %1901 = vmatpush2.bf16.msra.mxu0 0
    %1902 = vmatprep.subr.bf16.mxu0 0
    %1903 = vmatpush2.bf16.msra.mxu0 0
    %1904 = vmatprep.subr.bf16.mxu0 0
    %1905 = vmatpush2.bf16.msra.mxu0 0
    %1906 = vmatprep.mubr.bf16.mxu0 0
    %1907 = vmatmul.mubr.bf16.gmra.mxu0 %v1528
    %v1908 = vpop.f32.mrf.mxu0
    %v1909 = vadd.f32 %v1856, %v1908
    %v1910 = vpop.f32.mrf.mxu0
    %v1911 = vadd.f32 %v1858, %v1910
    %v1912 = vpop.f32.mrf.mxu0
    %v1913 = vadd.f32 %v1860, %v1912
    %v1914 = vpop.f32.mrf.mxu0
    %v1915 = vadd.f32 %v1862, %v1914
    %1916 = vmatprep.mubr.bf16.mxu0 0
    %1917 = vmatmul.mubr.bf16.gmra.mxu0 %v1531
    %v1918 = vpop.f32.mrf.mxu0
    %v1919 = vadd.f32 %v1866, %v1918
    %v1920 = vpop.f32.mrf.mxu0
    %v1921 = vadd.f32 %v1868, %v1920
    %v1922 = vpop.f32.mrf.mxu0
    %v1923 = vadd.f32 %v1870, %v1922
    %v1924 = vpop.f32.mrf.mxu0
    %v1925 = vadd.f32 %v1872, %v1924
    %1926 = vdwg.mxu0
    %v1975 = vunpack.c.l.b16 %v1355
    %v1976 = vunpack.c.h.b16 %v1355
    %v1977 = vunpack.c.l.b16 %v1356
    %v1978 = vunpack.c.h.b16 %v1356
    %v1979 = vunpack.c.l.b16 %v1357
    %v1980 = vunpack.c.h.b16 %v1357
    %v1981 = vunpack.c.l.b16 %v1358
    %v1982 = vunpack.c.h.b16 %v1358
    %v1983 = vunpack.c.l.b16 %v1359
    %v1984 = vunpack.c.h.b16 %v1359
    %v1985 = vunpack.c.l.b16 %v1360
    %v1986 = vunpack.c.h.b16 %v1360
    %v1987 = vunpack.c.l.b16 %v1361
    %v1988 = vunpack.c.h.b16 %v1361
    %v1989 = vunpack.c.l.b16 %v1362
    %v1990 = vunpack.c.h.b16 %v1362
    %v1991 = vunpack.c.l.b16 %v1363
    %v1992 = vunpack.c.h.b16 %v1363
    %v1993 = vunpack.c.l.b16 %v1364
    %v1994 = vunpack.c.h.b16 %v1364
    %v1995 = vunpack.c.l.b16 %v1365
    %v1996 = vunpack.c.h.b16 %v1365
    %v1997 = vunpack.c.l.b16 %v1366
    %v1998 = vunpack.c.h.b16 %v1366
    %v1999 = vunpack.c.l.b16 %v1367
    %v2000 = vunpack.c.h.b16 %v1367
    %v2001 = vunpack.c.l.b16 %v1368
    %v2002 = vunpack.c.h.b16 %v1368
    %v2003 = vunpack.c.l.b16 %v1369
    %v2004 = vunpack.c.h.b16 %v1369
    %v2005 = vunpack.c.l.b16 %v1370
    %v2006 = vunpack.c.h.b16 %v1370
    %v2007 = vunpack.c.l.b16 %v1371
    %v2008 = vunpack.c.h.b16 %v1371
    %v2009 = vunpack.c.l.b16 %v1372
    %v2010 = vunpack.c.h.b16 %v1372
    %v2011 = vunpack.c.l.b16 %v1373
    %v2012 = vunpack.c.h.b16 %v1373
    %v2013 = vunpack.c.l.b16 %v1374
    %v2014 = vunpack.c.h.b16 %v1374
    %v2015 = vunpack.c.l.b16 %v1375
    %v2016 = vunpack.c.h.b16 %v1375
    %v2017 = vunpack.c.l.b16 %v1376
    %v2018 = vunpack.c.h.b16 %v1376
    %v2019 = vunpack.c.l.b16 %v1377
    %v2020 = vunpack.c.h.b16 %v1377
    %v2021 = vunpack.c.l.b16 %v1378
    %v2022 = vunpack.c.h.b16 %v1378
    %v2023 = vunpack.c.l.b16 %v1379
    %v2024 = vunpack.c.h.b16 %v1379
    %v2025 = vunpack.c.l.b16 %v1380
    %v2026 = vunpack.c.h.b16 %v1380
    %v2027 = vunpack.c.l.b16 %v1381
    %v2028 = vunpack.c.h.b16 %v1381
    %v2029 = vunpack.c.l.b16 %v1382
    %v2030 = vunpack.c.h.b16 %v1382
    %v2031 = vunpack.c.l.b16 %v1383
    %v2032 = vunpack.c.h.b16 %v1383
    %v2033 = vunpack.c.l.b16 %v1384
    %v2034 = vunpack.c.h.b16 %v1384
    %v2035 = vunpack.c.l.b16 %v1385
    %v2036 = vunpack.c.h.b16 %v1385
    %v2037 = vunpack.c.l.b16 %v1386
    %v2038 = vunpack.c.h.b16 %v1386
    %v2039 = vunpack.c.l.b16 %v1387
    %v2040 = vunpack.c.h.b16 %v1387
    %v2041 = vunpack.c.l.b16 %v1388
    %v2042 = vunpack.c.h.b16 %v1388
    %v2043 = vunpack.c.l.b16 %v1389
    %v2044 = vunpack.c.h.b16 %v1389
    %v2045 = vunpack.c.l.b16 %v1390
    %v2046 = vunpack.c.h.b16 %v1390
    %v2047 = vunpack.c.l.b16 %v1391
    %v2048 = vunpack.c.h.b16 %v1391
    %v2049 = vunpack.c.l.b16 %v1392
    %v2050 = vunpack.c.h.b16 %v1392
    %v2051 = vunpack.c.l.b16 %v1393
    %v2052 = vunpack.c.h.b16 %v1393
    %v2053 = vunpack.c.l.b16 %v1394
    %v2054 = vunpack.c.h.b16 %v1394
    %v2055 = vunpack.c.l.b16 %v1395
    %v2056 = vunpack.c.h.b16 %v1395
    %v2057 = vunpack.c.l.b16 %v1396
    %v2058 = vunpack.c.h.b16 %v1396
    %v2059 = vunpack.c.l.b16 %v1397
    %v2060 = vunpack.c.h.b16 %v1397
    %v2061 = vunpack.c.l.b16 %v1398
    %v2062 = vunpack.c.h.b16 %v1398
    %v2063 = vunpack.c.l.b16 %v1399
    %v2064 = vunpack.c.h.b16 %v1399
    %v2065 = vunpack.c.l.b16 %v1400
    %v2066 = vunpack.c.h.b16 %v1400
    %v2067 = vunpack.c.l.b16 %v1401
    %v2068 = vunpack.c.h.b16 %v1401
    %v2069 = vunpack.c.l.b16 %v1402
    %v2070 = vunpack.c.h.b16 %v1402
    %v2071 = vpack.c.b16 %v1977, %v1975
    %v2072 = vpack.c.b16 %v1978, %v1976
    %v2073 = vpack.c.b16 %v1981, %v1979
    %v2074 = vpack.c.b16 %v1982, %v1980
    %v2075 = vpack.c.b16 %v1985, %v1983
    %v2076 = vpack.c.b16 %v1986, %v1984
    %v2077 = vpack.c.b16 %v1989, %v1987
    %v2078 = vpack.c.b16 %v1990, %v1988
    %v2079 = vpack.c.b16 %v1993, %v1991
    %v2080 = vpack.c.b16 %v1994, %v1992
    %v2081 = vpack.c.b16 %v1997, %v1995
    %v2082 = vpack.c.b16 %v1998, %v1996
    %v2083 = vpack.c.b16 %v2001, %v1999
    %v2084 = vpack.c.b16 %v2002, %v2000
    %v2085 = vpack.c.b16 %v2005, %v2003
    %v2086 = vpack.c.b16 %v2006, %v2004
    %v2087 = vpack.c.b16 %v2009, %v2007
    %v2088 = vpack.c.b16 %v2010, %v2008
    %v2089 = vpack.c.b16 %v2013, %v2011
    %v2090 = vpack.c.b16 %v2014, %v2012
    %v2091 = vpack.c.b16 %v2017, %v2015
    %v2092 = vpack.c.b16 %v2018, %v2016
    %v2093 = vpack.c.b16 %v2021, %v2019
    %v2094 = vpack.c.b16 %v2022, %v2020
    %v2095 = vpack.c.b16 %v2025, %v2023
    %v2096 = vpack.c.b16 %v2026, %v2024
    %v2097 = vpack.c.b16 %v2029, %v2027
    %v2098 = vpack.c.b16 %v2030, %v2028
    %v2099 = vpack.c.b16 %v2033, %v2031
    %v2100 = vpack.c.b16 %v2034, %v2032
    %v2101 = vpack.c.b16 %v2037, %v2035
    %v2102 = vpack.c.b16 %v2038, %v2036
    %v2103 = vpack.c.b16 %v2041, %v2039
    %v2104 = vpack.c.b16 %v2042, %v2040
    %v2105 = vpack.c.b16 %v2045, %v2043
    %v2106 = vpack.c.b16 %v2046, %v2044
    %v2107 = vpack.c.b16 %v2049, %v2047
    %v2108 = vpack.c.b16 %v2050, %v2048
    %v2109 = vpack.c.b16 %v2053, %v2051
    %v2110 = vpack.c.b16 %v2054, %v2052
    %v2111 = vpack.c.b16 %v2057, %v2055
    %v2112 = vpack.c.b16 %v2058, %v2056
    %v2113 = vpack.c.b16 %v2061, %v2059
    %v2114 = vpack.c.b16 %v2062, %v2060
    %v2115 = vpack.c.b16 %v2065, %v2063
    %v2116 = vpack.c.b16 %v2066, %v2064
    %v2117 = vpack.c.b16 %v2069, %v2067
    %v2118 = vpack.c.b16 %v2070, %v2068
    %2167 = vmatprep.subr.bf16.mxu0 %v2086
    %2168 = vmatpush1.bf16.msra.mxu0 %v2085
    %2169 = vmatprep.subr.bf16.mxu0 %v2084
    %2170 = vmatpush1.bf16.msra.mxu0 %v2083
    %2171 = vmatprep.subr.bf16.mxu0 %v2082
    %2172 = vmatpush1.bf16.msra.mxu0 %v2081
    %2173 = vmatprep.subr.bf16.mxu0 %v2080
    %2174 = vmatpush1.bf16.msra.mxu0 %v2079
    %2175 = vmatprep.subr.bf16.mxu0 %v2078
    %2176 = vmatpush1.bf16.msra.mxu0 %v2077
    %2177 = vmatprep.subr.bf16.mxu0 %v2076
    %2178 = vmatpush1.bf16.msra.mxu0 %v2075
    %2179 = vmatprep.subr.bf16.mxu0 %v2074
    %2180 = vmatpush1.bf16.msra.mxu0 %v2073
    %2181 = vmatprep.subr.bf16.mxu0 %v2072
    %2182 = vmatpush1.bf16.msra.mxu0 %v2071
    %2183 = vmatprep.subr.bf16.mxu0 %v2102
    %2184 = vmatpush2.bf16.msra.mxu0 %v2101
    %2185 = vmatprep.subr.bf16.mxu0 %v2100
    %2186 = vmatpush2.bf16.msra.mxu0 %v2099
    %2187 = vmatprep.subr.bf16.mxu0 %v2098
    %2188 = vmatpush2.bf16.msra.mxu0 %v2097
    %2189 = vmatprep.subr.bf16.mxu0 %v2096
    %2190 = vmatpush2.bf16.msra.mxu0 %v2095
    %2191 = vmatprep.subr.bf16.mxu0 %v2094
    %2192 = vmatpush2.bf16.msra.mxu0 %v2093
    %2193 = vmatprep.subr.bf16.mxu0 %v2092
    %2194 = vmatpush2.bf16.msra.mxu0 %v2091
    %2195 = vmatprep.subr.bf16.mxu0 %v2090
    %2196 = vmatpush2.bf16.msra.mxu0 %v2089
    %2197 = vmatprep.subr.bf16.mxu0 %v2088
    %2198 = vmatpush2.bf16.msra.mxu0 %v2087
    %2199 = vmatprep.mubr.bf16.mxu0 %v1350
    %2200 = vmatmul.mubr.bf16.gmra.mxu0 %v1349
    %v2201 = vpop.f32.mrf.mxu0
    %v2202 = vadd.f32 %v1909, %v2201
    %v2203 = vpop.f32.mrf.mxu0
    %v2204 = vadd.f32 %v1911, %v2203
    %v2205 = vpop.f32.mrf.mxu0
    %v2206 = vadd.f32 %v1913, %v2205
    %v2207 = vpop.f32.mrf.mxu0
    %v2208 = vadd.f32 %v1915, %v2207
    %2209 = vmatprep.mubr.bf16.mxu0 %v1353
    %2210 = vmatmul.mubr.bf16.gmra.mxu0 %v1352
    %v2211 = vpop.f32.mrf.mxu0
    %v2212 = vadd.f32 %v1919, %v2211
    %v2213 = vpop.f32.mrf.mxu0
    %v2214 = vadd.f32 %v1921, %v2213
    %v2215 = vpop.f32.mrf.mxu0
    %v2216 = vadd.f32 %v1923, %v2215
    %v2217 = vpop.f32.mrf.mxu0
    %v2218 = vadd.f32 %v1925, %v2217
    %2219 = vdwg.mxu0
    %2220 = vmatprep.subr.bf16.mxu0 %v2118
    %2221 = vmatpush1.bf16.msra.mxu0 %v2117
    %2222 = vmatprep.subr.bf16.mxu0 %v2116
    %2223 = vmatpush1.bf16.msra.mxu0 %v2115
    %2224 = vmatprep.subr.bf16.mxu0 %v2114
    %2225 = vmatpush1.bf16.msra.mxu0 %v2113
    %2226 = vmatprep.subr.bf16.mxu0 %v2112
    %2227 = vmatpush1.bf16.msra.mxu0 %v2111
    %2228 = vmatprep.subr.bf16.mxu0 %v2110
    %2229 = vmatpush1.bf16.msra.mxu0 %v2109
    %2230 = vmatprep.subr.bf16.mxu0 %v2108
    %2231 = vmatpush1.bf16.msra.mxu0 %v2107
    %2232 = vmatprep.subr.bf16.mxu0 %v2106
    %2233 = vmatpush1.bf16.msra.mxu0 %v2105
    %2234 = vmatprep.subr.bf16.mxu0 %v2104
    %2235 = vmatpush1.bf16.msra.mxu0 %v2103
    %2236 = vmatprep.subr.bf16.mxu0 0
    %2237 = vmatpush2.bf16.msra.mxu0 0
    %2238 = vmatprep.subr.bf16.mxu0 0
    %2239 = vmatpush2.bf16.msra.mxu0 0
    %2240 = vmatprep.subr.bf16.mxu0 0
    %2241 = vmatpush2.bf16.msra.mxu0 0
    %2242 = vmatprep.subr.bf16.mxu0 0
    %2243 = vmatpush2.bf16.msra.mxu0 0
    %2244 = vmatprep.subr.bf16.mxu0 0
    %2245 = vmatpush2.bf16.msra.mxu0 0
    %2246 = vmatprep.subr.bf16.mxu0 0
    %2247 = vmatpush2.bf16.msra.mxu0 0
    %2248 = vmatprep.subr.bf16.mxu0 0
    %2249 = vmatpush2.bf16.msra.mxu0 0
    %2250 = vmatprep.subr.bf16.mxu0 0
    %2251 = vmatpush2.bf16.msra.mxu0 0
    %2252 = vmatprep.mubr.bf16.mxu0 0
    %2253 = vmatmul.mubr.bf16.gmra.mxu0 %v1351
    %v2254 = vpop.f32.mrf.mxu0
    %v2255 = vadd.f32 %v2202, %v2254
    %v2256 = vpop.f32.mrf.mxu0
    %v2257 = vadd.f32 %v2204, %v2256
    %v2258 = vpop.f32.mrf.mxu0
    %v2259 = vadd.f32 %v2206, %v2258
    %v2260 = vpop.f32.mrf.mxu0
    %v2261 = vadd.f32 %v2208, %v2260
    %2262 = vmatprep.mubr.bf16.mxu0 0
    %2263 = vmatmul.mubr.bf16.gmra.mxu0 %v1354
    %v2264 = vpop.f32.mrf.mxu0
    %v2265 = vadd.f32 %v2212, %v2264
    %v2266 = vpop.f32.mrf.mxu0
    %v2267 = vadd.f32 %v2214, %v2266
    %v2268 = vpop.f32.mrf.mxu0
    %v2269 = vadd.f32 %v2216, %v2268
    %v2270 = vpop.f32.mrf.mxu0
    %v2271 = vadd.f32 %v2218, %v2270
    %2272 = vdwg.mxu0
    %s2273 = scalar_lea.vmem %s4, 32
    %v2274 = vld [vmem:[%s2273] sm:$0xf]
    %v2275 = vld [vmem:[%s2273 + $0x4] sm:$0xf]
    %v2276 = vld [vmem:[%s2273 + $0x8] sm:$0xf]
    %v2277 = vld [vmem:[%s2273 + $0xc] sm:$0xf]
    %v2282 = vunpack.c.l.b16 %v2274
    %v2283 = vunpack.c.l.b16 %v2275
    %v2284 = vunpack.c.l.b16 %v2276
    %v2285 = vunpack.c.l.b16 %v2277
    %v2286 = vpack.c.b16 %v2283, %v2282
    %v2287 = vpack.c.b16 %v2285, %v2284
    %v2289 = vsel %vm428, %v2286, 0
    %v2292 = vsel %vm428, %v2287, 0
    %2294 = vmatprep.subr.bf16.mxu0 0
    %2295 = vmatpush1.bf16.msra.mxu0 0
    %2296 = vmatprep.subr.bf16.mxu0 0
    %2297 = vmatpush1.bf16.msra.mxu0 0
    %2298 = vmatprep.subr.bf16.mxu0 0
    %2299 = vmatpush1.bf16.msra.mxu0 0
    %2300 = vmatprep.subr.bf16.mxu0 0
    %2301 = vmatpush1.bf16.msra.mxu0 0
    %2302 = vmatprep.subr.bf16.mxu0 %v1225
    %2303 = vmatpush1.bf16.msra.mxu0 %v1224
    %2304 = vmatprep.subr.bf16.mxu0 %v1222
    %2305 = vmatpush1.bf16.msra.mxu0 %v1221
    %2306 = vmatprep.subr.bf16.mxu0 %v1219
    %2307 = vmatpush1.bf16.msra.mxu0 %v1218
    %2308 = vmatprep.subr.bf16.mxu0 %v1216
    %2309 = vmatpush1.bf16.msra.mxu0 %v1215
    %2310 = vmatprep.subr.bf16.mxu0 0
    %2311 = vmatpush2.bf16.msra.mxu0 0
    %2312 = vmatprep.subr.bf16.mxu0 0
    %2313 = vmatpush2.bf16.msra.mxu0 0
    %2314 = vmatprep.subr.bf16.mxu0 0
    %2315 = vmatpush2.bf16.msra.mxu0 0
    %2316 = vmatprep.subr.bf16.mxu0 0
    %2317 = vmatpush2.bf16.msra.mxu0 0
    %2318 = vmatprep.subr.bf16.mxu0 0
    %2319 = vmatpush2.bf16.msra.mxu0 0
    %2320 = vmatprep.subr.bf16.mxu0 0
    %2321 = vmatpush2.bf16.msra.mxu0 0
    %2322 = vmatprep.subr.bf16.mxu0 0
    %2323 = vmatpush2.bf16.msra.mxu0 0
    %2324 = vmatprep.subr.bf16.mxu0 0
    %2325 = vmatpush2.bf16.msra.mxu0 0
    %2326 = vmatprep.mubr.bf16.mxu0 0
    %2327 = vmatmul.mubr.bf16.gmra.mxu0 %v2289
    %v2328 = vpop.f32.mrf.mxu0
    %v2329 = vadd.f32 0.0, %v2328
    %v2330 = vpop.f32.mrf.mxu0
    %v2331 = vadd.f32 0.0, %v2330
    %v2332 = vpop.f32.mrf.mxu0
    %v2333 = vadd.f32 0.0, %v2332
    %v2334 = vpop.f32.mrf.mxu0
    %v2335 = vadd.f32 0.0, %v2334
    %2336 = vmatprep.mubr.bf16.mxu0 0
    %2337 = vmatmul.mubr.bf16.gmra.mxu0 %v2292
    %v2338 = vpop.f32.mrf.mxu0
    %v2339 = vadd.f32 0.0, %v2338
    %v2340 = vpop.f32.mrf.mxu0
    %v2341 = vadd.f32 0.0, %v2340
    %v2342 = vpop.f32.mrf.mxu0
    %v2343 = vadd.f32 0.0, %v2342
    %v2344 = vpop.f32.mrf.mxu0
    %v2345 = vadd.f32 0.0, %v2344
    %2346 = vdwg.mxu0
    %2347 = vmatprep.subr.bf16.mxu0 0
    %2348 = vmatpush1.bf16.msra.mxu0 0
    %2349 = vmatprep.subr.bf16.mxu0 0
    %2350 = vmatpush1.bf16.msra.mxu0 0
    %2351 = vmatprep.subr.bf16.mxu0 0
    %2352 = vmatpush1.bf16.msra.mxu0 0
    %2353 = vmatprep.subr.bf16.mxu0 0
    %2354 = vmatpush1.bf16.msra.mxu0 0
    %2355 = vmatprep.subr.bf16.mxu0 0
    %2356 = vmatpush1.bf16.msra.mxu0 %v1226
    %2357 = vmatprep.subr.bf16.mxu0 0
    %2358 = vmatpush1.bf16.msra.mxu0 %v1223
    %2359 = vmatprep.subr.bf16.mxu0 0
    %2360 = vmatpush1.bf16.msra.mxu0 %v1220
    %2361 = vmatprep.subr.bf16.mxu0 0
    %2362 = vmatpush1.bf16.msra.mxu0 %v1217
    %2363 = vmatprep.subr.bf16.mxu0 0
    %2364 = vmatpush2.bf16.msra.mxu0 0
    %2365 = vmatprep.subr.bf16.mxu0 0
    %2366 = vmatpush2.bf16.msra.mxu0 0
    %2367 = vmatprep.subr.bf16.mxu0 0
    %2368 = vmatpush2.bf16.msra.mxu0 0
    %2369 = vmatprep.subr.bf16.mxu0 0
    %2370 = vmatpush2.bf16.msra.mxu0 0
    %2371 = vmatprep.subr.bf16.mxu0 0
    %2372 = vmatpush2.bf16.msra.mxu0 0
    %2373 = vmatprep.subr.bf16.mxu0 0
    %2374 = vmatpush2.bf16.msra.mxu0 0
    %2375 = vmatprep.subr.bf16.mxu0 0
    %2376 = vmatpush2.bf16.msra.mxu0 0
    %2377 = vmatprep.subr.bf16.mxu0 0
    %2378 = vmatpush2.bf16.msra.mxu0 0
    %2379 = vmatprep.mubr.bf16.mxu0 0
    %2380 = vmatmul.mubr.bf16.gmra.mxu0 %v2289
    %v2381 = vpop.f32.mrf.mxu0
    %v2382 = vadd.f32 0.0, %v2381
    %v2383 = vpop.f32.mrf.mxu0
    %v2384 = vpop.f32.mrf.mxu0
    %v2385 = vadd.f32 0.0, %v2384
    %v2386 = vpop.f32.mrf.mxu0
    %2387 = vmatprep.mubr.bf16.mxu0 0
    %2388 = vmatmul.mubr.bf16.gmra.mxu0 %v2292
    %v2389 = vpop.f32.mrf.mxu0
    %v2390 = vadd.f32 0.0, %v2389
    %v2391 = vpop.f32.mrf.mxu0
    %v2392 = vpop.f32.mrf.mxu0
    %v2393 = vadd.f32 0.0, %v2392
    %v2394 = vpop.f32.mrf.mxu0
    %2395 = vdwg.mxu0
    %v2396 = vpack.c.bf16 %v2333, %v2329
    %v2397 = vpack.c.bf16 %v2335, %v2331
    %v2398 = vpack.c.bf16 %v2385, %v2382
    %v2399 = vpack.c.bf16 %v2343, %v2339
    %v2400 = vpack.c.bf16 %v2345, %v2341
    %v2401 = vpack.c.bf16 %v2393, %v2390
    %s2402 = scalar_lea.vmem %s5, 768
    %v2403 = vld [vmem:[%s2402] sm:$0xff]
    %v2404 = vld [vmem:[%s2402 + $0x8] sm:$0xff]
    %v2405 = vld [vmem:[%s2402 + $0x10] sm:$0xff]
    %v2406 = vld [vmem:[%s2402 + $0x18] sm:$0xff]
    %v2407 = vld [vmem:[%s2402 + $0x20] sm:$0xff]
    %v2408 = vld [vmem:[%s2402 + $0x28] sm:$0xff]
    %v2409 = vld [vmem:[%s2402 + $0x30] sm:$0xff]
    %v2410 = vld [vmem:[%s2402 + $0x38] sm:$0xff]
    %v2411 = vld [vmem:[%s2402 + $0x40] sm:$0xff]
    %v2412 = vld [vmem:[%s2402 + $0x48] sm:$0xff]
    %v2413 = vld [vmem:[%s2402 + $0x50] sm:$0xff]
    %v2414 = vld [vmem:[%s2402 + $0x58] sm:$0xff]
    %v2415 = vld [vmem:[%s2402 + $0x60] sm:$0xff]
    %v2416 = vld [vmem:[%s2402 + $0x68] sm:$0xff]
    %v2417 = vld [vmem:[%s2402 + $0x70] sm:$0xff]
    %v2418 = vld [vmem:[%s2402 + $0x78] sm:$0xff]
    %v2419 = vld [vmem:[%s2402 + $0x80] sm:$0xff]
    %v2420 = vld [vmem:[%s2402 + $0x88] sm:$0xff]
    %v2421 = vld [vmem:[%s2402 + $0x90] sm:$0xff]
    %v2422 = vld [vmem:[%s2402 + $0x98] sm:$0xff]
    %v2423 = vld [vmem:[%s2402 + $0xa0] sm:$0xff]
    %v2424 = vld [vmem:[%s2402 + $0xa8] sm:$0xff]
    %v2425 = vld [vmem:[%s2402 + $0xb0] sm:$0xff]
    %v2426 = vld [vmem:[%s2402 + $0xb8] sm:$0xff]
    %v2427 = vld [vmem:[%s2402 + $0xc0] sm:$0xff]
    %v2428 = vld [vmem:[%s2402 + $0xc8] sm:$0xff]
    %v2429 = vld [vmem:[%s2402 + $0xd0] sm:$0xff]
    %v2430 = vld [vmem:[%s2402 + $0xd8] sm:$0xff]
    %v2431 = vld [vmem:[%s2402 + $0xe0] sm:$0xff]
    %v2432 = vld [vmem:[%s2402 + $0xe8] sm:$0xff]
    %v2433 = vld [vmem:[%s2402 + $0xf0] sm:$0xff]
    %v2434 = vld [vmem:[%s2402 + $0xf8] sm:$0xff]
    %v2435 = vld [vmem:[%s2402 + $0x100] sm:$0xff]
    %v2436 = vld [vmem:[%s2402 + $0x108] sm:$0xff]
    %v2437 = vld [vmem:[%s2402 + $0x110] sm:$0xff]
    %v2438 = vld [vmem:[%s2402 + $0x118] sm:$0xff]
    %v2439 = vld [vmem:[%s2402 + $0x120] sm:$0xff]
    %v2440 = vld [vmem:[%s2402 + $0x128] sm:$0xff]
    %v2441 = vld [vmem:[%s2402 + $0x130] sm:$0xff]
    %v2442 = vld [vmem:[%s2402 + $0x138] sm:$0xff]
    %v2443 = vld [vmem:[%s2402 + $0x140] sm:$0xff]
    %v2444 = vld [vmem:[%s2402 + $0x148] sm:$0xff]
    %v2445 = vld [vmem:[%s2402 + $0x150] sm:$0xff]
    %v2446 = vld [vmem:[%s2402 + $0x158] sm:$0xff]
    %v2447 = vld [vmem:[%s2402 + $0x160] sm:$0xff]
    %v2448 = vld [vmem:[%s2402 + $0x168] sm:$0xff]
    %v2449 = vld [vmem:[%s2402 + $0x170] sm:$0xff]
    %v2450 = vld [vmem:[%s2402 + $0x178] sm:$0xff]
    %v2499 = vunpack.c.l.b16 %v2403
    %v2500 = vunpack.c.h.b16 %v2403
    %v2501 = vunpack.c.l.b16 %v2404
    %v2502 = vunpack.c.h.b16 %v2404
    %v2503 = vunpack.c.l.b16 %v2405
    %v2504 = vunpack.c.h.b16 %v2405
    %v2505 = vunpack.c.l.b16 %v2406
    %v2506 = vunpack.c.h.b16 %v2406
    %v2507 = vunpack.c.l.b16 %v2407
    %v2508 = vunpack.c.h.b16 %v2407
    %v2509 = vunpack.c.l.b16 %v2408
    %v2510 = vunpack.c.h.b16 %v2408
    %v2511 = vunpack.c.l.b16 %v2409
    %v2512 = vunpack.c.h.b16 %v2409
    %v2513 = vunpack.c.l.b16 %v2410
    %v2514 = vunpack.c.h.b16 %v2410
    %v2515 = vunpack.c.l.b16 %v2411
    %v2516 = vunpack.c.h.b16 %v2411
    %v2517 = vunpack.c.l.b16 %v2412
    %v2518 = vunpack.c.h.b16 %v2412
    %v2519 = vunpack.c.l.b16 %v2413
    %v2520 = vunpack.c.h.b16 %v2413
    %v2521 = vunpack.c.l.b16 %v2414
    %v2522 = vunpack.c.h.b16 %v2414
    %v2523 = vunpack.c.l.b16 %v2415
    %v2524 = vunpack.c.h.b16 %v2415
    %v2525 = vunpack.c.l.b16 %v2416
    %v2526 = vunpack.c.h.b16 %v2416
    %v2527 = vunpack.c.l.b16 %v2417
    %v2528 = vunpack.c.h.b16 %v2417
    %v2529 = vunpack.c.l.b16 %v2418
    %v2530 = vunpack.c.h.b16 %v2418
    %v2531 = vunpack.c.l.b16 %v2419
    %v2532 = vunpack.c.h.b16 %v2419
    %v2533 = vunpack.c.l.b16 %v2420
    %v2534 = vunpack.c.h.b16 %v2420
    %v2535 = vunpack.c.l.b16 %v2421
    %v2536 = vunpack.c.h.b16 %v2421
    %v2537 = vunpack.c.l.b16 %v2422
    %v2538 = vunpack.c.h.b16 %v2422
    %v2539 = vunpack.c.l.b16 %v2423
    %v2540 = vunpack.c.h.b16 %v2423
    %v2541 = vunpack.c.l.b16 %v2424
    %v2542 = vunpack.c.h.b16 %v2424
    %v2543 = vunpack.c.l.b16 %v2425
    %v2544 = vunpack.c.h.b16 %v2425
    %v2545 = vunpack.c.l.b16 %v2426
    %v2546 = vunpack.c.h.b16 %v2426
    %v2547 = vunpack.c.l.b16 %v2427
    %v2548 = vunpack.c.h.b16 %v2427
    %v2549 = vunpack.c.l.b16 %v2428
    %v2550 = vunpack.c.h.b16 %v2428
    %v2551 = vunpack.c.l.b16 %v2429
    %v2552 = vunpack.c.h.b16 %v2429
    %v2553 = vunpack.c.l.b16 %v2430
    %v2554 = vunpack.c.h.b16 %v2430
    %v2555 = vunpack.c.l.b16 %v2431
    %v2556 = vunpack.c.h.b16 %v2431
    %v2557 = vunpack.c.l.b16 %v2432
    %v2558 = vunpack.c.h.b16 %v2432
    %v2559 = vunpack.c.l.b16 %v2433
    %v2560 = vunpack.c.h.b16 %v2433
    %v2561 = vunpack.c.l.b16 %v2434
    %v2562 = vunpack.c.h.b16 %v2434
    %v2563 = vunpack.c.l.b16 %v2435
    %v2564 = vunpack.c.h.b16 %v2435
    %v2565 = vunpack.c.l.b16 %v2436
    %v2566 = vunpack.c.h.b16 %v2436
    %v2567 = vunpack.c.l.b16 %v2437
    %v2568 = vunpack.c.h.b16 %v2437
    %v2569 = vunpack.c.l.b16 %v2438
    %v2570 = vunpack.c.h.b16 %v2438
    %v2571 = vunpack.c.l.b16 %v2439
    %v2572 = vunpack.c.h.b16 %v2439
    %v2573 = vunpack.c.l.b16 %v2440
    %v2574 = vunpack.c.h.b16 %v2440
    %v2575 = vunpack.c.l.b16 %v2441
    %v2576 = vunpack.c.h.b16 %v2441
    %v2577 = vunpack.c.l.b16 %v2442
    %v2578 = vunpack.c.h.b16 %v2442
    %v2579 = vunpack.c.l.b16 %v2443
    %v2580 = vunpack.c.h.b16 %v2443
    %v2581 = vunpack.c.l.b16 %v2444
    %v2582 = vunpack.c.h.b16 %v2444
    %v2583 = vunpack.c.l.b16 %v2445
    %v2584 = vunpack.c.h.b16 %v2445
    %v2585 = vunpack.c.l.b16 %v2446
    %v2586 = vunpack.c.h.b16 %v2446
    %v2587 = vunpack.c.l.b16 %v2447
    %v2588 = vunpack.c.h.b16 %v2447
    %v2589 = vunpack.c.l.b16 %v2448
    %v2590 = vunpack.c.h.b16 %v2448
    %v2591 = vunpack.c.l.b16 %v2449
    %v2592 = vunpack.c.h.b16 %v2449
    %v2593 = vunpack.c.l.b16 %v2450
    %v2594 = vunpack.c.h.b16 %v2450
    %v2595 = vpack.c.b16 %v2501, %v2499
    %v2596 = vpack.c.b16 %v2502, %v2500
    %v2597 = vpack.c.b16 %v2505, %v2503
    %v2598 = vpack.c.b16 %v2506, %v2504
    %v2599 = vpack.c.b16 %v2509, %v2507
    %v2600 = vpack.c.b16 %v2510, %v2508
    %v2601 = vpack.c.b16 %v2513, %v2511
    %v2602 = vpack.c.b16 %v2514, %v2512
    %v2603 = vpack.c.b16 %v2517, %v2515
    %v2604 = vpack.c.b16 %v2518, %v2516
    %v2605 = vpack.c.b16 %v2521, %v2519
    %v2606 = vpack.c.b16 %v2522, %v2520
    %v2607 = vpack.c.b16 %v2525, %v2523
    %v2608 = vpack.c.b16 %v2526, %v2524
    %v2609 = vpack.c.b16 %v2529, %v2527
    %v2610 = vpack.c.b16 %v2530, %v2528
    %v2611 = vpack.c.b16 %v2533, %v2531
    %v2612 = vpack.c.b16 %v2534, %v2532
    %v2613 = vpack.c.b16 %v2537, %v2535
    %v2614 = vpack.c.b16 %v2538, %v2536
    %v2615 = vpack.c.b16 %v2541, %v2539
    %v2616 = vpack.c.b16 %v2542, %v2540
    %v2617 = vpack.c.b16 %v2545, %v2543
    %v2618 = vpack.c.b16 %v2546, %v2544
    %v2619 = vpack.c.b16 %v2549, %v2547
    %v2620 = vpack.c.b16 %v2550, %v2548
    %v2621 = vpack.c.b16 %v2553, %v2551
    %v2622 = vpack.c.b16 %v2554, %v2552
    %v2623 = vpack.c.b16 %v2557, %v2555
    %v2624 = vpack.c.b16 %v2558, %v2556
    %v2625 = vpack.c.b16 %v2561, %v2559
    %v2626 = vpack.c.b16 %v2562, %v2560
    %v2627 = vpack.c.b16 %v2565, %v2563
    %v2628 = vpack.c.b16 %v2566, %v2564
    %v2629 = vpack.c.b16 %v2569, %v2567
    %v2630 = vpack.c.b16 %v2570, %v2568
    %v2631 = vpack.c.b16 %v2573, %v2571
    %v2632 = vpack.c.b16 %v2574, %v2572
    %v2633 = vpack.c.b16 %v2577, %v2575
    %v2634 = vpack.c.b16 %v2578, %v2576
    %v2635 = vpack.c.b16 %v2581, %v2579
    %v2636 = vpack.c.b16 %v2582, %v2580
    %v2637 = vpack.c.b16 %v2585, %v2583
    %v2638 = vpack.c.b16 %v2586, %v2584
    %v2639 = vpack.c.b16 %v2589, %v2587
    %v2640 = vpack.c.b16 %v2590, %v2588
    %v2641 = vpack.c.b16 %v2593, %v2591
    %v2642 = vpack.c.b16 %v2594, %v2592
    %2691 = vmatprep.subr.bf16.mxu0 %v2610
    %2692 = vmatpush1.bf16.msra.mxu0 %v2609
    %2693 = vmatprep.subr.bf16.mxu0 %v2608
    %2694 = vmatpush1.bf16.msra.mxu0 %v2607
    %2695 = vmatprep.subr.bf16.mxu0 %v2606
    %2696 = vmatpush1.bf16.msra.mxu0 %v2605
    %2697 = vmatprep.subr.bf16.mxu0 %v2604
    %2698 = vmatpush1.bf16.msra.mxu0 %v2603
    %2699 = vmatprep.subr.bf16.mxu0 %v2602
    %2700 = vmatpush1.bf16.msra.mxu0 %v2601
    %2701 = vmatprep.subr.bf16.mxu0 %v2600
    %2702 = vmatpush1.bf16.msra.mxu0 %v2599
    %2703 = vmatprep.subr.bf16.mxu0 %v2598
    %2704 = vmatpush1.bf16.msra.mxu0 %v2597
    %2705 = vmatprep.subr.bf16.mxu0 %v2596
    %2706 = vmatpush1.bf16.msra.mxu0 %v2595
    %2707 = vmatprep.subr.bf16.mxu0 %v2626
    %2708 = vmatpush2.bf16.msra.mxu0 %v2625
    %2709 = vmatprep.subr.bf16.mxu0 %v2624
    %2710 = vmatpush2.bf16.msra.mxu0 %v2623
    %2711 = vmatprep.subr.bf16.mxu0 %v2622
    %2712 = vmatpush2.bf16.msra.mxu0 %v2621
    %2713 = vmatprep.subr.bf16.mxu0 %v2620
    %2714 = vmatpush2.bf16.msra.mxu0 %v2619
    %2715 = vmatprep.subr.bf16.mxu0 %v2618
    %2716 = vmatpush2.bf16.msra.mxu0 %v2617
    %2717 = vmatprep.subr.bf16.mxu0 %v2616
    %2718 = vmatpush2.bf16.msra.mxu0 %v2615
    %2719 = vmatprep.subr.bf16.mxu0 %v2614
    %2720 = vmatpush2.bf16.msra.mxu0 %v2613
    %2721 = vmatprep.subr.bf16.mxu0 %v2612
    %2722 = vmatpush2.bf16.msra.mxu0 %v2611
    %2723 = vmatprep.mubr.bf16.mxu0 %v2397
    %2724 = vmatmul.mubr.bf16.gmra.mxu0 %v2396
    %v2725 = vpop.f32.mrf.mxu0
    %v2726 = vadd.f32 0.0, %v2725
    %v2727 = vpop.f32.mrf.mxu0
    %v2728 = vadd.f32 0.0, %v2727
    %v2729 = vpop.f32.mrf.mxu0
    %v2730 = vadd.f32 0.0, %v2729
    %v2731 = vpop.f32.mrf.mxu0
    %v2732 = vadd.f32 0.0, %v2731
    %2733 = vmatprep.mubr.bf16.mxu0 %v2400
    %2734 = vmatmul.mubr.bf16.gmra.mxu0 %v2399
    %v2735 = vpop.f32.mrf.mxu0
    %v2736 = vadd.f32 0.0, %v2735
    %v2737 = vpop.f32.mrf.mxu0
    %v2738 = vadd.f32 0.0, %v2737
    %v2739 = vpop.f32.mrf.mxu0
    %v2740 = vadd.f32 0.0, %v2739
    %v2741 = vpop.f32.mrf.mxu0
    %v2742 = vadd.f32 0.0, %v2741
    %2743 = vdwg.mxu0
    %2744 = vmatprep.subr.bf16.mxu0 %v2642
    %2745 = vmatpush1.bf16.msra.mxu0 %v2641
    %2746 = vmatprep.subr.bf16.mxu0 %v2640
    %2747 = vmatpush1.bf16.msra.mxu0 %v2639
    %2748 = vmatprep.subr.bf16.mxu0 %v2638
    %2749 = vmatpush1.bf16.msra.mxu0 %v2637
    %2750 = vmatprep.subr.bf16.mxu0 %v2636
    %2751 = vmatpush1.bf16.msra.mxu0 %v2635
    %2752 = vmatprep.subr.bf16.mxu0 %v2634
    %2753 = vmatpush1.bf16.msra.mxu0 %v2633
    %2754 = vmatprep.subr.bf16.mxu0 %v2632
    %2755 = vmatpush1.bf16.msra.mxu0 %v2631
    %2756 = vmatprep.subr.bf16.mxu0 %v2630
    %2757 = vmatpush1.bf16.msra.mxu0 %v2629
    %2758 = vmatprep.subr.bf16.mxu0 %v2628
    %2759 = vmatpush1.bf16.msra.mxu0 %v2627
    %2760 = vmatprep.subr.bf16.mxu0 0
    %2761 = vmatpush2.bf16.msra.mxu0 0
    %2762 = vmatprep.subr.bf16.mxu0 0
    %2763 = vmatpush2.bf16.msra.mxu0 0
    %2764 = vmatprep.subr.bf16.mxu0 0
    %2765 = vmatpush2.bf16.msra.mxu0 0
    %2766 = vmatprep.subr.bf16.mxu0 0
    %2767 = vmatpush2.bf16.msra.mxu0 0
    %2768 = vmatprep.subr.bf16.mxu0 0
    %2769 = vmatpush2.bf16.msra.mxu0 0
    %2770 = vmatprep.subr.bf16.mxu0 0
    %2771 = vmatpush2.bf16.msra.mxu0 0
    %2772 = vmatprep.subr.bf16.mxu0 0
    %2773 = vmatpush2.bf16.msra.mxu0 0
    %2774 = vmatprep.subr.bf16.mxu0 0
    %2775 = vmatpush2.bf16.msra.mxu0 0
    %2776 = vmatprep.mubr.bf16.mxu0 0
    %2777 = vmatmul.mubr.bf16.gmra.mxu0 %v2398
    %v2778 = vpop.f32.mrf.mxu0
    %v2779 = vadd.f32 %v2726, %v2778
    %v2780 = vpop.f32.mrf.mxu0
    %v2781 = vadd.f32 %v2728, %v2780
    %v2782 = vpop.f32.mrf.mxu0
    %v2783 = vadd.f32 %v2730, %v2782
    %v2784 = vpop.f32.mrf.mxu0
    %v2785 = vadd.f32 %v2732, %v2784
    %2786 = vmatprep.mubr.bf16.mxu0 0
    %2787 = vmatmul.mubr.bf16.gmra.mxu0 %v2401
    %v2788 = vpop.f32.mrf.mxu0
    %v2789 = vadd.f32 %v2736, %v2788
    %v2790 = vpop.f32.mrf.mxu0
    %v2791 = vadd.f32 %v2738, %v2790
    %v2792 = vpop.f32.mrf.mxu0
    %v2793 = vadd.f32 %v2740, %v2792
    %v2794 = vpop.f32.mrf.mxu0
    %v2795 = vadd.f32 %v2742, %v2794
    %2796 = vdwg.mxu0
    %v2797 = vadd.f32 %v2255, %v2779
    %v2798 = vadd.f32 %v2257, %v2781
    %v2799 = vadd.f32 %v2259, %v2783
    %v2800 = vadd.f32 %v2261, %v2785
    %v2801 = vadd.f32 %v2265, %v2789
    %v2802 = vadd.f32 %v2267, %v2791
    %v2803 = vadd.f32 %v2269, %v2793
    %v2804 = vadd.f32 %v2271, %v2795
    %v2805 = vld [vmem:[%s6] sm:$0x3]
    %v2807 = vlaneseq
    %v2808 = vshrl.u32 %v2807, 7
    %v2809 = vsub.s32 0, %v2808
    %v2810 = vrot.slane %v2805, %v2809
    %v2811 = vlaneseq
    %v2812 = vshrl.u32 %v2811, 7
    %v2813 = vsub.s32 1, %v2812
    %v2814 = vrot.slane %v2805, %v2813
    %v2817 = vadd.f32 %v2797, %v2810
    %v2818 = vadd.f32 %v2798, %v2814
    %v2819 = vadd.f32 %v2799, %v2810
    %v2820 = vadd.f32 %v2800, %v2814
    %v2821 = vadd.f32 %v2801, %v2810
    %v2822 = vadd.f32 %v2802, %v2814
    %v2823 = vadd.f32 %v2803, %v2810
    %v2824 = vadd.f32 %v2804, %v2814
    %v2825 = vmax.f32 %v2817, 0.0
    %v2826 = vmax.f32 %v2818, 0.0
    %v2827 = vmax.f32 %v2819, 0.0
    %v2828 = vmax.f32 %v2820, 0.0
    %v2829 = vmax.f32 %v2821, 0.0
    %v2830 = vmax.f32 %v2822, 0.0
    %v2831 = vmax.f32 %v2823, 0.0
    %v2832 = vmax.f32 %v2824, 0.0
    %v2833 = vpack.c.bf16 %v2827, %v2825
    %v2834 = vpack.c.bf16 %v2828, %v2826
    %v2835 = vpack.c.bf16 %v2831, %v2829
    %v2836 = vpack.c.bf16 %v2832, %v2830
    %v2837 = vld [vmem:[%s7] sm:$0xf]
    %v2838 = vld [vmem:[%s7 + $0x4] sm:$0xf]
    %v2841 = vunpack.c.l.b16 %v2837
    %v2842 = vunpack.c.l.b16 %v2838
    %v2843 = vpack.c.b16 %v2842, %v2841
    %vm2844 = vcmask 261120
    %v2846 = vsel %vm2844, %v2843, 0
    %2848 = vmatprep.subr.bf16.mxu0 0
    %2849 = vmatpush1.bf16.msra.mxu0 0
    %2850 = vmatprep.subr.bf16.mxu0 0
    %2851 = vmatpush1.bf16.msra.mxu0 0
    %2852 = vmatprep.subr.bf16.mxu0 0
    %2853 = vmatpush1.bf16.msra.mxu0 0
    %2854 = vmatprep.subr.bf16.mxu0 0
    %2855 = vmatpush1.bf16.msra.mxu0 0
    %2856 = vmatprep.subr.bf16.mxu0 0
    %2857 = vmatpush1.bf16.msra.mxu0 0
    %2858 = vmatprep.subr.bf16.mxu0 0
    %2859 = vmatpush1.bf16.msra.mxu0 0
    %2860 = vmatprep.subr.bf16.mxu0 %v2836
    %2861 = vmatpush1.bf16.msra.mxu0 %v2835
    %2862 = vmatprep.subr.bf16.mxu0 %v2834
    %2863 = vmatpush1.bf16.msra.mxu0 %v2833
    %2864 = vmatprep.subr.bf16.mxu0 0
    %2865 = vmatpush2.bf16.msra.mxu0 0
    %2866 = vmatprep.subr.bf16.mxu0 0
    %2867 = vmatpush2.bf16.msra.mxu0 0
    %2868 = vmatprep.subr.bf16.mxu0 0
    %2869 = vmatpush2.bf16.msra.mxu0 0
    %2870 = vmatprep.subr.bf16.mxu0 0
    %2871 = vmatpush2.bf16.msra.mxu0 0
    %2872 = vmatprep.subr.bf16.mxu0 0
    %2873 = vmatpush2.bf16.msra.mxu0 0
    %2874 = vmatprep.subr.bf16.mxu0 0
    %2875 = vmatpush2.bf16.msra.mxu0 0
    %2876 = vmatprep.subr.bf16.mxu0 0
    %2877 = vmatpush2.bf16.msra.mxu0 0
    %2878 = vmatprep.subr.bf16.mxu0 0
    %2879 = vmatpush2.bf16.msra.mxu0 0
    %2880 = vmatprep.mubr.bf16.mxu0 0
    %2881 = vmatmul.mubr.bf16.gmra.mxu0 %v2846
    %v2882 = vpop.f32.mrf.mxu0
    %v2883 = vadd.f32 0.0, %v2882
    %v2884 = vpop.f32.mrf.mxu0
    %v2885 = vadd.f32 0.0, %v2884
    %v2886 = vpop.f32.mrf.mxu0
    %v2887 = vadd.f32 0.0, %v2886
    %v2888 = vpop.f32.mrf.mxu0
    %v2889 = vadd.f32 0.0, %v2888
    %2890 = vdwg.mxu0
    %v2891 = vpack.c.bf16 %v2887, %v2883
    %v2892 = vpack.c.bf16 %v2889, %v2885
    %v2893 = vld [vmem:[%s8] sm:$0xf]
    %v2894 = vld [vmem:[%s8 + $0x4] sm:$0xf]
    %v2895 = vld [vmem:[%s8 + $0x8] sm:$0xf]
    %v2896 = vld [vmem:[%s8 + $0xc] sm:$0xf]
    %v2897 = vld [vmem:[%s8 + $0x10] sm:$0xf]
    %v2898 = vld [vmem:[%s8 + $0x14] sm:$0xf]
    %v2899 = vld [vmem:[%s8 + $0x18] sm:$0xf]
    %v2900 = vld [vmem:[%s8 + $0x1c] sm:$0xf]
    %v2901 = vld [vmem:[%s8 + $0x20] sm:$0xf]
    %v2902 = vld [vmem:[%s8 + $0x24] sm:$0xf]
    %v2903 = vld [vmem:[%s8 + $0x28] sm:$0xf]
    %v2904 = vld [vmem:[%s8 + $0x2c] sm:$0xf]
    %v2905 = vld [vmem:[%s8 + $0x30] sm:$0xf]
    %v2906 = vld [vmem:[%s8 + $0x34] sm:$0xf]
    %v2907 = vld [vmem:[%s8 + $0x38] sm:$0xf]
    %v2908 = vld [vmem:[%s8 + $0x3c] sm:$0xf]
    %v2909 = vld [vmem:[%s8 + $0x40] sm:$0xf]
    %v2910 = vld [vmem:[%s8 + $0x44] sm:$0xf]
    %v2911 = vld [vmem:[%s8 + $0x48] sm:$0xf]
    %v2912 = vld [vmem:[%s8 + $0x4c] sm:$0xf]
    %v2913 = vld [vmem:[%s8 + $0x50] sm:$0xf]
    %v2914 = vld [vmem:[%s8 + $0x54] sm:$0xf]
    %v2915 = vld [vmem:[%s8 + $0x58] sm:$0xf]
    %v2916 = vld [vmem:[%s8 + $0x5c] sm:$0xf]
    %s2917 = scalar_lea.vmem %s7, 8
    %v2918 = vld [vmem:[%s2917] sm:$0xf]
    %v2919 = vld [vmem:[%s2917 + $0x4] sm:$0xf]
    %v2922 = vunpack.c.l.b16 %v2918
    %v2923 = vunpack.c.l.b16 %v2919
    %v2924 = vpack.c.b16 %v2923, %v2922
    %v2926 = vsel %vm2844, %v2924, 0
    %2928 = vmatprep.subr.bf16.mxu0 0
    %2929 = vmatpush1.bf16.msra.mxu0 0
    %2930 = vmatprep.subr.bf16.mxu0 0
    %2931 = vmatpush1.bf16.msra.mxu0 0
    %2932 = vmatprep.subr.bf16.mxu0 0
    %2933 = vmatpush1.bf16.msra.mxu0 0
    %2934 = vmatprep.subr.bf16.mxu0 0
    %2935 = vmatpush1.bf16.msra.mxu0 0
    %2936 = vmatprep.subr.bf16.mxu0 0
    %2937 = vmatpush1.bf16.msra.mxu0 0
    %2938 = vmatprep.subr.bf16.mxu0 0
    %2939 = vmatpush1.bf16.msra.mxu0 0
    %2940 = vmatprep.subr.bf16.mxu0 %v2836
    %2941 = vmatpush1.bf16.msra.mxu0 %v2835
    %2942 = vmatprep.subr.bf16.mxu0 %v2834
    %2943 = vmatpush1.bf16.msra.mxu0 %v2833
    %2944 = vmatprep.subr.bf16.mxu0 0
    %2945 = vmatpush2.bf16.msra.mxu0 0
    %2946 = vmatprep.subr.bf16.mxu0 0
    %2947 = vmatpush2.bf16.msra.mxu0 0
    %2948 = vmatprep.subr.bf16.mxu0 0
    %2949 = vmatpush2.bf16.msra.mxu0 0
    %2950 = vmatprep.subr.bf16.mxu0 0
    %2951 = vmatpush2.bf16.msra.mxu0 0
    %2952 = vmatprep.subr.bf16.mxu0 0
    %2953 = vmatpush2.bf16.msra.mxu0 0
    %2954 = vmatprep.subr.bf16.mxu0 0
    %2955 = vmatpush2.bf16.msra.mxu0 0
    %2956 = vmatprep.subr.bf16.mxu0 0
    %2957 = vmatpush2.bf16.msra.mxu0 0
    %2958 = vmatprep.subr.bf16.mxu0 0
    %2959 = vmatpush2.bf16.msra.mxu0 0
    %2960 = vmatprep.mubr.bf16.mxu0 0
    %2961 = vmatmul.mubr.bf16.gmra.mxu0 %v2926
    %v2962 = vpop.f32.mrf.mxu0
    %v2963 = vadd.f32 0.0, %v2962
    %v2964 = vpop.f32.mrf.mxu0
    %v2965 = vadd.f32 0.0, %v2964
    %v2966 = vpop.f32.mrf.mxu0
    %v2967 = vadd.f32 0.0, %v2966
    %v2968 = vpop.f32.mrf.mxu0
    %v2969 = vadd.f32 0.0, %v2968
    %2970 = vdwg.mxu0
    %v2971 = vpack.c.bf16 %v2967, %v2963
    %v2972 = vpack.c.bf16 %v2969, %v2965
    %s2973 = scalar_lea.vmem %s8, 96
    %v2974 = vld [vmem:[%s2973] sm:$0xf]
    %v2975 = vld [vmem:[%s2973 + $0x4] sm:$0xf]
    %v2976 = vld [vmem:[%s2973 + $0x8] sm:$0xf]
    %v2977 = vld [vmem:[%s2973 + $0xc] sm:$0xf]
    %v2978 = vld [vmem:[%s2973 + $0x10] sm:$0xf]
    %v2979 = vld [vmem:[%s2973 + $0x14] sm:$0xf]
    %v2980 = vld [vmem:[%s2973 + $0x18] sm:$0xf]
    %v2981 = vld [vmem:[%s2973 + $0x1c] sm:$0xf]
    %v2982 = vld [vmem:[%s2973 + $0x20] sm:$0xf]
    %v2983 = vld [vmem:[%s2973 + $0x24] sm:$0xf]
    %v2984 = vld [vmem:[%s2973 + $0x28] sm:$0xf]
    %v2985 = vld [vmem:[%s2973 + $0x2c] sm:$0xf]
    %v2986 = vld [vmem:[%s2973 + $0x30] sm:$0xf]
    %v2987 = vld [vmem:[%s2973 + $0x34] sm:$0xf]
    %v2988 = vld [vmem:[%s2973 + $0x38] sm:$0xf]
    %v2989 = vld [vmem:[%s2973 + $0x3c] sm:$0xf]
    %v2990 = vld [vmem:[%s2973 + $0x40] sm:$0xf]
    %v2991 = vld [vmem:[%s2973 + $0x44] sm:$0xf]
    %v2992 = vld [vmem:[%s2973 + $0x48] sm:$0xf]
    %v2993 = vld [vmem:[%s2973 + $0x4c] sm:$0xf]
    %v2994 = vld [vmem:[%s2973 + $0x50] sm:$0xf]
    %v2995 = vld [vmem:[%s2973 + $0x54] sm:$0xf]
    %v2996 = vld [vmem:[%s2973 + $0x58] sm:$0xf]
    %v2997 = vld [vmem:[%s2973 + $0x5c] sm:$0xf]
    %v3022 = vunpack.c.l.b16 %v2974
    %v3023 = vunpack.c.l.b16 %v2975
    %v3024 = vunpack.c.l.b16 %v2976
    %v3025 = vunpack.c.l.b16 %v2977
    %v3026 = vunpack.c.l.b16 %v2978
    %v3027 = vunpack.c.l.b16 %v2979
    %v3028 = vunpack.c.l.b16 %v2980
    %v3029 = vunpack.c.l.b16 %v2981
    %v3030 = vunpack.c.l.b16 %v2982
    %v3031 = vunpack.c.l.b16 %v2983
    %v3032 = vunpack.c.l.b16 %v2984
    %v3033 = vunpack.c.l.b16 %v2985
    %v3034 = vunpack.c.l.b16 %v2986
    %v3035 = vunpack.c.l.b16 %v2987
    %v3036 = vunpack.c.l.b16 %v2988
    %v3037 = vunpack.c.l.b16 %v2989
    %v3038 = vunpack.c.l.b16 %v2990
    %v3039 = vunpack.c.l.b16 %v2991
    %v3040 = vunpack.c.l.b16 %v2992
    %v3041 = vunpack.c.l.b16 %v2993
    %v3042 = vunpack.c.l.b16 %v2994
    %v3043 = vunpack.c.l.b16 %v2995
    %v3044 = vunpack.c.l.b16 %v2996
    %v3045 = vunpack.c.l.b16 %v2997
    %v3046 = vpack.c.b16 %v3023, %v3022
    %v3047 = vpack.c.b16 %v3025, %v3024
    %v3048 = vpack.c.b16 %v3027, %v3026
    %v3049 = vpack.c.b16 %v3029, %v3028
    %v3050 = vpack.c.b16 %v3031, %v3030
    %v3051 = vpack.c.b16 %v3033, %v3032
    %v3052 = vpack.c.b16 %v3035, %v3034
    %v3053 = vpack.c.b16 %v3037, %v3036
    %v3054 = vpack.c.b16 %v3039, %v3038
    %v3055 = vpack.c.b16 %v3041, %v3040
    %v3056 = vpack.c.b16 %v3043, %v3042
    %v3057 = vpack.c.b16 %v3045, %v3044
    %v3071 = vsel %vm428, %v2972, 0
    %3073 = vmatprep.subr.bf16.mxu0 0
    %3074 = vmatpush1.bf16.msra.mxu0 %v3053
    %3075 = vmatprep.subr.bf16.mxu0 0
    %3076 = vmatpush1.bf16.msra.mxu0 %v3052
    %3077 = vmatprep.subr.bf16.mxu0 0
    %3078 = vmatpush1.bf16.msra.mxu0 %v3051
    %3079 = vmatprep.subr.bf16.mxu0 0
    %3080 = vmatpush1.bf16.msra.mxu0 %v3050
    %3081 = vmatprep.subr.bf16.mxu0 0
    %3082 = vmatpush1.bf16.msra.mxu0 %v3049
    %3083 = vmatprep.subr.bf16.mxu0 0
    %3084 = vmatpush1.bf16.msra.mxu0 %v3048
    %3085 = vmatprep.subr.bf16.mxu0 0
    %3086 = vmatpush1.bf16.msra.mxu0 %v3047
    %3087 = vmatprep.subr.bf16.mxu0 0
    %3088 = vmatpush1.bf16.msra.mxu0 %v3046
    %3089 = vmatprep.subr.bf16.mxu0 0
    %3090 = vmatpush2.bf16.msra.mxu0 0
    %3091 = vmatprep.subr.bf16.mxu0 0
    %3092 = vmatpush2.bf16.msra.mxu0 0
    %3093 = vmatprep.subr.bf16.mxu0 0
    %3094 = vmatpush2.bf16.msra.mxu0 0
    %3095 = vmatprep.subr.bf16.mxu0 0
    %3096 = vmatpush2.bf16.msra.mxu0 0
    %3097 = vmatprep.subr.bf16.mxu0 0
    %3098 = vmatpush2.bf16.msra.mxu0 %v3057
    %3099 = vmatprep.subr.bf16.mxu0 0
    %3100 = vmatpush2.bf16.msra.mxu0 %v3056
    %3101 = vmatprep.subr.bf16.mxu0 0
    %3102 = vmatpush2.bf16.msra.mxu0 %v3055
    %3103 = vmatprep.subr.bf16.mxu0 0
    %3104 = vmatpush2.bf16.msra.mxu0 %v3054
    %3105 = vmatprep.mubr.bf16.mxu0 %v3071
    %3106 = vmatmul.mubr.bf16.gmra.mxu0 %v2971
    %v3107 = vpop.f32.mrf.mxu0
    %v3108 = vadd.f32 0.0, %v3107
    %v3109 = vpop.f32.mrf.mxu0
    %v3110 = vpop.f32.mrf.mxu0
    %v3111 = vadd.f32 0.0, %v3110
    %v3112 = vpop.f32.mrf.mxu0
    %3113 = vdwg.mxu0
    %v3138 = vunpack.c.l.b16 %v2893
    %v3139 = vunpack.c.l.b16 %v2894
    %v3140 = vunpack.c.l.b16 %v2895
    %v3141 = vunpack.c.l.b16 %v2896
    %v3142 = vunpack.c.l.b16 %v2897
    %v3143 = vunpack.c.l.b16 %v2898
    %v3144 = vunpack.c.l.b16 %v2899
    %v3145 = vunpack.c.l.b16 %v2900
    %v3146 = vunpack.c.l.b16 %v2901
    %v3147 = vunpack.c.l.b16 %v2902
    %v3148 = vunpack.c.l.b16 %v2903
    %v3149 = vunpack.c.l.b16 %v2904
    %v3150 = vunpack.c.l.b16 %v2905
    %v3151 = vunpack.c.l.b16 %v2906
    %v3152 = vunpack.c.l.b16 %v2907
    %v3153 = vunpack.c.l.b16 %v2908
    %v3154 = vunpack.c.l.b16 %v2909
    %v3155 = vunpack.c.l.b16 %v2910
    %v3156 = vunpack.c.l.b16 %v2911
    %v3157 = vunpack.c.l.b16 %v2912
    %v3158 = vunpack.c.l.b16 %v2913
    %v3159 = vunpack.c.l.b16 %v2914
    %v3160 = vunpack.c.l.b16 %v2915
    %v3161 = vunpack.c.l.b16 %v2916
    %v3162 = vpack.c.b16 %v3139, %v3138
    %v3163 = vpack.c.b16 %v3141, %v3140
    %v3164 = vpack.c.b16 %v3143, %v3142
    %v3165 = vpack.c.b16 %v3145, %v3144
    %v3166 = vpack.c.b16 %v3147, %v3146
    %v3167 = vpack.c.b16 %v3149, %v3148
    %v3168 = vpack.c.b16 %v3151, %v3150
    %v3169 = vpack.c.b16 %v3153, %v3152
    %v3170 = vpack.c.b16 %v3155, %v3154
    %v3171 = vpack.c.b16 %v3157, %v3156
    %v3172 = vpack.c.b16 %v3159, %v3158
    %v3173 = vpack.c.b16 %v3161, %v3160
    %v3187 = vsel %vm428, %v2892, 0
    %3189 = vmatprep.subr.bf16.mxu0 0
    %3190 = vmatpush1.bf16.msra.mxu0 %v3169
    %3191 = vmatprep.subr.bf16.mxu0 0
    %3192 = vmatpush1.bf16.msra.mxu0 %v3168
    %3193 = vmatprep.subr.bf16.mxu0 0
    %3194 = vmatpush1.bf16.msra.mxu0 %v3167
    %3195 = vmatprep.subr.bf16.mxu0 0
    %3196 = vmatpush1.bf16.msra.mxu0 %v3166
    %3197 = vmatprep.subr.bf16.mxu0 0
    %3198 = vmatpush1.bf16.msra.mxu0 %v3165
    %3199 = vmatprep.subr.bf16.mxu0 0
    %3200 = vmatpush1.bf16.msra.mxu0 %v3164
    %3201 = vmatprep.subr.bf16.mxu0 0
    %3202 = vmatpush1.bf16.msra.mxu0 %v3163
    %3203 = vmatprep.subr.bf16.mxu0 0
    %3204 = vmatpush1.bf16.msra.mxu0 %v3162
    %3205 = vmatprep.subr.bf16.mxu0 0
    %3206 = vmatpush2.bf16.msra.mxu0 0
    %3207 = vmatprep.subr.bf16.mxu0 0
    %3208 = vmatpush2.bf16.msra.mxu0 0
    %3209 = vmatprep.subr.bf16.mxu0 0
    %3210 = vmatpush2.bf16.msra.mxu0 0
    %3211 = vmatprep.subr.bf16.mxu0 0
    %3212 = vmatpush2.bf16.msra.mxu0 0
    %3213 = vmatprep.subr.bf16.mxu0 0
    %3214 = vmatpush2.bf16.msra.mxu0 %v3173
    %3215 = vmatprep.subr.bf16.mxu0 0
    %3216 = vmatpush2.bf16.msra.mxu0 %v3172
    %3217 = vmatprep.subr.bf16.mxu0 0
    %3218 = vmatpush2.bf16.msra.mxu0 %v3171
    %3219 = vmatprep.subr.bf16.mxu0 0
    %3220 = vmatpush2.bf16.msra.mxu0 %v3170
    %3221 = vmatprep.mubr.bf16.mxu0 %v3187
    %3222 = vmatmul.mubr.bf16.gmra.mxu0 %v2891
    %v3223 = vpop.f32.mrf.mxu0
    %v3224 = vadd.f32 %v3108, %v3223
    %v3225 = vpop.f32.mrf.mxu0
    %v3226 = vpop.f32.mrf.mxu0
    %v3227 = vadd.f32 %v3111, %v3226
    %v3228 = vpop.f32.mrf.mxu0
    %3229 = vdwg.mxu0
    %s3230 = scalar_lea.vmem %s7, 16
    %v3231 = vld [vmem:[%s3230] sm:$0xf]
    %v3232 = vld [vmem:[%s3230 + $0x4] sm:$0xf]
    %v3235 = vunpack.c.l.b16 %v3231
    %v3236 = vunpack.c.l.b16 %v3232
    %v3237 = vpack.c.b16 %v3236, %v3235
    %v3239 = vsel %vm2844, %v3237, 0
    %3241 = vmatprep.subr.bf16.mxu0 0
    %3242 = vmatpush1.bf16.msra.mxu0 0
    %3243 = vmatprep.subr.bf16.mxu0 0
    %3244 = vmatpush1.bf16.msra.mxu0 0
    %3245 = vmatprep.subr.bf16.mxu0 0
    %3246 = vmatpush1.bf16.msra.mxu0 0
    %3247 = vmatprep.subr.bf16.mxu0 0
    %3248 = vmatpush1.bf16.msra.mxu0 0
    %3249 = vmatprep.subr.bf16.mxu0 0
    %3250 = vmatpush1.bf16.msra.mxu0 0
    %3251 = vmatprep.subr.bf16.mxu0 0
    %3252 = vmatpush1.bf16.msra.mxu0 0
    %3253 = vmatprep.subr.bf16.mxu0 %v2836
    %3254 = vmatpush1.bf16.msra.mxu0 %v2835
    %3255 = vmatprep.subr.bf16.mxu0 %v2834
    %3256 = vmatpush1.bf16.msra.mxu0 %v2833
    %3257 = vmatprep.subr.bf16.mxu0 0
    %3258 = vmatpush2.bf16.msra.mxu0 0
    %3259 = vmatprep.subr.bf16.mxu0 0
    %3260 = vmatpush2.bf16.msra.mxu0 0
    %3261 = vmatprep.subr.bf16.mxu0 0
    %3262 = vmatpush2.bf16.msra.mxu0 0
    %3263 = vmatprep.subr.bf16.mxu0 0
    %3264 = vmatpush2.bf16.msra.mxu0 0
    %3265 = vmatprep.subr.bf16.mxu0 0
    %3266 = vmatpush2.bf16.msra.mxu0 0
    %3267 = vmatprep.subr.bf16.mxu0 0
    %3268 = vmatpush2.bf16.msra.mxu0 0
    %3269 = vmatprep.subr.bf16.mxu0 0
    %3270 = vmatpush2.bf16.msra.mxu0 0
    %3271 = vmatprep.subr.bf16.mxu0 0
    %3272 = vmatpush2.bf16.msra.mxu0 0
    %3273 = vmatprep.mubr.bf16.mxu0 0
    %3274 = vmatmul.mubr.bf16.gmra.mxu0 %v3239
    %v3275 = vpop.f32.mrf.mxu0
    %v3276 = vadd.f32 0.0, %v3275
    %v3277 = vpop.f32.mrf.mxu0
    %v3278 = vadd.f32 0.0, %v3277
    %v3279 = vpop.f32.mrf.mxu0
    %v3280 = vadd.f32 0.0, %v3279
    %v3281 = vpop.f32.mrf.mxu0
    %v3282 = vadd.f32 0.0, %v3281
    %3283 = vdwg.mxu0
    %v3284 = vpack.c.bf16 %v3280, %v3276
    %v3285 = vpack.c.bf16 %v3282, %v3278
    %s3286 = scalar_lea.vmem %s8, 192
    %v3287 = vld [vmem:[%s3286] sm:$0xf]
    %v3288 = vld [vmem:[%s3286 + $0x4] sm:$0xf]
    %v3289 = vld [vmem:[%s3286 + $0x8] sm:$0xf]
    %v3290 = vld [vmem:[%s3286 + $0xc] sm:$0xf]
    %v3291 = vld [vmem:[%s3286 + $0x10] sm:$0xf]
    %v3292 = vld [vmem:[%s3286 + $0x14] sm:$0xf]
    %v3293 = vld [vmem:[%s3286 + $0x18] sm:$0xf]
    %v3294 = vld [vmem:[%s3286 + $0x1c] sm:$0xf]
    %v3295 = vld [vmem:[%s3286 + $0x20] sm:$0xf]
    %v3296 = vld [vmem:[%s3286 + $0x24] sm:$0xf]
    %v3297 = vld [vmem:[%s3286 + $0x28] sm:$0xf]
    %v3298 = vld [vmem:[%s3286 + $0x2c] sm:$0xf]
    %v3299 = vld [vmem:[%s3286 + $0x30] sm:$0xf]
    %v3300 = vld [vmem:[%s3286 + $0x34] sm:$0xf]
    %v3301 = vld [vmem:[%s3286 + $0x38] sm:$0xf]
    %v3302 = vld [vmem:[%s3286 + $0x3c] sm:$0xf]
    %v3303 = vld [vmem:[%s3286 + $0x40] sm:$0xf]
    %v3304 = vld [vmem:[%s3286 + $0x44] sm:$0xf]
    %v3305 = vld [vmem:[%s3286 + $0x48] sm:$0xf]
    %v3306 = vld [vmem:[%s3286 + $0x4c] sm:$0xf]
    %v3307 = vld [vmem:[%s3286 + $0x50] sm:$0xf]
    %v3308 = vld [vmem:[%s3286 + $0x54] sm:$0xf]
    %v3309 = vld [vmem:[%s3286 + $0x58] sm:$0xf]
    %v3310 = vld [vmem:[%s3286 + $0x5c] sm:$0xf]
    %v3335 = vunpack.c.l.b16 %v3287
    %v3336 = vunpack.c.l.b16 %v3288
    %v3337 = vunpack.c.l.b16 %v3289
    %v3338 = vunpack.c.l.b16 %v3290
    %v3339 = vunpack.c.l.b16 %v3291
    %v3340 = vunpack.c.l.b16 %v3292
    %v3341 = vunpack.c.l.b16 %v3293
    %v3342 = vunpack.c.l.b16 %v3294
    %v3343 = vunpack.c.l.b16 %v3295
    %v3344 = vunpack.c.l.b16 %v3296
    %v3345 = vunpack.c.l.b16 %v3297
    %v3346 = vunpack.c.l.b16 %v3298
    %v3347 = vunpack.c.l.b16 %v3299
    %v3348 = vunpack.c.l.b16 %v3300
    %v3349 = vunpack.c.l.b16 %v3301
    %v3350 = vunpack.c.l.b16 %v3302
    %v3351 = vunpack.c.l.b16 %v3303
    %v3352 = vunpack.c.l.b16 %v3304
    %v3353 = vunpack.c.l.b16 %v3305
    %v3354 = vunpack.c.l.b16 %v3306
    %v3355 = vunpack.c.l.b16 %v3307
    %v3356 = vunpack.c.l.b16 %v3308
    %v3357 = vunpack.c.l.b16 %v3309
    %v3358 = vunpack.c.l.b16 %v3310
    %v3359 = vpack.c.b16 %v3336, %v3335
    %v3360 = vpack.c.b16 %v3338, %v3337
    %v3361 = vpack.c.b16 %v3340, %v3339
    %v3362 = vpack.c.b16 %v3342, %v3341
    %v3363 = vpack.c.b16 %v3344, %v3343
    %v3364 = vpack.c.b16 %v3346, %v3345
    %v3365 = vpack.c.b16 %v3348, %v3347
    %v3366 = vpack.c.b16 %v3350, %v3349
    %v3367 = vpack.c.b16 %v3352, %v3351
    %v3368 = vpack.c.b16 %v3354, %v3353
    %v3369 = vpack.c.b16 %v3356, %v3355
    %v3370 = vpack.c.b16 %v3358, %v3357
    %v3384 = vsel %vm428, %v3285, 0
    %3386 = vmatprep.subr.bf16.mxu0 0
    %3387 = vmatpush1.bf16.msra.mxu0 %v3366
    %3388 = vmatprep.subr.bf16.mxu0 0
    %3389 = vmatpush1.bf16.msra.mxu0 %v3365
    %3390 = vmatprep.subr.bf16.mxu0 0
    %3391 = vmatpush1.bf16.msra.mxu0 %v3364
    %3392 = vmatprep.subr.bf16.mxu0 0
    %3393 = vmatpush1.bf16.msra.mxu0 %v3363
    %3394 = vmatprep.subr.bf16.mxu0 0
    %3395 = vmatpush1.bf16.msra.mxu0 %v3362
    %3396 = vmatprep.subr.bf16.mxu0 0
    %3397 = vmatpush1.bf16.msra.mxu0 %v3361
    %3398 = vmatprep.subr.bf16.mxu0 0
    %3399 = vmatpush1.bf16.msra.mxu0 %v3360
    %3400 = vmatprep.subr.bf16.mxu0 0
    %3401 = vmatpush1.bf16.msra.mxu0 %v3359
    %3402 = vmatprep.subr.bf16.mxu0 0
    %3403 = vmatpush2.bf16.msra.mxu0 0
    %3404 = vmatprep.subr.bf16.mxu0 0
    %3405 = vmatpush2.bf16.msra.mxu0 0
    %3406 = vmatprep.subr.bf16.mxu0 0
    %3407 = vmatpush2.bf16.msra.mxu0 0
    %3408 = vmatprep.subr.bf16.mxu0 0
    %3409 = vmatpush2.bf16.msra.mxu0 0
    %3410 = vmatprep.subr.bf16.mxu0 0
    %3411 = vmatpush2.bf16.msra.mxu0 %v3370
    %3412 = vmatprep.subr.bf16.mxu0 0
    %3413 = vmatpush2.bf16.msra.mxu0 %v3369
    %3414 = vmatprep.subr.bf16.mxu0 0
    %3415 = vmatpush2.bf16.msra.mxu0 %v3368
    %3416 = vmatprep.subr.bf16.mxu0 0
    %3417 = vmatpush2.bf16.msra.mxu0 %v3367
    %3418 = vmatprep.mubr.bf16.mxu0 %v3384
    %3419 = vmatmul.mubr.bf16.gmra.mxu0 %v3284
    %v3420 = vpop.f32.mrf.mxu0
    %v3421 = vadd.f32 0.0, %v3420
    %v3422 = vpop.f32.mrf.mxu0
    %v3423 = vpop.f32.mrf.mxu0
    %v3424 = vadd.f32 0.0, %v3423
    %v3425 = vpop.f32.mrf.mxu0
    %3426 = vdwg.mxu0
    %v3427 = vadd.f32 %v3224, %v3421
    %v3428 = vadd.f32 %v3227, %v3424
    %v3429 = vld [vmem:[%s9] sm:$0x1]
    %v3431 = vlaneseq
    %v3432 = vshrl.u32 %v3431, 7
    %v3433 = vsub.s32 0, %v3432
    %v3434 = vrot.slane %v3429, %v3433
    %v3436 = vadd.f32 %v3427, %v3434
    %v3437 = vadd.f32 %v3428, %v3434
    %v3438 = vmax.f32 %v3436, 0.0
    %v3439 = vmax.f32 %v3437, 0.0
    %v3440 = vpack.c.bf16 %v3439, %v3438
    %v3441 = vld [vmem:[%s10] sm:$0xf]
    %vm3442 = vcmask 130048
    %v3444 = vsel %vm3442, %v3441, 0
    %3446 = vmatprep.subr.bf16.mxu0 0
    %3447 = vmatpush1.bf16.msra.mxu0 0
    %3448 = vmatprep.subr.bf16.mxu0 0
    %3449 = vmatpush1.bf16.msra.mxu0 0
    %3450 = vmatprep.subr.bf16.mxu0 0
    %3451 = vmatpush1.bf16.msra.mxu0 0
    %3452 = vmatprep.subr.bf16.mxu0 0
    %3453 = vmatpush1.bf16.msra.mxu0 0
    %3454 = vmatprep.subr.bf16.mxu0 0
    %3455 = vmatpush1.bf16.msra.mxu0 0
    %3456 = vmatprep.subr.bf16.mxu0 0
    %3457 = vmatpush1.bf16.msra.mxu0 0
    %3458 = vmatprep.subr.bf16.mxu0 0
    %3459 = vmatpush1.bf16.msra.mxu0 0
    %3460 = vmatprep.subr.bf16.mxu0 0
    %3461 = vmatpush1.bf16.msra.mxu0 %v3440
    %3462 = vmatprep.subr.bf16.mxu0 0
    %3463 = vmatpush2.bf16.msra.mxu0 0
    %3464 = vmatprep.subr.bf16.mxu0 0
    %3465 = vmatpush2.bf16.msra.mxu0 0
    %3466 = vmatprep.subr.bf16.mxu0 0
    %3467 = vmatpush2.bf16.msra.mxu0 0
    %3468 = vmatprep.subr.bf16.mxu0 0
    %3469 = vmatpush2.bf16.msra.mxu0 0
    %3470 = vmatprep.subr.bf16.mxu0 0
    %3471 = vmatpush2.bf16.msra.mxu0 0
    %3472 = vmatprep.subr.bf16.mxu0 0
    %3473 = vmatpush2.bf16.msra.mxu0 0
    %3474 = vmatprep.subr.bf16.mxu0 0
    %3475 = vmatpush2.bf16.msra.mxu0 0
    %3476 = vmatprep.subr.bf16.mxu0 0
    %3477 = vmatpush2.bf16.msra.mxu0 0
    %3478 = vmatprep.mubr.bf16.mxu0 0
    %3479 = vmatmul.mubr.bf16.gmra.mxu0 %v3444
    %v3480 = vpop.f32.mrf.mxu0
    %v3481 = vadd.f32 0.0, %v3480
    %v3482 = vpop.f32.mrf.mxu0
    %v3483 = vpop.f32.mrf.mxu0
    %v3484 = vpop.f32.mrf.mxu0
    %3485 = vdwg.mxu0
    %v3486 = vpack.c.bf16 %v3481, %v3481
    %v3487 = vld [vmem:[%s11] sm:$0xf]
    %v3488 = vld [vmem:[%s11 + $0x4] sm:$0xf]
    %v3489 = vld [vmem:[%s11 + $0x8] sm:$0xf]
    %v3490 = vld [vmem:[%s11 + $0xc] sm:$0xf]
    %v3491 = vld [vmem:[%s11 + $0x10] sm:$0xf]
    %v3492 = vld [vmem:[%s11 + $0x14] sm:$0xf]
    %v3493 = vld [vmem:[%s11 + $0x18] sm:$0xf]
    %v3494 = vld [vmem:[%s11 + $0x1c] sm:$0xf]
    %v3495 = vld [vmem:[%s11 + $0x20] sm:$0xf]
    %v3496 = vld [vmem:[%s11 + $0x24] sm:$0xf]
    %v3497 = vld [vmem:[%s11 + $0x28] sm:$0xf]
    %v3498 = vld [vmem:[%s11 + $0x2c] sm:$0xf]
    %v3499 = vld [vmem:[%s11 + $0x30] sm:$0xf]
    %v3500 = vld [vmem:[%s11 + $0x34] sm:$0xf]
    %v3501 = vld [vmem:[%s11 + $0x38] sm:$0xf]
    %v3502 = vld [vmem:[%s11 + $0x3c] sm:$0xf]
    %s3503 = scalar_lea.vmem %s10, 4
    %v3504 = vld [vmem:[%s3503] sm:$0xf]
    %v3506 = vsel %vm3442, %v3504, 0
    %3508 = vmatprep.subr.bf16.mxu0 0
    %3509 = vmatpush1.bf16.msra.mxu0 0
    %3510 = vmatprep.subr.bf16.mxu0 0
    %3511 = vmatpush1.bf16.msra.mxu0 0
    %3512 = vmatprep.subr.bf16.mxu0 0
    %3513 = vmatpush1.bf16.msra.mxu0 0
    %3514 = vmatprep.subr.bf16.mxu0 0
    %3515 = vmatpush1.bf16.msra.mxu0 0
    %3516 = vmatprep.subr.bf16.mxu0 0
    %3517 = vmatpush1.bf16.msra.mxu0 0
    %3518 = vmatprep.subr.bf16.mxu0 0
    %3519 = vmatpush1.bf16.msra.mxu0 0
    %3520 = vmatprep.subr.bf16.mxu0 0
    %3521 = vmatpush1.bf16.msra.mxu0 0
    %3522 = vmatprep.subr.bf16.mxu0 0
    %3523 = vmatpush1.bf16.msra.mxu0 %v3440
    %3524 = vmatprep.subr.bf16.mxu0 0
    %3525 = vmatpush2.bf16.msra.mxu0 0
    %3526 = vmatprep.subr.bf16.mxu0 0
    %3527 = vmatpush2.bf16.msra.mxu0 0
    %3528 = vmatprep.subr.bf16.mxu0 0
    %3529 = vmatpush2.bf16.msra.mxu0 0
    %3530 = vmatprep.subr.bf16.mxu0 0
    %3531 = vmatpush2.bf16.msra.mxu0 0
    %3532 = vmatprep.subr.bf16.mxu0 0
    %3533 = vmatpush2.bf16.msra.mxu0 0
    %3534 = vmatprep.subr.bf16.mxu0 0
    %3535 = vmatpush2.bf16.msra.mxu0 0
    %3536 = vmatprep.subr.bf16.mxu0 0
    %3537 = vmatpush2.bf16.msra.mxu0 0
    %3538 = vmatprep.subr.bf16.mxu0 0
    %3539 = vmatpush2.bf16.msra.mxu0 0
    %3540 = vmatprep.mubr.bf16.mxu0 0
    %3541 = vmatmul.mubr.bf16.gmra.mxu0 %v3506
    %v3542 = vpop.f32.mrf.mxu0
    %v3543 = vadd.f32 0.0, %v3542
    %v3544 = vpop.f32.mrf.mxu0
    %v3545 = vpop.f32.mrf.mxu0
    %v3546 = vpop.f32.mrf.mxu0
    %3547 = vdwg.mxu0
    %v3548 = vpack.c.bf16 %v3543, %v3543
    %s3549 = scalar_lea.vmem %s11, 64
    %v3550 = vld [vmem:[%s3549] sm:$0xf]
    %v3551 = vld [vmem:[%s3549 + $0x4] sm:$0xf]
    %v3552 = vld [vmem:[%s3549 + $0x8] sm:$0xf]
    %v3553 = vld [vmem:[%s3549 + $0xc] sm:$0xf]
    %v3554 = vld [vmem:[%s3549 + $0x10] sm:$0xf]
    %v3555 = vld [vmem:[%s3549 + $0x14] sm:$0xf]
    %v3556 = vld [vmem:[%s3549 + $0x18] sm:$0xf]
    %v3557 = vld [vmem:[%s3549 + $0x1c] sm:$0xf]
    %v3558 = vld [vmem:[%s3549 + $0x20] sm:$0xf]
    %v3559 = vld [vmem:[%s3549 + $0x24] sm:$0xf]
    %v3560 = vld [vmem:[%s3549 + $0x28] sm:$0xf]
    %v3561 = vld [vmem:[%s3549 + $0x2c] sm:$0xf]
    %v3562 = vld [vmem:[%s3549 + $0x30] sm:$0xf]
    %v3563 = vld [vmem:[%s3549 + $0x34] sm:$0xf]
    %v3564 = vld [vmem:[%s3549 + $0x38] sm:$0xf]
    %v3565 = vld [vmem:[%s3549 + $0x3c] sm:$0xf]
    %v3582 = vunpack.c.l.b16 %v3550
    %v3583 = vunpack.c.l.b16 %v3551
    %v3584 = vunpack.c.l.b16 %v3552
    %v3585 = vunpack.c.l.b16 %v3553
    %v3586 = vunpack.c.l.b16 %v3554
    %v3587 = vunpack.c.l.b16 %v3555
    %v3588 = vunpack.c.l.b16 %v3556
    %v3589 = vunpack.c.l.b16 %v3557
    %v3590 = vunpack.c.l.b16 %v3558
    %v3591 = vunpack.c.l.b16 %v3559
    %v3592 = vunpack.c.l.b16 %v3560
    %v3593 = vunpack.c.l.b16 %v3561
    %v3594 = vunpack.c.l.b16 %v3562
    %v3595 = vunpack.c.l.b16 %v3563
    %v3596 = vunpack.c.l.b16 %v3564
    %v3597 = vunpack.c.l.b16 %v3565
    %v3598 = vpack.c.b16 %v3583, %v3582
    %v3599 = vpack.c.b16 %v3585, %v3584
    %v3600 = vpack.c.b16 %v3587, %v3586
    %v3601 = vpack.c.b16 %v3589, %v3588
    %v3602 = vpack.c.b16 %v3591, %v3590
    %v3603 = vpack.c.b16 %v3593, %v3592
    %v3604 = vpack.c.b16 %v3595, %v3594
    %v3605 = vpack.c.b16 %v3597, %v3596
    %3614 = vmatprep.subr.bf16.mxu0 0
    %3615 = vmatpush1.bf16.msra.mxu0 %v3605
    %3616 = vmatprep.subr.bf16.mxu0 0
    %3617 = vmatpush1.bf16.msra.mxu0 %v3604
    %3618 = vmatprep.subr.bf16.mxu0 0
    %3619 = vmatpush1.bf16.msra.mxu0 %v3603
    %3620 = vmatprep.subr.bf16.mxu0 0
    %3621 = vmatpush1.bf16.msra.mxu0 %v3602
    %3622 = vmatprep.subr.bf16.mxu0 0
    %3623 = vmatpush1.bf16.msra.mxu0 %v3601
    %3624 = vmatprep.subr.bf16.mxu0 0
    %3625 = vmatpush1.bf16.msra.mxu0 %v3600
    %3626 = vmatprep.subr.bf16.mxu0 0
    %3627 = vmatpush1.bf16.msra.mxu0 %v3599
    %3628 = vmatprep.subr.bf16.mxu0 0
    %3629 = vmatpush1.bf16.msra.mxu0 %v3598
    %3630 = vmatprep.subr.bf16.mxu0 0
    %3631 = vmatpush2.bf16.msra.mxu0 0
    %3632 = vmatprep.subr.bf16.mxu0 0
    %3633 = vmatpush2.bf16.msra.mxu0 0
    %3634 = vmatprep.subr.bf16.mxu0 0
    %3635 = vmatpush2.bf16.msra.mxu0 0
    %3636 = vmatprep.subr.bf16.mxu0 0
    %3637 = vmatpush2.bf16.msra.mxu0 0
    %3638 = vmatprep.subr.bf16.mxu0 0
    %3639 = vmatpush2.bf16.msra.mxu0 0
    %3640 = vmatprep.subr.bf16.mxu0 0
    %3641 = vmatpush2.bf16.msra.mxu0 0
    %3642 = vmatprep.subr.bf16.mxu0 0
    %3643 = vmatpush2.bf16.msra.mxu0 0
    %3644 = vmatprep.subr.bf16.mxu0 0
    %3645 = vmatpush2.bf16.msra.mxu0 0
    %3646 = vmatprep.mubr.bf16.mxu0 0
    %3647 = vmatmul.mubr.bf16.gmra.mxu0 %v3548
    %v3648 = vpop.f32.mrf.mxu0
    %v3649 = vadd.f32 0.0, %v3648
    %v3650 = vpop.f32.mrf.mxu0
    %v3651 = vpop.f32.mrf.mxu0
    %v3652 = vpop.f32.mrf.mxu0
    %3653 = vdwg.mxu0
    %v3670 = vunpack.c.l.b16 %v3487
    %v3671 = vunpack.c.l.b16 %v3488
    %v3672 = vunpack.c.l.b16 %v3489
    %v3673 = vunpack.c.l.b16 %v3490
    %v3674 = vunpack.c.l.b16 %v3491
    %v3675 = vunpack.c.l.b16 %v3492
    %v3676 = vunpack.c.l.b16 %v3493
    %v3677 = vunpack.c.l.b16 %v3494
    %v3678 = vunpack.c.l.b16 %v3495
    %v3679 = vunpack.c.l.b16 %v3496
    %v3680 = vunpack.c.l.b16 %v3497
    %v3681 = vunpack.c.l.b16 %v3498
    %v3682 = vunpack.c.l.b16 %v3499
    %v3683 = vunpack.c.l.b16 %v3500
    %v3684 = vunpack.c.l.b16 %v3501
    %v3685 = vunpack.c.l.b16 %v3502
    %v3686 = vpack.c.b16 %v3671, %v3670
    %v3687 = vpack.c.b16 %v3673, %v3672
    %v3688 = vpack.c.b16 %v3675, %v3674
    %v3689 = vpack.c.b16 %v3677, %v3676
    %v3690 = vpack.c.b16 %v3679, %v3678
    %v3691 = vpack.c.b16 %v3681, %v3680
    %v3692 = vpack.c.b16 %v3683, %v3682
    %v3693 = vpack.c.b16 %v3685, %v3684
    %3702 = vmatprep.subr.bf16.mxu0 0
    %3703 = vmatpush1.bf16.msra.mxu0 %v3693
    %3704 = vmatprep.subr.bf16.mxu0 0
    %3705 = vmatpush1.bf16.msra.mxu0 %v3692
    %3706 = vmatprep.subr.bf16.mxu0 0
    %3707 = vmatpush1.bf16.msra.mxu0 %v3691
    %3708 = vmatprep.subr.bf16.mxu0 0
    %3709 = vmatpush1.bf16.msra.mxu0 %v3690
    %3710 = vmatprep.subr.bf16.mxu0 0
    %3711 = vmatpush1.bf16.msra.mxu0 %v3689
    %3712 = vmatprep.subr.bf16.mxu0 0
    %3713 = vmatpush1.bf16.msra.mxu0 %v3688
    %3714 = vmatprep.subr.bf16.mxu0 0
    %3715 = vmatpush1.bf16.msra.mxu0 %v3687
    %3716 = vmatprep.subr.bf16.mxu0 0
    %3717 = vmatpush1.bf16.msra.mxu0 %v3686
    %3718 = vmatprep.subr.bf16.mxu0 0
    %3719 = vmatpush2.bf16.msra.mxu0 0
    %3720 = vmatprep.subr.bf16.mxu0 0
    %3721 = vmatpush2.bf16.msra.mxu0 0
    %3722 = vmatprep.subr.bf16.mxu0 0
    %3723 = vmatpush2.bf16.msra.mxu0 0
    %3724 = vmatprep.subr.bf16.mxu0 0
    %3725 = vmatpush2.bf16.msra.mxu0 0
    %3726 = vmatprep.subr.bf16.mxu0 0
    %3727 = vmatpush2.bf16.msra.mxu0 0
    %3728 = vmatprep.subr.bf16.mxu0 0
    %3729 = vmatpush2.bf16.msra.mxu0 0
    %3730 = vmatprep.subr.bf16.mxu0 0
    %3731 = vmatpush2.bf16.msra.mxu0 0
    %3732 = vmatprep.subr.bf16.mxu0 0
    %3733 = vmatpush2.bf16.msra.mxu0 0
    %3734 = vmatprep.mubr.bf16.mxu0 0
    %3735 = vmatmul.mubr.bf16.gmra.mxu0 %v3486
    %v3736 = vpop.f32.mrf.mxu0
    %v3737 = vadd.f32 %v3649, %v3736
    %v3738 = vpop.f32.mrf.mxu0
    %v3739 = vpop.f32.mrf.mxu0
    %v3740 = vpop.f32.mrf.mxu0
    %3741 = vdwg.mxu0
    %s3742 = scalar_lea.vmem %s10, 8
    %v3743 = vld [vmem:[%s3742] sm:$0xf]
    %v3745 = vsel %vm3442, %v3743, 0
    %3747 = vmatprep.subr.bf16.mxu0 0
    %3748 = vmatpush1.bf16.msra.mxu0 0
    %3749 = vmatprep.subr.bf16.mxu0 0
    %3750 = vmatpush1.bf16.msra.mxu0 0
    %3751 = vmatprep.subr.bf16.mxu0 0
    %3752 = vmatpush1.bf16.msra.mxu0 0
    %3753 = vmatprep.subr.bf16.mxu0 0
    %3754 = vmatpush1.bf16.msra.mxu0 0
    %3755 = vmatprep.subr.bf16.mxu0 0
    %3756 = vmatpush1.bf16.msra.mxu0 0
    %3757 = vmatprep.subr.bf16.mxu0 0
    %3758 = vmatpush1.bf16.msra.mxu0 0
    %3759 = vmatprep.subr.bf16.mxu0 0
    %3760 = vmatpush1.bf16.msra.mxu0 0
    %3761 = vmatprep.subr.bf16.mxu0 0
    %3762 = vmatpush1.bf16.msra.mxu0 %v3440
    %3763 = vmatprep.subr.bf16.mxu0 0
    %3764 = vmatpush2.bf16.msra.mxu0 0
    %3765 = vmatprep.subr.bf16.mxu0 0
    %3766 = vmatpush2.bf16.msra.mxu0 0
    %3767 = vmatprep.subr.bf16.mxu0 0
    %3768 = vmatpush2.bf16.msra.mxu0 0
    %3769 = vmatprep.subr.bf16.mxu0 0
    %3770 = vmatpush2.bf16.msra.mxu0 0
    %3771 = vmatprep.subr.bf16.mxu0 0
    %3772 = vmatpush2.bf16.msra.mxu0 0
    %3773 = vmatprep.subr.bf16.mxu0 0
    %3774 = vmatpush2.bf16.msra.mxu0 0
    %3775 = vmatprep.subr.bf16.mxu0 0
    %3776 = vmatpush2.bf16.msra.mxu0 0
    %3777 = vmatprep.subr.bf16.mxu0 0
    %3778 = vmatpush2.bf16.msra.mxu0 0
    %3779 = vmatprep.mubr.bf16.mxu0 0
    %3780 = vmatmul.mubr.bf16.gmra.mxu0 %v3745
    %v3781 = vpop.f32.mrf.mxu0
    %v3782 = vadd.f32 0.0, %v3781
    %v3783 = vpop.f32.mrf.mxu0
    %v3784 = vpop.f32.mrf.mxu0
    %v3785 = vpop.f32.mrf.mxu0
    %3786 = vdwg.mxu0
    %v3787 = vpack.c.bf16 %v3782, %v3782
    %s3788 = scalar_lea.vmem %s11, 128
    %v3789 = vld [vmem:[%s3788] sm:$0xf]
    %v3790 = vld [vmem:[%s3788 + $0x4] sm:$0xf]
    %v3791 = vld [vmem:[%s3788 + $0x8] sm:$0xf]
    %v3792 = vld [vmem:[%s3788 + $0xc] sm:$0xf]
    %v3793 = vld [vmem:[%s3788 + $0x10] sm:$0xf]
    %v3794 = vld [vmem:[%s3788 + $0x14] sm:$0xf]
    %v3795 = vld [vmem:[%s3788 + $0x18] sm:$0xf]
    %v3796 = vld [vmem:[%s3788 + $0x1c] sm:$0xf]
    %v3797 = vld [vmem:[%s3788 + $0x20] sm:$0xf]
    %v3798 = vld [vmem:[%s3788 + $0x24] sm:$0xf]
    %v3799 = vld [vmem:[%s3788 + $0x28] sm:$0xf]
    %v3800 = vld [vmem:[%s3788 + $0x2c] sm:$0xf]
    %v3801 = vld [vmem:[%s3788 + $0x30] sm:$0xf]
    %v3802 = vld [vmem:[%s3788 + $0x34] sm:$0xf]
    %v3803 = vld [vmem:[%s3788 + $0x38] sm:$0xf]
    %v3804 = vld [vmem:[%s3788 + $0x3c] sm:$0xf]
    %v3821 = vunpack.c.l.b16 %v3789
    %v3822 = vunpack.c.l.b16 %v3790
    %v3823 = vunpack.c.l.b16 %v3791
    %v3824 = vunpack.c.l.b16 %v3792
    %v3825 = vunpack.c.l.b16 %v3793
    %v3826 = vunpack.c.l.b16 %v3794
    %v3827 = vunpack.c.l.b16 %v3795
    %v3828 = vunpack.c.l.b16 %v3796
    %v3829 = vunpack.c.l.b16 %v3797
    %v3830 = vunpack.c.l.b16 %v3798
    %v3831 = vunpack.c.l.b16 %v3799
    %v3832 = vunpack.c.l.b16 %v3800
    %v3833 = vunpack.c.l.b16 %v3801
    %v3834 = vunpack.c.l.b16 %v3802
    %v3835 = vunpack.c.l.b16 %v3803
    %v3836 = vunpack.c.l.b16 %v3804
    %v3837 = vpack.c.b16 %v3822, %v3821
    %v3838 = vpack.c.b16 %v3824, %v3823
    %v3839 = vpack.c.b16 %v3826, %v3825
    %v3840 = vpack.c.b16 %v3828, %v3827
    %v3841 = vpack.c.b16 %v3830, %v3829
    %v3842 = vpack.c.b16 %v3832, %v3831
    %v3843 = vpack.c.b16 %v3834, %v3833
    %v3844 = vpack.c.b16 %v3836, %v3835
    %3853 = vmatprep.subr.bf16.mxu0 0
    %3854 = vmatpush1.bf16.msra.mxu0 %v3844
    %3855 = vmatprep.subr.bf16.mxu0 0
    %3856 = vmatpush1.bf16.msra.mxu0 %v3843
    %3857 = vmatprep.subr.bf16.mxu0 0
    %3858 = vmatpush1.bf16.msra.mxu0 %v3842
    %3859 = vmatprep.subr.bf16.mxu0 0
    %3860 = vmatpush1.bf16.msra.mxu0 %v3841
    %3861 = vmatprep.subr.bf16.mxu0 0
    %3862 = vmatpush1.bf16.msra.mxu0 %v3840
    %3863 = vmatprep.subr.bf16.mxu0 0
    %3864 = vmatpush1.bf16.msra.mxu0 %v3839
    %3865 = vmatprep.subr.bf16.mxu0 0
    %3866 = vmatpush1.bf16.msra.mxu0 %v3838
    %3867 = vmatprep.subr.bf16.mxu0 0
    %3868 = vmatpush1.bf16.msra.mxu0 %v3837
    %3869 = vmatprep.subr.bf16.mxu0 0
    %3870 = vmatpush2.bf16.msra.mxu0 0
    %3871 = vmatprep.subr.bf16.mxu0 0
    %3872 = vmatpush2.bf16.msra.mxu0 0
    %3873 = vmatprep.subr.bf16.mxu0 0
    %3874 = vmatpush2.bf16.msra.mxu0 0
    %3875 = vmatprep.subr.bf16.mxu0 0
    %3876 = vmatpush2.bf16.msra.mxu0 0
    %3877 = vmatprep.subr.bf16.mxu0 0
    %3878 = vmatpush2.bf16.msra.mxu0 0
    %3879 = vmatprep.subr.bf16.mxu0 0
    %3880 = vmatpush2.bf16.msra.mxu0 0
    %3881 = vmatprep.subr.bf16.mxu0 0
    %3882 = vmatpush2.bf16.msra.mxu0 0
    %3883 = vmatprep.subr.bf16.mxu0 0
    %3884 = vmatpush2.bf16.msra.mxu0 0
    %3885 = vmatprep.mubr.bf16.mxu0 0
    %3886 = vmatmul.mubr.bf16.gmra.mxu0 %v3787
    %v3887 = vpop.f32.mrf.mxu0
    %v3888 = vadd.f32 0.0, %v3887
    %v3889 = vpop.f32.mrf.mxu0
    %v3890 = vpop.f32.mrf.mxu0
    %v3891 = vpop.f32.mrf.mxu0
    %3892 = vdwg.mxu0
    %v3893 = vadd.f32 %v3737, %v3888
    %v3894 = vld [vmem:[%s12] sm:$0x1]
    %v3896 = vlaneseq
    %v3897 = vshrl.u32 %v3896, 7
    %v3898 = vsub.s32 0, %v3897
    %v3899 = vrot.slane %v3894, %v3898
    %v3901 = vadd.f32 %v3893, %v3899
    %v3902 = vmax.f32 %v3901, 0.0
    %v3903 = vpack.c.bf16 %v3902, %v3902
    %v3904 = vld [vmem:[%s13] sm:$0x3]
    %vm3905 = vcmask 64512
    %v3907 = vsel %vm3905, %v3904, 0
    %vm3909 = vcmask 1043456
    %v3911 = vsel %vm3909, %v3903, 0
    %3913 = vmatprep.subr.bf16.mxu0 0
    %3914 = vmatpush1.bf16.msra.mxu0 0
    %3915 = vmatprep.subr.bf16.mxu0 0
    %3916 = vmatpush1.bf16.msra.mxu0 0
    %3917 = vmatprep.subr.bf16.mxu0 0
    %3918 = vmatpush1.bf16.msra.mxu0 0
    %3919 = vmatprep.subr.bf16.mxu0 0
    %3920 = vmatpush1.bf16.msra.mxu0 0
    %3921 = vmatprep.subr.bf16.mxu0 0
    %3922 = vmatpush1.bf16.msra.mxu0 0
    %3923 = vmatprep.subr.bf16.mxu0 0
    %3924 = vmatpush1.bf16.msra.mxu0 0
    %3925 = vmatprep.subr.bf16.mxu0 0
    %3926 = vmatpush1.bf16.msra.mxu0 0
    %3927 = vmatprep.subr.bf16.mxu0 0
    %3928 = vmatpush1.bf16.msra.mxu0 %v3911
    %3929 = vmatprep.subr.bf16.mxu0 0
    %3930 = vmatpush2.bf16.msra.mxu0 0
    %3931 = vmatprep.subr.bf16.mxu0 0
    %3932 = vmatpush2.bf16.msra.mxu0 0
    %3933 = vmatprep.subr.bf16.mxu0 0
    %3934 = vmatpush2.bf16.msra.mxu0 0
    %3935 = vmatprep.subr.bf16.mxu0 0
    %3936 = vmatpush2.bf16.msra.mxu0 0
    %3937 = vmatprep.subr.bf16.mxu0 0
    %3938 = vmatpush2.bf16.msra.mxu0 0
    %3939 = vmatprep.subr.bf16.mxu0 0
    %3940 = vmatpush2.bf16.msra.mxu0 0
    %3941 = vmatprep.subr.bf16.mxu0 0
    %3942 = vmatpush2.bf16.msra.mxu0 0
    %3943 = vmatprep.subr.bf16.mxu0 0
    %3944 = vmatpush2.bf16.msra.mxu0 0
    %3945 = vmatprep.mubr.bf16.mxu0 0
    %3946 = vmatmul.mubr.bf16.gmra.mxu0 %v3907
    %v3947 = vpop.f32.mrf.mxu0
    %v3948 = vadd.f32 0.0, %v3947
    %v3949 = vpop.f32.mrf.mxu0
    %v3950 = vpop.f32.mrf.mxu0
    %v3951 = vpop.f32.mrf.mxu0
    %3952 = vdwg.mxu0
    %v3953 = vpack.c.bf16 %v3948, %v3948
    %v3954 = vld [vmem:[%s14] sm:$0xf]
    %v3955 = vld [vmem:[%s14 + $0x4] sm:$0xf]
    %v3956 = vld [vmem:[%s14 + $0x8] sm:$0xf]
    %v3957 = vld [vmem:[%s14 + $0xc] sm:$0xf]
    %v3958 = vld [vmem:[%s14 + $0x10] sm:$0xf]
    %v3959 = vld [vmem:[%s14 + $0x14] sm:$0xf]
    %v3960 = vld [vmem:[%s14 + $0x18] sm:$0xf]
    %v3961 = vld [vmem:[%s14 + $0x1c] sm:$0xf]
    %v3962 = vld [vmem:[%s14 + $0x20] sm:$0xf]
    %s3963 = scalar_lea.vmem %s13, 2
    %v3964 = vld [vmem:[%s3963] sm:$0x3]
    %v3966 = vsel %vm3905, %v3964, 0
    %3968 = vmatprep.subr.bf16.mxu0 0
    %3969 = vmatpush1.bf16.msra.mxu0 0
    %3970 = vmatprep.subr.bf16.mxu0 0
    %3971 = vmatpush1.bf16.msra.mxu0 0
    %3972 = vmatprep.subr.bf16.mxu0 0
    %3973 = vmatpush1.bf16.msra.mxu0 0
    %3974 = vmatprep.subr.bf16.mxu0 0
    %3975 = vmatpush1.bf16.msra.mxu0 0
    %3976 = vmatprep.subr.bf16.mxu0 0
    %3977 = vmatpush1.bf16.msra.mxu0 0
    %3978 = vmatprep.subr.bf16.mxu0 0
    %3979 = vmatpush1.bf16.msra.mxu0 0
    %3980 = vmatprep.subr.bf16.mxu0 0
    %3981 = vmatpush1.bf16.msra.mxu0 0
    %3982 = vmatprep.subr.bf16.mxu0 0
    %3983 = vmatpush1.bf16.msra.mxu0 %v3911
    %3984 = vmatprep.subr.bf16.mxu0 0
    %3985 = vmatpush2.bf16.msra.mxu0 0
    %3986 = vmatprep.subr.bf16.mxu0 0
    %3987 = vmatpush2.bf16.msra.mxu0 0
    %3988 = vmatprep.subr.bf16.mxu0 0
    %3989 = vmatpush2.bf16.msra.mxu0 0
    %3990 = vmatprep.subr.bf16.mxu0 0
    %3991 = vmatpush2.bf16.msra.mxu0 0
    %3992 = vmatprep.subr.bf16.mxu0 0
    %3993 = vmatpush2.bf16.msra.mxu0 0
    %3994 = vmatprep.subr.bf16.mxu0 0
    %3995 = vmatpush2.bf16.msra.mxu0 0
    %3996 = vmatprep.subr.bf16.mxu0 0
    %3997 = vmatpush2.bf16.msra.mxu0 0
    %3998 = vmatprep.subr.bf16.mxu0 0
    %3999 = vmatpush2.bf16.msra.mxu0 0
    %4000 = vmatprep.mubr.bf16.mxu0 0
    %4001 = vmatmul.mubr.bf16.gmra.mxu0 %v3966
    %v4002 = vpop.f32.mrf.mxu0
    %v4003 = vadd.f32 0.0, %v4002
    %v4004 = vpop.f32.mrf.mxu0
    %v4005 = vpop.f32.mrf.mxu0
    %v4006 = vpop.f32.mrf.mxu0
    %4007 = vdwg.mxu0
    %v4008 = vpack.c.bf16 %v4003, %v4003
    %s4009 = scalar_lea.vmem %s14, 36
    %v4010 = vld [vmem:[%s4009] sm:$0xf]
    %v4011 = vld [vmem:[%s4009 + $0x4] sm:$0xf]
    %v4012 = vld [vmem:[%s4009 + $0x8] sm:$0xf]
    %v4013 = vld [vmem:[%s4009 + $0xc] sm:$0xf]
    %v4014 = vld [vmem:[%s4009 + $0x10] sm:$0xf]
    %v4015 = vld [vmem:[%s4009 + $0x14] sm:$0xf]
    %v4016 = vld [vmem:[%s4009 + $0x18] sm:$0xf]
    %v4017 = vld [vmem:[%s4009 + $0x1c] sm:$0xf]
    %v4018 = vld [vmem:[%s4009 + $0x20] sm:$0xf]
    %v4028 = vunpack.c.l.b16 %v4010
    %v4029 = vunpack.c.l.b16 %v4011
    %v4030 = vunpack.c.l.b16 %v4012
    %v4031 = vunpack.c.l.b16 %v4013
    %v4032 = vunpack.c.l.b16 %v4014
    %v4033 = vunpack.c.l.b16 %v4015
    %v4034 = vunpack.c.l.b16 %v4016
    %v4035 = vunpack.c.l.b16 %v4017
    %v4036 = vunpack.c.l.b16 %v4018
    %v4037 = vpack.c.b16 %v4029, %v4028
    %v4038 = vpack.c.b16 %v4031, %v4030
    %v4039 = vpack.c.b16 %v4033, %v4032
    %v4040 = vpack.c.b16 %v4035, %v4034
    %v4041 = vpack.c.b16 %v4036, %v4036
    %vm4046 = vcmask 588800
    %v4048 = vsel %vm4046, %v4008, 0
    %v4051 = vsel %vm3909, %v4041, 0
    %4053 = vmatprep.subr.bf16.mxu0 0
    %4054 = vmatpush1.bf16.msra.mxu0 0
    %4055 = vmatprep.subr.bf16.mxu0 0
    %4056 = vmatpush1.bf16.msra.mxu0 0
    %4057 = vmatprep.subr.bf16.mxu0 0
    %4058 = vmatpush1.bf16.msra.mxu0 0
    %4059 = vmatprep.subr.bf16.mxu0 0
    %4060 = vmatpush1.bf16.msra.mxu0 %v4051
    %4061 = vmatprep.subr.bf16.mxu0 0
    %4062 = vmatpush1.bf16.msra.mxu0 %v4040
    %4063 = vmatprep.subr.bf16.mxu0 0
    %4064 = vmatpush1.bf16.msra.mxu0 %v4039
    %4065 = vmatprep.subr.bf16.mxu0 0
    %4066 = vmatpush1.bf16.msra.mxu0 %v4038
    %4067 = vmatprep.subr.bf16.mxu0 0
    %4068 = vmatpush1.bf16.msra.mxu0 %v4037
    %4069 = vmatprep.subr.bf16.mxu0 0
    %4070 = vmatpush2.bf16.msra.mxu0 0
    %4071 = vmatprep.subr.bf16.mxu0 0
    %4072 = vmatpush2.bf16.msra.mxu0 0
    %4073 = vmatprep.subr.bf16.mxu0 0
    %4074 = vmatpush2.bf16.msra.mxu0 0
    %4075 = vmatprep.subr.bf16.mxu0 0
    %4076 = vmatpush2.bf16.msra.mxu0 0
    %4077 = vmatprep.subr.bf16.mxu0 0
    %4078 = vmatpush2.bf16.msra.mxu0 0
    %4079 = vmatprep.subr.bf16.mxu0 0
    %4080 = vmatpush2.bf16.msra.mxu0 0
    %4081 = vmatprep.subr.bf16.mxu0 0
    %4082 = vmatpush2.bf16.msra.mxu0 0
    %4083 = vmatprep.subr.bf16.mxu0 0
    %4084 = vmatpush2.bf16.msra.mxu0 0
    %4085 = vmatprep.mubr.bf16.mxu0 0
    %4086 = vmatmul.mubr.bf16.gmra.mxu0 %v4048
    %v4087 = vpop.f32.mrf.mxu0
    %v4088 = vadd.f32 0.0, %v4087
    %v4089 = vpop.f32.mrf.mxu0
    %v4090 = vpop.f32.mrf.mxu0
    %v4091 = vpop.f32.mrf.mxu0
    %4092 = vdwg.mxu0
    %v4102 = vunpack.c.l.b16 %v3954
    %v4103 = vunpack.c.l.b16 %v3955
    %v4104 = vunpack.c.l.b16 %v3956
    %v4105 = vunpack.c.l.b16 %v3957
    %v4106 = vunpack.c.l.b16 %v3958
    %v4107 = vunpack.c.l.b16 %v3959
    %v4108 = vunpack.c.l.b16 %v3960
    %v4109 = vunpack.c.l.b16 %v3961
    %v4110 = vunpack.c.l.b16 %v3962
    %v4111 = vpack.c.b16 %v4103, %v4102
    %v4112 = vpack.c.b16 %v4105, %v4104
    %v4113 = vpack.c.b16 %v4107, %v4106
    %v4114 = vpack.c.b16 %v4109, %v4108
    %v4115 = vpack.c.b16 %v4110, %v4110
    %v4121 = vsel %vm4046, %v3953, 0
    %v4124 = vsel %vm3909, %v4115, 0
    %4126 = vmatprep.subr.bf16.mxu0 0
    %4127 = vmatpush1.bf16.msra.mxu0 0
    %4128 = vmatprep.subr.bf16.mxu0 0
    %4129 = vmatpush1.bf16.msra.mxu0 0
    %4130 = vmatprep.subr.bf16.mxu0 0
    %4131 = vmatpush1.bf16.msra.mxu0 0
    %4132 = vmatprep.subr.bf16.mxu0 0
    %4133 = vmatpush1.bf16.msra.mxu0 %v4124
    %4134 = vmatprep.subr.bf16.mxu0 0
    %4135 = vmatpush1.bf16.msra.mxu0 %v4114
    %4136 = vmatprep.subr.bf16.mxu0 0
    %4137 = vmatpush1.bf16.msra.mxu0 %v4113
    %4138 = vmatprep.subr.bf16.mxu0 0
    %4139 = vmatpush1.bf16.msra.mxu0 %v4112
    %4140 = vmatprep.subr.bf16.mxu0 0
    %4141 = vmatpush1.bf16.msra.mxu0 %v4111
    %4142 = vmatprep.subr.bf16.mxu0 0
    %4143 = vmatpush2.bf16.msra.mxu0 0
    %4144 = vmatprep.subr.bf16.mxu0 0
    %4145 = vmatpush2.bf16.msra.mxu0 0
    %4146 = vmatprep.subr.bf16.mxu0 0
    %4147 = vmatpush2.bf16.msra.mxu0 0
    %4148 = vmatprep.subr.bf16.mxu0 0
    %4149 = vmatpush2.bf16.msra.mxu0 0
    %4150 = vmatprep.subr.bf16.mxu0 0
    %4151 = vmatpush2.bf16.msra.mxu0 0
    %4152 = vmatprep.subr.bf16.mxu0 0
    %4153 = vmatpush2.bf16.msra.mxu0 0
    %4154 = vmatprep.subr.bf16.mxu0 0
    %4155 = vmatpush2.bf16.msra.mxu0 0
    %4156 = vmatprep.subr.bf16.mxu0 0
    %4157 = vmatpush2.bf16.msra.mxu0 0
    %4158 = vmatprep.mubr.bf16.mxu0 0
    %4159 = vmatmul.mubr.bf16.gmra.mxu0 %v4121
    %v4160 = vpop.f32.mrf.mxu0
    %v4161 = vadd.f32 %v4088, %v4160
    %v4162 = vpop.f32.mrf.mxu0
    %v4163 = vpop.f32.mrf.mxu0
    %v4164 = vpop.f32.mrf.mxu0
    %4165 = vdwg.mxu0
    %s4166 = scalar_lea.vmem %s13, 4
    %v4167 = vld [vmem:[%s4166] sm:$0x3]
    %v4169 = vsel %vm3905, %v4167, 0
    %4171 = vmatprep.subr.bf16.mxu0 0
    %4172 = vmatpush1.bf16.msra.mxu0 0
    %4173 = vmatprep.subr.bf16.mxu0 0
    %4174 = vmatpush1.bf16.msra.mxu0 0
    %4175 = vmatprep.subr.bf16.mxu0 0
    %4176 = vmatpush1.bf16.msra.mxu0 0
    %4177 = vmatprep.subr.bf16.mxu0 0
    %4178 = vmatpush1.bf16.msra.mxu0 0
    %4179 = vmatprep.subr.bf16.mxu0 0
    %4180 = vmatpush1.bf16.msra.mxu0 0
    %4181 = vmatprep.subr.bf16.mxu0 0
    %4182 = vmatpush1.bf16.msra.mxu0 0
    %4183 = vmatprep.subr.bf16.mxu0 0
    %4184 = vmatpush1.bf16.msra.mxu0 0
    %4185 = vmatprep.subr.bf16.mxu0 0
    %4186 = vmatpush1.bf16.msra.mxu0 %v3911
    %4187 = vmatprep.subr.bf16.mxu0 0
    %4188 = vmatpush2.bf16.msra.mxu0 0
    %4189 = vmatprep.subr.bf16.mxu0 0
    %4190 = vmatpush2.bf16.msra.mxu0 0
    %4191 = vmatprep.subr.bf16.mxu0 0
    %4192 = vmatpush2.bf16.msra.mxu0 0
    %4193 = vmatprep.subr.bf16.mxu0 0
    %4194 = vmatpush2.bf16.msra.mxu0 0
    %4195 = vmatprep.subr.bf16.mxu0 0
    %4196 = vmatpush2.bf16.msra.mxu0 0
    %4197 = vmatprep.subr.bf16.mxu0 0
    %4198 = vmatpush2.bf16.msra.mxu0 0
    %4199 = vmatprep.subr.bf16.mxu0 0
    %4200 = vmatpush2.bf16.msra.mxu0 0
    %4201 = vmatprep.subr.bf16.mxu0 0
    %4202 = vmatpush2.bf16.msra.mxu0 0
    %4203 = vmatprep.mubr.bf16.mxu0 0
    %4204 = vmatmul.mubr.bf16.gmra.mxu0 %v4169
    %v4205 = vpop.f32.mrf.mxu0
    %v4206 = vadd.f32 0.0, %v4205
    %v4207 = vpop.f32.mrf.mxu0
    %v4208 = vpop.f32.mrf.mxu0
    %v4209 = vpop.f32.mrf.mxu0
    %4210 = vdwg.mxu0
    %v4211 = vpack.c.bf16 %v4206, %v4206
    %s4212 = scalar_lea.vmem %s14, 72
    %v4213 = vld [vmem:[%s4212] sm:$0xf]
    %v4214 = vld [vmem:[%s4212 + $0x4] sm:$0xf]
    %v4215 = vld [vmem:[%s4212 + $0x8] sm:$0xf]
    %v4216 = vld [vmem:[%s4212 + $0xc] sm:$0xf]
    %v4217 = vld [vmem:[%s4212 + $0x10] sm:$0xf]
    %v4218 = vld [vmem:[%s4212 + $0x14] sm:$0xf]
    %v4219 = vld [vmem:[%s4212 + $0x18] sm:$0xf]
    %v4220 = vld [vmem:[%s4212 + $0x1c] sm:$0xf]
    %v4221 = vld [vmem:[%s4212 + $0x20] sm:$0xf]
    %v4231 = vunpack.c.l.b16 %v4213
    %v4232 = vunpack.c.l.b16 %v4214
    %v4233 = vunpack.c.l.b16 %v4215
    %v4234 = vunpack.c.l.b16 %v4216
    %v4235 = vunpack.c.l.b16 %v4217
    %v4236 = vunpack.c.l.b16 %v4218
    %v4237 = vunpack.c.l.b16 %v4219
    %v4238 = vunpack.c.l.b16 %v4220
    %v4239 = vunpack.c.l.b16 %v4221
    %v4240 = vpack.c.b16 %v4232, %v4231
    %v4241 = vpack.c.b16 %v4234, %v4233
    %v4242 = vpack.c.b16 %v4236, %v4235
    %v4243 = vpack.c.b16 %v4238, %v4237
    %v4244 = vpack.c.b16 %v4239, %v4239
    %v4250 = vsel %vm4046, %v4211, 0
    %v4253 = vsel %vm3909, %v4244, 0
    %4255 = vmatprep.subr.bf16.mxu0 0
    %4256 = vmatpush1.bf16.msra.mxu0 0
    %4257 = vmatprep.subr.bf16.mxu0 0
    %4258 = vmatpush1.bf16.msra.mxu0 0
    %4259 = vmatprep.subr.bf16.mxu0 0
    %4260 = vmatpush1.bf16.msra.mxu0 0
    %4261 = vmatprep.subr.bf16.mxu0 0
    %4262 = vmatpush1.bf16.msra.mxu0 %v4253
    %4263 = vmatprep.subr.bf16.mxu0 0
    %4264 = vmatpush1.bf16.msra.mxu0 %v4243
    %4265 = vmatprep.subr.bf16.mxu0 0
    %4266 = vmatpush1.bf16.msra.mxu0 %v4242
    %4267 = vmatprep.subr.bf16.mxu0 0
    %4268 = vmatpush1.bf16.msra.mxu0 %v4241
    %4269 = vmatprep.subr.bf16.mxu0 0
    %4270 = vmatpush1.bf16.msra.mxu0 %v4240
    %4271 = vmatprep.subr.bf16.mxu0 0
    %4272 = vmatpush2.bf16.msra.mxu0 0
    %4273 = vmatprep.subr.bf16.mxu0 0
    %4274 = vmatpush2.bf16.msra.mxu0 0
    %4275 = vmatprep.subr.bf16.mxu0 0
    %4276 = vmatpush2.bf16.msra.mxu0 0
    %4277 = vmatprep.subr.bf16.mxu0 0
    %4278 = vmatpush2.bf16.msra.mxu0 0
    %4279 = vmatprep.subr.bf16.mxu0 0
    %4280 = vmatpush2.bf16.msra.mxu0 0
    %4281 = vmatprep.subr.bf16.mxu0 0
    %4282 = vmatpush2.bf16.msra.mxu0 0
    %4283 = vmatprep.subr.bf16.mxu0 0
    %4284 = vmatpush2.bf16.msra.mxu0 0
    %4285 = vmatprep.subr.bf16.mxu0 0
    %4286 = vmatpush2.bf16.msra.mxu0 0
    %4287 = vmatprep.mubr.bf16.mxu0 0
    %4288 = vmatmul.mubr.bf16.gmra.mxu0 %v4250
    %v4289 = vpop.f32.mrf.mxu0
    %v4290 = vadd.f32 0.0, %v4289
    %v4291 = vpop.f32.mrf.mxu0
    %v4292 = vpop.f32.mrf.mxu0
    %v4293 = vpop.f32.mrf.mxu0
    %4294 = vdwg.mxu0
    %v4295 = vadd.f32 %v4161, %v4290
    %v4296 = vld [vmem:[%s15] sm:$0x1]
    %v4298 = vlaneseq
    %v4299 = vshrl.u32 %v4298, 7
    %v4300 = vsub.s32 0, %v4299
    %v4301 = vrot.slane %v4296, %v4300
    %v4303 = vadd.f32 %v4295, %v4301
    %v4304 = vmax.f32 %v4303, 0.0
    %v4305 = vpack.c.bf16 %v4304, %v4304
    %v4306 = vld [vmem:[%s16] sm:$0x1]
    %vm4307 = vcmask 31744
    %v4309 = vsel %vm4307, %v4306, 0
    %vm4311 = vcmask 1041408
    %v4313 = vsel %vm4311, %v4305, 0
    %4315 = vmatprep.subr.bf16.mxu0 0
    %4316 = vmatpush1.bf16.msra.mxu0 0
    %4317 = vmatprep.subr.bf16.mxu0 0
    %4318 = vmatpush1.bf16.msra.mxu0 0
    %4319 = vmatprep.subr.bf16.mxu0 0
    %4320 = vmatpush1.bf16.msra.mxu0 0
    %4321 = vmatprep.subr.bf16.mxu0 0
    %4322 = vmatpush1.bf16.msra.mxu0 0
    %4323 = vmatprep.subr.bf16.mxu0 0
    %4324 = vmatpush1.bf16.msra.mxu0 0
    %4325 = vmatprep.subr.bf16.mxu0 0
    %4326 = vmatpush1.bf16.msra.mxu0 0
    %4327 = vmatprep.subr.bf16.mxu0 0
    %4328 = vmatpush1.bf16.msra.mxu0 0
    %4329 = vmatprep.subr.bf16.mxu0 0
    %4330 = vmatpush1.bf16.msra.mxu0 %v4313
    %4331 = vmatprep.subr.bf16.mxu0 0
    %4332 = vmatpush2.bf16.msra.mxu0 0
    %4333 = vmatprep.subr.bf16.mxu0 0
    %4334 = vmatpush2.bf16.msra.mxu0 0
    %4335 = vmatprep.subr.bf16.mxu0 0
    %4336 = vmatpush2.bf16.msra.mxu0 0
    %4337 = vmatprep.subr.bf16.mxu0 0
    %4338 = vmatpush2.bf16.msra.mxu0 0
    %4339 = vmatprep.subr.bf16.mxu0 0
    %4340 = vmatpush2.bf16.msra.mxu0 0
    %4341 = vmatprep.subr.bf16.mxu0 0
    %4342 = vmatpush2.bf16.msra.mxu0 0
    %4343 = vmatprep.subr.bf16.mxu0 0
    %4344 = vmatpush2.bf16.msra.mxu0 0
    %4345 = vmatprep.subr.bf16.mxu0 0
    %4346 = vmatpush2.bf16.msra.mxu0 0
    %4347 = vmatprep.mubr.bf16.mxu0 0
    %4348 = vmatmul.mubr.bf16.gmra.mxu0 %v4309
    %v4349 = vpop.f32.mrf.mxu0
    %v4350 = vadd.f32 0.0, %v4349
    %v4351 = vpop.f32.mrf.mxu0
    %v4352 = vpop.f32.mrf.mxu0
    %v4353 = vpop.f32.mrf.mxu0
    %4354 = vdwg.mxu0
    %v4355 = vpack.c.bf16 %v4350, %v4350
    %v4356 = vld [vmem:[%s17] sm:$0xf]
    %v4357 = vld [vmem:[%s17 + $0x4] sm:$0xf]
    %v4358 = vld [vmem:[%s17 + $0x8] sm:$0xf]
    %v4359 = vld [vmem:[%s17 + $0xc] sm:$0xf]
    %v4360 = vld [vmem:[%s17 + $0x10] sm:$0xf]
    %v4361 = vld [vmem:[%s17 + $0x14] sm:$0xf]
    %s4362 = scalar_lea.vmem %s16, 1
    %v4363 = vld [vmem:[%s4362] sm:$0x1]
    %v4365 = vsel %vm4307, %v4363, 0
    %4367 = vmatprep.subr.bf16.mxu0 0
    %4368 = vmatpush1.bf16.msra.mxu0 0
    %4369 = vmatprep.subr.bf16.mxu0 0
    %4370 = vmatpush1.bf16.msra.mxu0 0
    %4371 = vmatprep.subr.bf16.mxu0 0
    %4372 = vmatpush1.bf16.msra.mxu0 0
    %4373 = vmatprep.subr.bf16.mxu0 0
    %4374 = vmatpush1.bf16.msra.mxu0 0
    %4375 = vmatprep.subr.bf16.mxu0 0
    %4376 = vmatpush1.bf16.msra.mxu0 0
    %4377 = vmatprep.subr.bf16.mxu0 0
    %4378 = vmatpush1.bf16.msra.mxu0 0
    %4379 = vmatprep.subr.bf16.mxu0 0
    %4380 = vmatpush1.bf16.msra.mxu0 0
    %4381 = vmatprep.subr.bf16.mxu0 0
    %4382 = vmatpush1.bf16.msra.mxu0 %v4313
    %4383 = vmatprep.subr.bf16.mxu0 0
    %4384 = vmatpush2.bf16.msra.mxu0 0
    %4385 = vmatprep.subr.bf16.mxu0 0
    %4386 = vmatpush2.bf16.msra.mxu0 0
    %4387 = vmatprep.subr.bf16.mxu0 0
    %4388 = vmatpush2.bf16.msra.mxu0 0
    %4389 = vmatprep.subr.bf16.mxu0 0
    %4390 = vmatpush2.bf16.msra.mxu0 0
    %4391 = vmatprep.subr.bf16.mxu0 0
    %4392 = vmatpush2.bf16.msra.mxu0 0
    %4393 = vmatprep.subr.bf16.mxu0 0
    %4394 = vmatpush2.bf16.msra.mxu0 0
    %4395 = vmatprep.subr.bf16.mxu0 0
    %4396 = vmatpush2.bf16.msra.mxu0 0
    %4397 = vmatprep.subr.bf16.mxu0 0
    %4398 = vmatpush2.bf16.msra.mxu0 0
    %4399 = vmatprep.mubr.bf16.mxu0 0
    %4400 = vmatmul.mubr.bf16.gmra.mxu0 %v4365
    %v4401 = vpop.f32.mrf.mxu0
    %v4402 = vadd.f32 0.0, %v4401
    %v4403 = vpop.f32.mrf.mxu0
    %v4404 = vpop.f32.mrf.mxu0
    %v4405 = vpop.f32.mrf.mxu0
    %4406 = vdwg.mxu0
    %v4407 = vpack.c.bf16 %v4402, %v4402
    %s4408 = scalar_lea.vmem %s17, 24
    %v4409 = vld [vmem:[%s4408] sm:$0xf]
    %v4410 = vld [vmem:[%s4408 + $0x4] sm:$0xf]
    %v4411 = vld [vmem:[%s4408 + $0x8] sm:$0xf]
    %v4412 = vld [vmem:[%s4408 + $0xc] sm:$0xf]
    %v4413 = vld [vmem:[%s4408 + $0x10] sm:$0xf]
    %v4414 = vld [vmem:[%s4408 + $0x14] sm:$0xf]
    %v4421 = vunpack.c.l.b16 %v4409
    %v4422 = vunpack.c.l.b16 %v4410
    %v4423 = vunpack.c.l.b16 %v4411
    %v4424 = vunpack.c.l.b16 %v4412
    %v4425 = vunpack.c.l.b16 %v4413
    %v4426 = vunpack.c.l.b16 %v4414
    %v4427 = vpack.c.b16 %v4422, %v4421
    %v4428 = vpack.c.b16 %v4424, %v4423
    %v4429 = vpack.c.b16 %v4426, %v4425
    %vm4433 = vcmask 392192
    %v4435 = vsel %vm4433, %v4407, 0
    %4437 = vmatprep.subr.bf16.mxu0 0
    %4438 = vmatpush1.bf16.msra.mxu0 0
    %4439 = vmatprep.subr.bf16.mxu0 0
    %4440 = vmatpush1.bf16.msra.mxu0 0
    %4441 = vmatprep.subr.bf16.mxu0 0
    %4442 = vmatpush1.bf16.msra.mxu0 0
    %4443 = vmatprep.subr.bf16.mxu0 0
    %4444 = vmatpush1.bf16.msra.mxu0 0
    %4445 = vmatprep.subr.bf16.mxu0 0
    %4446 = vmatpush1.bf16.msra.mxu0 0
    %4447 = vmatprep.subr.bf16.mxu0 0
    %4448 = vmatpush1.bf16.msra.mxu0 %v4429
    %4449 = vmatprep.subr.bf16.mxu0 0
    %4450 = vmatpush1.bf16.msra.mxu0 %v4428
    %4451 = vmatprep.subr.bf16.mxu0 0
    %4452 = vmatpush1.bf16.msra.mxu0 %v4427
    %4453 = vmatprep.subr.bf16.mxu0 0
    %4454 = vmatpush2.bf16.msra.mxu0 0
    %4455 = vmatprep.subr.bf16.mxu0 0
    %4456 = vmatpush2.bf16.msra.mxu0 0
    %4457 = vmatprep.subr.bf16.mxu0 0
    %4458 = vmatpush2.bf16.msra.mxu0 0
    %4459 = vmatprep.subr.bf16.mxu0 0
    %4460 = vmatpush2.bf16.msra.mxu0 0
    %4461 = vmatprep.subr.bf16.mxu0 0
    %4462 = vmatpush2.bf16.msra.mxu0 0
    %4463 = vmatprep.subr.bf16.mxu0 0
    %4464 = vmatpush2.bf16.msra.mxu0 0
    %4465 = vmatprep.subr.bf16.mxu0 0
    %4466 = vmatpush2.bf16.msra.mxu0 0
    %4467 = vmatprep.subr.bf16.mxu0 0
    %4468 = vmatpush2.bf16.msra.mxu0 0
    %4469 = vmatprep.mubr.bf16.mxu0 0
    %4470 = vmatmul.mubr.bf16.gmra.mxu0 %v4435
    %v4471 = vpop.f32.mrf.mxu0
    %v4472 = vadd.f32 0.0, %v4471
    %v4473 = vpop.f32.mrf.mxu0
    %v4474 = vpop.f32.mrf.mxu0
    %v4475 = vpop.f32.mrf.mxu0
    %4476 = vdwg.mxu0
    %v4483 = vunpack.c.l.b16 %v4356
    %v4484 = vunpack.c.l.b16 %v4357
    %v4485 = vunpack.c.l.b16 %v4358
    %v4486 = vunpack.c.l.b16 %v4359
    %v4487 = vunpack.c.l.b16 %v4360
    %v4488 = vunpack.c.l.b16 %v4361
    %v4489 = vpack.c.b16 %v4484, %v4483
    %v4490 = vpack.c.b16 %v4486, %v4485
    %v4491 = vpack.c.b16 %v4488, %v4487
    %v4496 = vsel %vm4433, %v4355, 0
    %4498 = vmatprep.subr.bf16.mxu0 0
    %4499 = vmatpush1.bf16.msra.mxu0 0
    %4500 = vmatprep.subr.bf16.mxu0 0
    %4501 = vmatpush1.bf16.msra.mxu0 0
    %4502 = vmatprep.subr.bf16.mxu0 0
    %4503 = vmatpush1.bf16.msra.mxu0 0
    %4504 = vmatprep.subr.bf16.mxu0 0
    %4505 = vmatpush1.bf16.msra.mxu0 0
    %4506 = vmatprep.subr.bf16.mxu0 0
    %4507 = vmatpush1.bf16.msra.mxu0 0
    %4508 = vmatprep.subr.bf16.mxu0 0
    %4509 = vmatpush1.bf16.msra.mxu0 %v4491
    %4510 = vmatprep.subr.bf16.mxu0 0
    %4511 = vmatpush1.bf16.msra.mxu0 %v4490
    %4512 = vmatprep.subr.bf16.mxu0 0
    %4513 = vmatpush1.bf16.msra.mxu0 %v4489
    %4514 = vmatprep.subr.bf16.mxu0 0
    %4515 = vmatpush2.bf16.msra.mxu0 0
    %4516 = vmatprep.subr.bf16.mxu0 0
    %4517 = vmatpush2.bf16.msra.mxu0 0
    %4518 = vmatprep.subr.bf16.mxu0 0
    %4519 = vmatpush2.bf16.msra.mxu0 0
    %4520 = vmatprep.subr.bf16.mxu0 0
    %4521 = vmatpush2.bf16.msra.mxu0 0
    %4522 = vmatprep.subr.bf16.mxu0 0
    %4523 = vmatpush2.bf16.msra.mxu0 0
    %4524 = vmatprep.subr.bf16.mxu0 0
    %4525 = vmatpush2.bf16.msra.mxu0 0
    %4526 = vmatprep.subr.bf16.mxu0 0
    %4527 = vmatpush2.bf16.msra.mxu0 0
    %4528 = vmatprep.subr.bf16.mxu0 0
    %4529 = vmatpush2.bf16.msra.mxu0 0
    %4530 = vmatprep.mubr.bf16.mxu0 0
    %4531 = vmatmul.mubr.bf16.gmra.mxu0 %v4496
    %v4532 = vpop.f32.mrf.mxu0
    %v4533 = vadd.f32 %v4472, %v4532
    %v4534 = vpop.f32.mrf.mxu0
    %v4535 = vpop.f32.mrf.mxu0
    %v4536 = vpop.f32.mrf.mxu0
    %4537 = vdwg.mxu0
    %s4538 = scalar_lea.vmem %s16, 2
    %v4539 = vld [vmem:[%s4538] sm:$0x1]
    %v4541 = vsel %vm4307, %v4539, 0
    %4543 = vmatprep.subr.bf16.mxu0 0
    %4544 = vmatpush1.bf16.msra.mxu0 0
    %4545 = vmatprep.subr.bf16.mxu0 0
    %4546 = vmatpush1.bf16.msra.mxu0 0
    %4547 = vmatprep.subr.bf16.mxu0 0
    %4548 = vmatpush1.bf16.msra.mxu0 0
    %4549 = vmatprep.subr.bf16.mxu0 0
    %4550 = vmatpush1.bf16.msra.mxu0 0
    %4551 = vmatprep.subr.bf16.mxu0 0
    %4552 = vmatpush1.bf16.msra.mxu0 0
    %4553 = vmatprep.subr.bf16.mxu0 0
    %4554 = vmatpush1.bf16.msra.mxu0 0
    %4555 = vmatprep.subr.bf16.mxu0 0
    %4556 = vmatpush1.bf16.msra.mxu0 0
    %4557 = vmatprep.subr.bf16.mxu0 0
    %4558 = vmatpush1.bf16.msra.mxu0 %v4313
    %4559 = vmatprep.subr.bf16.mxu0 0
    %4560 = vmatpush2.bf16.msra.mxu0 0
    %4561 = vmatprep.subr.bf16.mxu0 0
    %4562 = vmatpush2.bf16.msra.mxu0 0
    %4563 = vmatprep.subr.bf16.mxu0 0
    %4564 = vmatpush2.bf16.msra.mxu0 0
    %4565 = vmatprep.subr.bf16.mxu0 0
    %4566 = vmatpush2.bf16.msra.mxu0 0
    %4567 = vmatprep.subr.bf16.mxu0 0
    %4568 = vmatpush2.bf16.msra.mxu0 0
    %4569 = vmatprep.subr.bf16.mxu0 0
    %4570 = vmatpush2.bf16.msra.mxu0 0
    %4571 = vmatprep.subr.bf16.mxu0 0
    %4572 = vmatpush2.bf16.msra.mxu0 0
    %4573 = vmatprep.subr.bf16.mxu0 0
    %4574 = vmatpush2.bf16.msra.mxu0 0
    %4575 = vmatprep.mubr.bf16.mxu0 0
    %4576 = vmatmul.mubr.bf16.gmra.mxu0 %v4541
    %v4577 = vpop.f32.mrf.mxu0
    %v4578 = vadd.f32 0.0, %v4577
    %v4579 = vpop.f32.mrf.mxu0
    %v4580 = vpop.f32.mrf.mxu0
    %v4581 = vpop.f32.mrf.mxu0
    %4582 = vdwg.mxu0
    %v4583 = vpack.c.bf16 %v4578, %v4578
    %s4584 = scalar_lea.vmem %s17, 48
    %v4585 = vld [vmem:[%s4584] sm:$0xf]
    %v4586 = vld [vmem:[%s4584 + $0x4] sm:$0xf]
    %v4587 = vld [vmem:[%s4584 + $0x8] sm:$0xf]
    %v4588 = vld [vmem:[%s4584 + $0xc] sm:$0xf]
    %v4589 = vld [vmem:[%s4584 + $0x10] sm:$0xf]
    %v4590 = vld [vmem:[%s4584 + $0x14] sm:$0xf]
    %v4597 = vunpack.c.l.b16 %v4585
    %v4598 = vunpack.c.l.b16 %v4586
    %v4599 = vunpack.c.l.b16 %v4587
    %v4600 = vunpack.c.l.b16 %v4588
    %v4601 = vunpack.c.l.b16 %v4589
    %v4602 = vunpack.c.l.b16 %v4590
    %v4603 = vpack.c.b16 %v4598, %v4597
    %v4604 = vpack.c.b16 %v4600, %v4599
    %v4605 = vpack.c.b16 %v4602, %v4601
    %v4610 = vsel %vm4433, %v4583, 0
    %4612 = vmatprep.subr.bf16.mxu0 0
    %4613 = vmatpush1.bf16.msra.mxu0 0
    %4614 = vmatprep.subr.bf16.mxu0 0
    %4615 = vmatpush1.bf16.msra.mxu0 0
    %4616 = vmatprep.subr.bf16.mxu0 0
    %4617 = vmatpush1.bf16.msra.mxu0 0
    %4618 = vmatprep.subr.bf16.mxu0 0
    %4619 = vmatpush1.bf16.msra.mxu0 0
    %4620 = vmatprep.subr.bf16.mxu0 0
    %4621 = vmatpush1.bf16.msra.mxu0 0
    %4622 = vmatprep.subr.bf16.mxu0 0
    %4623 = vmatpush1.bf16.msra.mxu0 %v4605
    %4624 = vmatprep.subr.bf16.mxu0 0
    %4625 = vmatpush1.bf16.msra.mxu0 %v4604
    %4626 = vmatprep.subr.bf16.mxu0 0
    %4627 = vmatpush1.bf16.msra.mxu0 %v4603
    %4628 = vmatprep.subr.bf16.mxu0 0
    %4629 = vmatpush2.bf16.msra.mxu0 0
    %4630 = vmatprep.subr.bf16.mxu0 0
    %4631 = vmatpush2.bf16.msra.mxu0 0
    %4632 = vmatprep.subr.bf16.mxu0 0
    %4633 = vmatpush2.bf16.msra.mxu0 0
    %4634 = vmatprep.subr.bf16.mxu0 0
    %4635 = vmatpush2.bf16.msra.mxu0 0
    %4636 = vmatprep.subr.bf16.mxu0 0
    %4637 = vmatpush2.bf16.msra.mxu0 0
    %4638 = vmatprep.subr.bf16.mxu0 0
    %4639 = vmatpush2.bf16.msra.mxu0 0
    %4640 = vmatprep.subr.bf16.mxu0 0
    %4641 = vmatpush2.bf16.msra.mxu0 0
    %4642 = vmatprep.subr.bf16.mxu0 0
    %4643 = vmatpush2.bf16.msra.mxu0 0
    %4644 = vmatprep.mubr.bf16.mxu0 0
    %4645 = vmatmul.mubr.bf16.gmra.mxu0 %v4610
    %v4646 = vpop.f32.mrf.mxu0
    %v4647 = vadd.f32 0.0, %v4646
    %v4648 = vpop.f32.mrf.mxu0
    %v4649 = vpop.f32.mrf.mxu0
    %v4650 = vpop.f32.mrf.mxu0
    %4651 = vdwg.mxu0
    %v4652 = vadd.f32 %v4533, %v4647
    %v4653 = vld [vmem:[%s18] sm:$0x1]
    %v4655 = vlaneseq
    %v4656 = vshrl.u32 %v4655, 7
    %v4657 = vsub.s32 0, %v4656
    %v4658 = vrot.slane %v4653, %v4657
    %v4660 = vadd.f32 %v4652, %v4658
    %v4661 = vmax.f32 %v4660, 0.0
    %vm4662 = vcmask 254976
    %4663 = vst.msk [vmem:[#allocation2] sm:$0x3] %vm4662, %v4661
    // Predicated region
    $region78: #{resnet_forward.1} parent=1 // pred_check
      _
    $region79: #{resnet_forward.1} parent=1 // pred_check_branch
      %4665 = sbr.rel (0) target = $region81
    $region80: #{resnet_forward.1} parent=1 // pred_region
      %s4667 = ssub.s32 32, 32
      %4668 = vsyncadd [#allocation3], %s4667
      %s4670 = sshll.u32 [#allocation2], 4
      %s4671 = int_to_ptr.vmem [resolvable:$true] %s4670
      %4673 = dma.vmem_to_hbm [thread:$0]  %s4671, 32, %s19, [#allocation3]
    $region81: #{resnet_forward.1} parent=1 // pred_fallthru
      _
    // Predicated region
    $region82: #{resnet_forward.1} parent=1 // pred_check
      _
    $region83: #{resnet_forward.1} parent=1 // pred_check_branch
      %4675 = sbr.rel (0) target = $region85
    $region84: #{resnet_forward.1} parent=1 // pred_region
      %4676 = dma.done [#allocation3], 32
    $region85: #{resnet_forward.1} parent=1 // pred_fallthru
      _
    %4677 = vsyncpa [#allocation3], 1

</llo_original>
